<compile_context>
chip_gen: v7x
topology: tpu7x:2x2x1
jax: 0.10.0
libtpu: 0.0.40
codegen_flags: <defaults>
</compile_context>

<pallas_src>
import functools
import math

import jax
import jax.numpy as jnp
from jax import lax
from jax.experimental import pallas as pl
from jax.experimental.pallas import tpu as pltpu

BN_EPS = 1e-5
PROTO_EPS = 1e-4          # self.epsilon in the PyTorch module
LANE = 128                # lane padding for prototype / class axes


# ---------------------------------------------------------------------------
# Fused kernel: 2 x GINConv(+BN folded, ReLU, L2-norm, ReLU)  ->  mean pool
#               -> prototype distances -> last layer -> softmax.
# ---------------------------------------------------------------------------
def ginnet_fused_kernel(
        x_ref, a1_ref, a2_ref,                      # node feats f32 / folded adj bf16
        w1a_ref, b1a_ref, w2a_ref, b2a_ref,         # layer 0 (BN folded into W)
        w1b_ref, b1b_ref, w2b_ref, b2b_ref,         # layer 1 (BN folded into W)
        pool_ref, invc_ref,                         # bf16 one-hot pool, f32 1/count
        protos_t_ref, p2_ref, lastw_ref, mask_ref,  # lane-padded prototype head
        node_emb_ref, gemb_ref, head_ref,
        *, emb_normalize):
    x_bf = x_ref[...].astype(jnp.bfloat16)                       # (N, Din) bf16
    x_f32 = x_ref[...]
    layers = ((a1_ref, w1a_ref, b1a_ref, w2a_ref, b2a_ref),
              (a2_ref, w1b_ref, b1b_ref, w2b_ref, b2b_ref))
    for a_ref, w1, b1, w2, b2 in layers:
        # GIN aggregation with (1+eps)I folded into A' -> one bf16 MXU dot.
        agg = jnp.dot(a_ref[...], x_bf, preferred_element_type=jnp.float32)
        # Linear(bias=False) -> BatchNorm (eval; scale folded into W) -> ReLU
        h = jnp.dot(agg.astype(jnp.bfloat16), w1[...],
                    preferred_element_type=jnp.float32) + b1[...]
        h_bf = jnp.maximum(h, 0.0).astype(jnp.bfloat16)
        # Linear(bias=False) -> BatchNorm (eval; scale folded into W)
        h = jnp.dot(h_bf, w2[...],
                    preferred_element_type=jnp.float32) + b2[...]
        if emb_normalize:   # F.normalize(p=2, dim=-1) via EUP rsqrt
            sumsq = jnp.sum(h * h, axis=-1, keepdims=True)
            h = h * lax.rsqrt(jnp.maximum(sumsq, 1e-24))
        x_f32 = jnp.maximum(h, 0.0)                  # gnn_non_linear = ReLU
        x_bf = x_f32.astype(jnp.bfloat16)            # single cast, reused next
    node_emb_ref[...] = x_f32

    # Readout: global mean pool. bf16 0/1 one-hot (exact) x bf16 embeddings,
    # f32 accumulate, then 1/count row scaling on the VPU.
    pooled = jnp.dot(pool_ref[...], x_bf, preferred_element_type=jnp.float32)
    pooled = pooled * invc_ref[...]                               # (Gp, D)
    gemb_ref[...] = pooled

    # Prototype distances; prototype axis lane-padded to 128 columns.
    xp = jnp.dot(pooled.astype(jnp.bfloat16), protos_t_ref[...],
                 preferred_element_type=jnp.float32)              # (Gp, 128)
    x2 = jnp.sum(pooled * pooled, axis=-1, keepdims=True)         # (Gp, 1)
    dist = jnp.maximum(-2.0 * xp + x2 + p2_ref[...], 0.0)         # clamp >= 0
    sim = jnp.log((dist + 1.0) / (dist + PROTO_EPS))

    # Last layer (bias=False, weights in {1,-0.5,0} -> bf16-exact); outputs
    # lane-padded, real logits live in [:num_classes].
    logits = jnp.dot(sim.astype(jnp.bfloat16), lastw_ref[...],
                     preferred_element_type=jnp.float32)          # (Gp, 128)

    # Softmax over real classes only via precomputed additive mask (0 / -1e30).
    masked = logits + mask_ref[...]
    m = jnp.max(masked, axis=-1, keepdims=True)
    e = jnp.exp(masked - m)                 # padded lanes underflow to 0
    probs = e / jnp.sum(e, axis=-1, keepdims=True)

    # Packed head output slab: [0]=logits, [1]=probs, [2]=min_distances.
    head_ref[0] = logits
    head_ref[1] = probs
    head_ref[2] = dist


# ---------------------------------------------------------------------------
# Host-side preprocessing (done once, outside jit).
# ---------------------------------------------------------------------------
def build_pool(batch, num_graphs):
    """bf16 0/1 one-hot pool matrix + f32 1/count column (ghost rows -> 0)."""
    g_pad = 8 * max(1, -(-num_graphs // 8))     # sublane-aligned graph count
    onehot = (batch[None, :] ==
              jnp.arange(g_pad, dtype=batch.dtype)[:, None])
    counts = jnp.sum(onehot.astype(jnp.float32), axis=1, keepdims=True)
    pool = onehot.astype(jnp.bfloat16)                         # exact 0/1
    inv_counts = 1.0 / jnp.maximum(counts, 1.0)                # (g_pad, 1) f32
    return pool, inv_counts


def fold_adjacency(adj, eps):
    """A'_l = A + (1+eps_l) * I, stored bf16 (0/1/(1+eps) values)."""
    n = adj.shape[0]
    return (adj.astype(jnp.float32)
            + (1.0 + float(eps)) * jnp.eye(n, dtype=jnp.float32)
            ).astype(jnp.bfloat16)


# ---------------------------------------------------------------------------
# Wrapper: one fused pallas_call; slices lane-padded head outputs.
# ---------------------------------------------------------------------------
def ginnet_forward(x, adj1, adj2, pool, inv_counts, params, *, num_graphs,
                   num_classes, num_prototypes, emb_normalize):
    assert len(params["layers"]) == 2, "kernel is specialized to 2 GIN layers"
    n, d_in = x.shape
    d = params["layers"][-1]["w2"].shape[1]
    g_pad = pool.shape[0]

    L0, L1 = params["layers"]
    args = (x, adj1, adj2,
            L0["w1"], L0["b1"], L0["w2"], L0["b2"],
            L1["w1"], L1["b1"], L1["w2"], L1["b2"],
            pool, inv_counts,
            params["protos_t_pad"], params["p2_pad"],
            params["lastw_pad"], params["cls_mask"])

    out_shape = (
        jax.ShapeDtypeStruct((n, d), jnp.float32),            # node_emb
        jax.ShapeDtypeStruct((g_pad, d), jnp.float32),         # graph_emb
        jax.ShapeDtypeStruct((3, g_pad, LANE), jnp.float32),   # logits/probs/dist
    )

    # Advisory cost estimate for the XLA scheduler.
    flops = 0
    d_prev = d_in
    for layer in params["layers"]:
        d_out = layer["w1"].shape[1]
        flops += 2 * n * n * d_prev + 2 * n * d_prev * d_out + 2 * n * d_out * d_out
        d_prev = d_out
    flops += 2 * g_pad * n * d + 2 * g_pad * d * LANE + 2 * g_pad * LANE * LANE
    transcendentals = len(params["layers"]) * n + 3 * g_pad * LANE
    bytes_accessed = sum(int(math.prod(a.shape)) * a.dtype.itemsize for a in args)
    bytes_accessed += sum(int(math.prod(s.shape)) * s.dtype.itemsize
                          for s in out_shape)

    kern = functools.partial(ginnet_fused_kernel, emb_normalize=emb_normalize)
    # TODO(synk): for large N add a node-row BlockSpec grid with a leading
    #   "parallel" axis (v7x 2-TC sharding) instead of this single-block call.
    node_emb, graph_emb, head = pl.pallas_call(
        kern,
        out_shape=out_shape,
        in_specs=[pl.BlockSpec(memory_space=pltpu.MemorySpace.VMEM)] * len(args),
        out_specs=tuple(pl.BlockSpec(memory_space=pltpu.MemorySpace.VMEM)
                        for _ in out_shape),
        compiler_params=pltpu.CompilerParams(
            vmem_limit_bytes=32 * 1024 * 1024),
        cost_estimate=pl.CostEstimate(flops=int(flops),
                                      transcendentals=int(transcendentals),
                                      bytes_accessed=int(bytes_accessed)),
    )(*args)

    return (head[0, :num_graphs, :num_classes],      # logits
            head[1, :num_graphs, :num_classes],      # probs
            node_emb,                                 # (N, D)
            graph_emb[:num_graphs],                   # (G, D)
            head[2, :num_graphs, :num_prototypes])    # min_distances


# ---------------------------------------------------------------------------
# Parameter construction (deterministic). BN scales folded into the bias-free
# linear weights; prototype head stored lane-padded / pre-transposed in bf16.
# ---------------------------------------------------------------------------
def make_bn_affine(key, dim):
    kg, kb, km, kv = jax.random.split(key, 4)
    gamma = 1.0 + 0.1 * jax.random.normal(kg, (1, dim), jnp.float32)
    beta = 0.1 * jax.random.normal(kb, (1, dim), jnp.float32)
    mean = 0.1 * jax.random.normal(km, (1, dim), jnp.float32)
    var = 1.0 + 0.1 * jnp.abs(jax.random.normal(kv, (1, dim), jnp.float32))
    scale = gamma / jnp.sqrt(var + BN_EPS)
    shift = beta - mean * scale
    return scale, shift


def build_params(key, input_dim, latent_dim, output_dim, num_protos_per_class):
    layers = []
    dims = [input_dim] + list(latent_dim)
    for i in range(len(latent_dim)):
        key, k1, k2, kb1, kb2 = jax.random.split(key, 5)
        d_in, d_out = dims[i], dims[i + 1]
        w1 = 0.1 * jax.random.normal(k1, (d_in, d_out), jnp.float32)   # W1^T
        w2 = 0.1 * jax.random.normal(k2, (d_out, d_out), jnp.float32)  # W2^T
        s1, b1 = make_bn_affine(kb1, d_out)
        s2, b2 = make_bn_affine(kb2, d_out)
        layers.append(dict(
            eps=0.0,                                   # GINConv train_eps init
            w1=(w1 * s1).astype(jnp.bfloat16), b1=b1,  # BN scale folded into W
            w2=(w2 * s2).astype(jnp.bfloat16), b2=b2))

    key, kp = jax.random.split(key)
    num_protos = output_dim * num_protos_per_class
    d_last = latent_dim[-1]
    protos = jax.random.uniform(kp, (num_protos, d_last), jnp.float32)  # torch.rand
    protos_bf = protos.astype(jnp.bfloat16)

    # Prototypes pre-transposed + lane-padded to 128 columns (zero prototypes);
    # p2 computed from the bf16-rounded prototypes for consistency with xp.
    protos_t_pad = jnp.zeros((d_last, LANE), jnp.bfloat16)
    protos_t_pad = protos_t_pad.at[:, :num_protos].set(protos_bf.T)
    p_f32 = protos_bf.astype(jnp.float32)
    p2_pad = jnp.zeros((1, LANE), jnp.float32)
    p2_pad = p2_pad.at[:, :num_protos].set(jnp.sum(p_f32 * p_f32, axis=-1))

    # last_layer weights via set_last_layer_incorrect_connection(-0.5),
    # stored as W^T, padded to (128, 128), bf16 (values {1,-0.5,0} are exact).
    proto_cls = jnp.arange(num_protos) // num_protos_per_class
    ident = (proto_cls[:, None] == jnp.arange(output_dim)[None, :])
    last_w_t = jnp.where(ident, 1.0, -0.5).astype(jnp.float32)          # (P, C)
    lastw_pad = jnp.zeros((LANE, LANE), jnp.float32)
    lastw_pad = lastw_pad.at[:num_protos, :output_dim].set(last_w_t)
    lastw_pad = lastw_pad.astype(jnp.bfloat16)

    # Additive softmax mask over the lane-padded class axis.
    cls_mask = jnp.where(jnp.arange(LANE)[None, :] < output_dim,
                         0.0, -1e30).astype(jnp.float32)                # (1,128)

    return dict(layers=layers, protos_t_pad=protos_t_pad, p2_pad=p2_pad,
                lastw_pad=lastw_pad, cls_mask=cls_mask)


# TODO(synk): nn.Dropout, the non-prototype MLP/ELU branch and the
# protgnn_plus path are dead code when enable_prot=True (this configuration),
# so they are omitted.

if __name__ == "__main__":
    # Deterministic batched problem: 16 ring graphs of 16 nodes each
    # (256 node rows -> MXU rows filled; still small & fast).
    INPUT_DIM = 16
    LATENT_DIM = [128, 128]
    OUTPUT_DIM = 2
    NUM_PROTOS_PER_CLASS = 5
    EMB_NORMALIZE = True

    N_PER_GRAPH, NUM_GRAPHS = 16, 16
    N = N_PER_GRAPH * NUM_GRAPHS

    key = jax.random.PRNGKey(0)
    key, kx = jax.random.split(key)
    x = jax.random.normal(kx, (N, INPUT_DIM), jnp.float32)

    # edge_index: bidirectional ring inside each graph -> dense A[dst, src]
    src, dst = [], []
    for g in range(NUM_GRAPHS):
        base = g * N_PER_GRAPH
        for i in range(N_PER_GRAPH):
            a_, b_ = base + i, base + (i + 1) % N_PER_GRAPH
            src += [a_, b_]
            dst += [b_, a_]
    src = jnp.array(src, jnp.int32)
    dst = jnp.array(dst, jnp.int32)
    adj = jnp.zeros((N, N), jnp.float32).at[dst, src].add(1.0)

    batch = jnp.repeat(jnp.arange(NUM_GRAPHS, dtype=jnp.int32), N_PER_GRAPH)

    params = build_params(key, INPUT_DIM, LATENT_DIM, OUTPUT_DIM,
                          NUM_PROTOS_PER_CLASS)

    # One-time host preprocessing (cached across forward calls).
    adj1 = fold_adjacency(adj, params["layers"][0]["eps"])
    adj2 = fold_adjacency(adj, params["layers"][1]["eps"])
    pool, inv_counts = build_pool(batch, NUM_GRAPHS)

    fwd = jax.jit(functools.partial(
        ginnet_forward,
        num_graphs=NUM_GRAPHS,
        num_classes=OUTPUT_DIM,
        num_prototypes=OUTPUT_DIM * NUM_PROTOS_PER_CLASS,
        emb_normalize=EMB_NORMALIZE))

    logits, probs, node_emb, graph_emb, min_dist = fwd(
        x, adj1, adj2, pool, inv_counts, params)
    for out in (logits, probs, node_emb, graph_emb, min_dist):
        jax.block_until_ready(out)

    assert logits.shape == (NUM_GRAPHS, OUTPUT_DIM)
    assert probs.shape == (NUM_GRAPHS, OUTPUT_DIM)
    assert node_emb.shape == (N, LATENT_DIM[-1])
    assert graph_emb.shape == (NUM_GRAPHS, LATENT_DIM[-1])
    assert min_dist.shape == (NUM_GRAPHS, OUTPUT_DIM * NUM_PROTOS_PER_CLASS)
    assert bool(jnp.all(jnp.isfinite(logits)))
    assert bool(jnp.all(jnp.isfinite(probs)))
    assert bool(jnp.all(min_dist >= 0.0))
    assert bool(jnp.allclose(jnp.sum(probs, axis=-1), 1.0, atol=1e-5))

    print("KERNEL_OK")
</pallas_src>

<mosaic_0001>
module attributes {stable_mosaic.version = 11 : i64} {
  func.func @ginnet_fused_kernel(%arg0: memref<256x16xf32, #tpu.memory_space<vmem>>, %arg1: memref<256x256xbf16, #tpu.memory_space<vmem>>, %arg2: memref<256x256xbf16, #tpu.memory_space<vmem>>, %arg3: memref<16x128xbf16, #tpu.memory_space<vmem>>, %arg4: memref<1x128xf32, #tpu.memory_space<vmem>>, %arg5: memref<128x128xbf16, #tpu.memory_space<vmem>>, %arg6: memref<1x128xf32, #tpu.memory_space<vmem>>, %arg7: memref<128x128xbf16, #tpu.memory_space<vmem>>, %arg8: memref<1x128xf32, #tpu.memory_space<vmem>>, %arg9: memref<128x128xbf16, #tpu.memory_space<vmem>>, %arg10: memref<1x128xf32, #tpu.memory_space<vmem>>, %arg11: memref<16x256xbf16, #tpu.memory_space<vmem>>, %arg12: memref<16x1xf32, #tpu.memory_space<vmem>>, %arg13: memref<128x128xbf16, #tpu.memory_space<vmem>>, %arg14: memref<1x128xf32, #tpu.memory_space<vmem>>, %arg15: memref<128x128xbf16, #tpu.memory_space<vmem>>, %arg16: memref<1x128xf32, #tpu.memory_space<vmem>>, %arg17: memref<256x128xf32, #tpu.memory_space<vmem>>, %arg18: memref<16x128xf32, #tpu.memory_space<vmem>>, %arg19: memref<3x16x128xf32, #tpu.memory_space<vmem>>) attributes {dimension_semantics = [], scalar_prefetch = 0 : i64, scratch_operands = 0 : i64, tpu.core_type = #tpu.core_type<tc>} {
    %c0 = arith.constant 0 : index
    %c0_0 = arith.constant 0 : index
    %0 = vector.load %arg0[%c0, %c0_0] : memref<256x16xf32, #tpu.memory_space<vmem>>, vector<256x16xf32>
    %1 = arith.truncf %0 : vector<256x16xf32> to vector<256x16xbf16>
    %c0_1 = arith.constant 0 : index
    %c0_2 = arith.constant 0 : index
    %2 = vector.load %arg1[%c0_1, %c0_2] : memref<256x256xbf16, #tpu.memory_space<vmem>>, vector<256x256xbf16>
    %cst = arith.constant dense<0.000000e+00> : vector<256x16xf32>
    %3 = tpu.matmul %2, %1, %cst {dimension_numbers = #tpu.dot_dimension_numbers<[1], [0], [0], [1], [0, 0, 1, 1], [], []>} : vector<256x256xbf16>, vector<256x16xbf16>, vector<256x16xf32> -> vector<256x16xf32>
    %4 = arith.truncf %3 : vector<256x16xf32> to vector<256x16xbf16>
    %c0_3 = arith.constant 0 : index
    %c0_4 = arith.constant 0 : index
    %5 = vector.load %arg3[%c0_3, %c0_4] : memref<16x128xbf16, #tpu.memory_space<vmem>>, vector<16x128xbf16>
    %cst_5 = arith.constant dense<0.000000e+00> : vector<256x128xf32>
    %6 = tpu.matmul %4, %5, %cst_5 {dimension_numbers = #tpu.dot_dimension_numbers<[1], [0], [0], [1], [0, 0, 1, 1], [], []>} : vector<256x16xbf16>, vector<16x128xbf16>, vector<256x128xf32> -> vector<256x128xf32>
    %c0_6 = arith.constant 0 : index
    %c0_7 = arith.constant 0 : index
    %7 = vector.load %arg4[%c0_6, %c0_7] : memref<1x128xf32, #tpu.memory_space<vmem>>, vector<1x128xf32>
    %8 = vector.broadcast %7 : vector<1x128xf32> to vector<256x128xf32>
    %9 = arith.addf %6, %8 : vector<256x128xf32>
    %cst_8 = arith.constant 0.000000e+00 : f32
    %10 = vector.broadcast %cst_8 : f32 to vector<256x128xf32>
    %11 = arith.maximumf %9, %10 : vector<256x128xf32>
    %12 = arith.truncf %11 : vector<256x128xf32> to vector<256x128xbf16>
    %c0_9 = arith.constant 0 : index
    %c0_10 = arith.constant 0 : index
    %13 = vector.load %arg5[%c0_9, %c0_10] : memref<128x128xbf16, #tpu.memory_space<vmem>>, vector<128x128xbf16>
    %cst_11 = arith.constant dense<0.000000e+00> : vector<256x128xf32>
    %14 = tpu.matmul %12, %13, %cst_11 {dimension_numbers = #tpu.dot_dimension_numbers<[1], [0], [0], [1], [0, 0, 1, 1], [], []>} : vector<256x128xbf16>, vector<128x128xbf16>, vector<256x128xf32> -> vector<256x128xf32>
    %c0_12 = arith.constant 0 : index
    %c0_13 = arith.constant 0 : index
    %15 = vector.load %arg6[%c0_12, %c0_13] : memref<1x128xf32, #tpu.memory_space<vmem>>, vector<1x128xf32>
    %16 = vector.broadcast %15 : vector<1x128xf32> to vector<256x128xf32>
    %17 = arith.addf %14, %16 : vector<256x128xf32>
    %18 = arith.mulf %17, %17 : vector<256x128xf32>
    %cst_14 = arith.constant dense<0.000000e+00> : vector<256xf32>
    %19 = vector.multi_reduction <add>, %18, %cst_14 [1] : vector<256x128xf32> to vector<256xf32>
    %20 = vector.shape_cast %19 : vector<256xf32> to vector<256x1xf32>
    %cst_15 = arith.constant 1.000000e-24 : f32
    %21 = vector.broadcast %cst_15 : f32 to vector<256x1xf32>
    %22 = arith.maximumf %20, %21 : vector<256x1xf32>
    %23 = math.rsqrt %22 : vector<256x1xf32>
    %24 = vector.broadcast %23 : vector<256x1xf32> to vector<256x128xf32>
    %25 = arith.mulf %17, %24 : vector<256x128xf32>
    %cst_16 = arith.constant 0.000000e+00 : f32
    %26 = vector.broadcast %cst_16 : f32 to vector<256x128xf32>
    %27 = arith.maximumf %25, %26 : vector<256x128xf32>
    %28 = arith.truncf %27 : vector<256x128xf32> to vector<256x128xbf16>
    %c0_17 = arith.constant 0 : index
    %c0_18 = arith.constant 0 : index
    %29 = vector.load %arg2[%c0_17, %c0_18] : memref<256x256xbf16, #tpu.memory_space<vmem>>, vector<256x256xbf16>
    %cst_19 = arith.constant dense<0.000000e+00> : vector<256x128xf32>
    %30 = tpu.matmul %29, %28, %cst_19 {dimension_numbers = #tpu.dot_dimension_numbers<[1], [0], [0], [1], [0, 0, 1, 1], [], []>} : vector<256x256xbf16>, vector<256x128xbf16>, vector<256x128xf32> -> vector<256x128xf32>
    %31 = arith.truncf %30 : vector<256x128xf32> to vector<256x128xbf16>
    %c0_20 = arith.constant 0 : index
    %c0_21 = arith.constant 0 : index
    %32 = vector.load %arg7[%c0_20, %c0_21] : memref<128x128xbf16, #tpu.memory_space<vmem>>, vector<128x128xbf16>
    %cst_22 = arith.constant dense<0.000000e+00> : vector<256x128xf32>
    %33 = tpu.matmul %31, %32, %cst_22 {dimension_numbers = #tpu.dot_dimension_numbers<[1], [0], [0], [1], [0, 0, 1, 1], [], []>} : vector<256x128xbf16>, vector<128x128xbf16>, vector<256x128xf32> -> vector<256x128xf32>
    %c0_23 = arith.constant 0 : index
    %c0_24 = arith.constant 0 : index
    %34 = vector.load %arg8[%c0_23, %c0_24] : memref<1x128xf32, #tpu.memory_space<vmem>>, vector<1x128xf32>
    %35 = vector.broadcast %34 : vector<1x128xf32> to vector<256x128xf32>
    %36 = arith.addf %33, %35 : vector<256x128xf32>
    %cst_25 = arith.constant 0.000000e+00 : f32
    %37 = vector.broadcast %cst_25 : f32 to vector<256x128xf32>
    %38 = arith.maximumf %36, %37 : vector<256x128xf32>
    %39 = arith.truncf %38 : vector<256x128xf32> to vector<256x128xbf16>
    %c0_26 = arith.constant 0 : index
    %c0_27 = arith.constant 0 : index
    %40 = vector.load %arg9[%c0_26, %c0_27] : memref<128x128xbf16, #tpu.memory_space<vmem>>, vector<128x128xbf16>
    %cst_28 = arith.constant dense<0.000000e+00> : vector<256x128xf32>
    %41 = tpu.matmul %39, %40, %cst_28 {dimension_numbers = #tpu.dot_dimension_numbers<[1], [0], [0], [1], [0, 0, 1, 1], [], []>} : vector<256x128xbf16>, vector<128x128xbf16>, vector<256x128xf32> -> vector<256x128xf32>
    %c0_29 = arith.constant 0 : index
    %c0_30 = arith.constant 0 : index
    %42 = vector.load %arg10[%c0_29, %c0_30] : memref<1x128xf32, #tpu.memory_space<vmem>>, vector<1x128xf32>
    %43 = vector.broadcast %42 : vector<1x128xf32> to vector<256x128xf32>
    %44 = arith.addf %41, %43 : vector<256x128xf32>
    %45 = arith.mulf %44, %44 : vector<256x128xf32>
    %cst_31 = arith.constant dense<0.000000e+00> : vector<256xf32>
    %46 = vector.multi_reduction <add>, %45, %cst_31 [1] : vector<256x128xf32> to vector<256xf32>
    %47 = vector.shape_cast %46 : vector<256xf32> to vector<256x1xf32>
    %cst_32 = arith.constant 1.000000e-24 : f32
    %48 = vector.broadcast %cst_32 : f32 to vector<256x1xf32>
    %49 = arith.maximumf %47, %48 : vector<256x1xf32>
    %50 = math.rsqrt %49 : vector<256x1xf32>
    %51 = vector.broadcast %50 : vector<256x1xf32> to vector<256x128xf32>
    %52 = arith.mulf %44, %51 : vector<256x128xf32>
    %cst_33 = arith.constant 0.000000e+00 : f32
    %53 = vector.broadcast %cst_33 : f32 to vector<256x128xf32>
    %54 = arith.maximumf %52, %53 : vector<256x128xf32>
    %55 = arith.truncf %54 : vector<256x128xf32> to vector<256x128xbf16>
    %c0_34 = arith.constant 0 : index
    %c0_35 = arith.constant 0 : index
    %56 = vector.load %arg17[%c0_34, %c0_35] : memref<256x128xf32, #tpu.memory_space<vmem>>, vector<256x128xf32>
    tpu.vector_store %arg17[%c0_34, %c0_35], %54 {strides = array<i32>} : memref<256x128xf32, #tpu.memory_space<vmem>>, vector<256x128xf32>,
    %c0_36 = arith.constant 0 : index
    %c0_37 = arith.constant 0 : index
    %57 = vector.load %arg11[%c0_36, %c0_37] : memref<16x256xbf16, #tpu.memory_space<vmem>>, vector<16x256xbf16>
    %cst_38 = arith.constant dense<0.000000e+00> : vector<16x128xf32>
    %58 = tpu.matmul %57, %55, %cst_38 {dimension_numbers = #tpu.dot_dimension_numbers<[1], [0], [0], [1], [0, 0, 1, 1], [], []>} : vector<16x256xbf16>, vector<256x128xbf16>, vector<16x128xf32> -> vector<16x128xf32>
    %c0_39 = arith.constant 0 : index
    %c0_40 = arith.constant 0 : index
    %59 = vector.load %arg12[%c0_39, %c0_40] : memref<16x1xf32, #tpu.memory_space<vmem>>, vector<16x1xf32>
    %60 = vector.broadcast %59 : vector<16x1xf32> to vector<16x128xf32>
    %61 = arith.mulf %58, %60 : vector<16x128xf32>
    %c0_41 = arith.constant 0 : index
    %c0_42 = arith.constant 0 : index
    %62 = vector.load %arg18[%c0_41, %c0_42] : memref<16x128xf32, #tpu.memory_space<vmem>>, vector<16x128xf32>
    tpu.vector_store %arg18[%c0_41, %c0_42], %61 {strides = array<i32>} : memref<16x128xf32, #tpu.memory_space<vmem>>, vector<16x128xf32>,
    %63 = arith.truncf %61 : vector<16x128xf32> to vector<16x128xbf16>
    %c0_43 = arith.constant 0 : index
    %c0_44 = arith.constant 0 : index
    %64 = vector.load %arg13[%c0_43, %c0_44] : memref<128x128xbf16, #tpu.memory_space<vmem>>, vector<128x128xbf16>
    %cst_45 = arith.constant dense<0.000000e+00> : vector<16x128xf32>
    %65 = tpu.matmul %63, %64, %cst_45 {dimension_numbers = #tpu.dot_dimension_numbers<[1], [0], [0], [1], [0, 0, 1, 1], [], []>} : vector<16x128xbf16>, vector<128x128xbf16>, vector<16x128xf32> -> vector<16x128xf32>
    %66 = arith.mulf %61, %61 : vector<16x128xf32>
    %cst_46 = arith.constant dense<0.000000e+00> : vector<16xf32>
    %67 = vector.multi_reduction <add>, %66, %cst_46 [1] : vector<16x128xf32> to vector<16xf32>
    %68 = vector.shape_cast %67 : vector<16xf32> to vector<16x1xf32>
    %cst_47 = arith.constant -2.000000e+00 : f32
    %69 = vector.broadcast %cst_47 : f32 to vector<16x128xf32>
    %70 = arith.mulf %69, %65 : vector<16x128xf32>
    %71 = vector.broadcast %68 : vector<16x1xf32> to vector<16x128xf32>
    %72 = arith.addf %70, %71 : vector<16x128xf32>
    %c0_48 = arith.constant 0 : index
    %c0_49 = arith.constant 0 : index
    %73 = vector.load %arg14[%c0_48, %c0_49] : memref<1x128xf32, #tpu.memory_space<vmem>>, vector<1x128xf32>
    %74 = vector.broadcast %73 : vector<1x128xf32> to vector<16x128xf32>
    %75 = arith.addf %72, %74 : vector<16x128xf32>
    %cst_50 = arith.constant 0.000000e+00 : f32
    %76 = vector.broadcast %cst_50 : f32 to vector<16x128xf32>
    %77 = arith.maximumf %75, %76 : vector<16x128xf32>
    %cst_51 = arith.constant 1.000000e+00 : f32
    %78 = vector.broadcast %cst_51 : f32 to vector<16x128xf32>
    %79 = arith.addf %77, %78 : vector<16x128xf32>
    %cst_52 = arith.constant 9.99999974E-5 : f32
    %80 = vector.broadcast %cst_52 : f32 to vector<16x128xf32>
    %81 = arith.addf %77, %80 : vector<16x128xf32>
    %82 = arith.divf %79, %81 : vector<16x128xf32>
    %83 = math.log %82 : vector<16x128xf32>
    %84 = arith.truncf %83 : vector<16x128xf32> to vector<16x128xbf16>
    %c0_53 = arith.constant 0 : index
    %c0_54 = arith.constant 0 : index
    %85 = vector.load %arg15[%c0_53, %c0_54] : memref<128x128xbf16, #tpu.memory_space<vmem>>, vector<128x128xbf16>
    %cst_55 = arith.constant dense<0.000000e+00> : vector<16x128xf32>
    %86 = tpu.matmul %84, %85, %cst_55 {dimension_numbers = #tpu.dot_dimension_numbers<[1], [0], [0], [1], [0, 0, 1, 1], [], []>} : vector<16x128xbf16>, vector<128x128xbf16>, vector<16x128xf32> -> vector<16x128xf32>
    %c0_56 = arith.constant 0 : index
    %c0_57 = arith.constant 0 : index
    %87 = vector.load %arg16[%c0_56, %c0_57] : memref<1x128xf32, #tpu.memory_space<vmem>>, vector<1x128xf32>
    %88 = vector.broadcast %87 : vector<1x128xf32> to vector<16x128xf32>
    %89 = arith.addf %86, %88 : vector<16x128xf32>
    %cst_58 = arith.constant dense<0xFF800000> : vector<16xf32>
    %90 = vector.multi_reduction <maximumf>, %89, %cst_58 [1] : vector<16x128xf32> to vector<16xf32>
    %91 = vector.shape_cast %90 : vector<16xf32> to vector<16x1xf32>
    %92 = vector.broadcast %91 : vector<16x1xf32> to vector<16x128xf32>
    %93 = arith.subf %89, %92 : vector<16x128xf32>
    %94 = math.exp %93 : vector<16x128xf32>
    %cst_59 = arith.constant dense<0.000000e+00> : vector<16xf32>
    %95 = vector.multi_reduction <add>, %94, %cst_59 [1] : vector<16x128xf32> to vector<16xf32>
    %96 = vector.shape_cast %95 : vector<16xf32> to vector<16x1xf32>
    %97 = vector.broadcast %96 : vector<16x1xf32> to vector<16x128xf32>
    %98 = arith.divf %94, %97 : vector<16x128xf32>
    %c0_60 = arith.constant 0 : index
    %c0_61 = arith.constant 0 : index
    %c0_62 = arith.constant 0 : index
    %99 = vector.load %arg19[%c0_60, %c0_61, %c0_62] : memref<3x16x128xf32, #tpu.memory_space<vmem>>, vector<1x16x128xf32>
    %100 = vector.shape_cast %99 : vector<1x16x128xf32> to vector<16x128xf32>
    %101 = vector.shape_cast %86 : vector<16x128xf32> to vector<1x16x128xf32>
    tpu.vector_store %arg19[%c0_60, %c0_61, %c0_62], %101 {strides = array<i32>} : memref<3x16x128xf32, #tpu.memory_space<vmem>>, vector<1x16x128xf32>,
    %c1 = arith.constant 1 : index
    %c0_63 = arith.constant 0 : index
    %c0_64 = arith.constant 0 : index
    %102 = vector.load %arg19[%c1, %c0_63, %c0_64] : memref<3x16x128xf32, #tpu.memory_space<vmem>>, vector<1x16x128xf32>
    %103 = vector.shape_cast %102 : vector<1x16x128xf32> to vector<16x128xf32>
    %104 = vector.shape_cast %98 : vector<16x128xf32> to vector<1x16x128xf32>
    tpu.vector_store %arg19[%c1, %c0_63, %c0_64], %104 {strides = array<i32>} : memref<3x16x128xf32, #tpu.memory_space<vmem>>, vector<1x16x128xf32>,
    %c2 = arith.constant 2 : index
    %c0_65 = arith.constant 0 : index
    %c0_66 = arith.constant 0 : index
    %105 = vector.load %arg19[%c2, %c0_65, %c0_66] : memref<3x16x128xf32, #tpu.memory_space<vmem>>, vector<1x16x128xf32>
    %106 = vector.shape_cast %105 : vector<1x16x128xf32> to vector<16x128xf32>
    %107 = vector.shape_cast %77 : vector<16x128xf32> to vector<1x16x128xf32>
    tpu.vector_store %arg19[%c2, %c0_65, %c0_66], %107 {strides = array<i32>} : memref<3x16x128xf32, #tpu.memory_space<vmem>>, vector<1x16x128xf32>,
    return
  }
}

</mosaic_0001>

<llo_original>
// kernel: ginnet_forward.1
$region0: #{ginnet_forward.1}
  #allocation0 [shape = 'u32[]', space=smem, size = 0x4, offset = 0x4, fixed_abs, tag = 'smem constant byte address 0x4 - core index']
  #allocation1 [shape = 'u32[144,128]{1,0:T(1,128)}', space=vmem, size = 0x12000, scoped, tag = 'internal scratch']
  %s0 = inlined_call_operand.vmem [shape: f32[256,16], index: 0, kind: input, shape index: {}]
  %s1 = inlined_call_operand.vmem [shape: bf16[256,256], index: 1, kind: input, shape index: {}]
  %s2 = inlined_call_operand.hbm [shape: bf16[256,256], index: 2, kind: input, shape index: {}]
  %s3 = inlined_call_operand.vmem [shape: bf16[16,128], index: 3, kind: input, shape index: {}]
  %s4 = inlined_call_operand.vmem [shape: f32[1,128], index: 4, kind: input, shape index: {}]
  %s5 = inlined_call_operand.vmem [shape: bf16[128,128], index: 5, kind: input, shape index: {}]
  %s6 = inlined_call_operand.vmem [shape: f32[1,128], index: 6, kind: input, shape index: {}]
  %s7 = inlined_call_operand.hbm [shape: bf16[128,128], index: 7, kind: input, shape index: {}]
  %s8 = inlined_call_operand.vmem [shape: f32[1,128], index: 8, kind: input, shape index: {}]
  %s9 = inlined_call_operand.hbm [shape: bf16[128,128], index: 9, kind: input, shape index: {}]
  %s10 = inlined_call_operand.vmem [shape: f32[1,128], index: 10, kind: input, shape index: {}]
  %s11 = inlined_call_operand.hbm [shape: bf16[16,256], index: 11, kind: input, shape index: {}]
  %s12 = inlined_call_operand.vmem [shape: f32[16,1], index: 12, kind: input, shape index: {}]
  %s13 = inlined_call_operand.hbm [shape: bf16[128,128], index: 13, kind: input, shape index: {}]
  %s14 = inlined_call_operand.vmem [shape: f32[1,128], index: 14, kind: input, shape index: {}]
  %s15 = inlined_call_operand.hbm [shape: bf16[128,128], index: 15, kind: input, shape index: {}]
  %s16 = inlined_call_operand.hbm [shape: f32[1,128], index: 16, kind: input, shape index: {}]
  %s17 = inlined_call_operand.hbm [shape: f32[256,128], index: 17, kind: output, shape index: {0}]
  %s18 = inlined_call_operand.hbm [shape: f32[16,128], index: 18, kind: output, shape index: {1}]
  %s19 = inlined_call_operand.vmem [shape: f32[3,16,128], index: 19, kind: output, shape index: {2}]
  %20 = xla_tuple %s17, %s18, %s19
  %s21 = sld [smem:[#allocation0]]
  $region122: #{ginnet_forward.1} parent=0
    _
  %s23 = ssub.s32 1, %s21
  %s24 = scalar_select 0, %s23, %s21
  $region1: #{ginnet_forward.1} parent=0
    #allocation2 [shape = 'u8[131072]{0}', space=vmem, size = 0x20000, scoped, tag = 'input window, operand 2, single buffered']
    #allocation3 [shape = 's32[1]{0}', space=sflag, size = 0x4, scoped, tag = 'scoped memory for ginnet_forward.1']
    #allocation4 [shape = 's32[1]{0}', space=sflag, size = 0x4, scoped, tag = 'scoped memory for ginnet_forward.1']
    #allocation5 [shape = 'u8[32768]{0}', space=vmem, size = 0x8000, scoped, tag = 'input window, operand 7, single buffered']
    #allocation6 [shape = 's32[1]{0}', space=sflag, size = 0x4, scoped, tag = 'scoped memory for ginnet_forward.1']
    #allocation7 [shape = 'u8[32768]{0}', space=vmem, size = 0x8000, scoped, tag = 'input window, operand 9, single buffered']
    #allocation8 [shape = 'u8[8192]{0}', space=vmem, size = 0x2000, scoped, tag = 'input window, operand 11, single buffered']
    #allocation9 [shape = 's32[1]{0}', space=sflag, size = 0x4, scoped, tag = 'scoped memory for ginnet_forward.1']
    #allocation10 [shape = 'u8[32768]{0}', space=vmem, size = 0x8000, scoped, tag = 'input window, operand 13, single buffered']
    #allocation11 [shape = 'u8[32768]{0}', space=vmem, size = 0x8000, scoped, tag = 'input window, operand 15, single buffered']
    #allocation12 [shape = 's32[1]{0}', space=sflag, size = 0x4, scoped, tag = 'scoped memory for ginnet_forward.1']
    #allocation13 [shape = 'u8[512]{0}', space=vmem, size = 0x400, scoped, tag = 'input window, operand 16, single buffered']
    #allocation14 [shape = 'u8[131072]{0}', space=vmem, size = 0x20000, scoped, tag = 'output window, operand 0, single buffered']
    #allocation15 [shape = 'u8[8192]{0}', space=vmem, size = 0x2000, scoped, tag = 'output window, operand 1, single buffered']
    #allocation16 [shape = 's32[1]{0}', space=sflag, size = 0x4, scoped, tag = 'scoped memory for ginnet_forward.1']
    %25 = vsyncpa [#allocation3], 0
    %26 = vsyncpa [#allocation6], 0
    %27 = vsyncpa [#allocation9], 0
    %28 = vsyncpa [#allocation12], 0
    %29 = vsyncpa [#allocation4], 0
    %30 = vsyncpa [#allocation16], 0
    // Predicated region
    $region2: #{ginnet_forward.1} parent=1 // pred_check
      _
    $region3: #{ginnet_forward.1} parent=1 // pred_check_branch
      %32 = sbr.rel (0) target = $region5
    $region4: #{ginnet_forward.1} parent=1 // pred_region
      _
    $region5: #{ginnet_forward.1} parent=1 // pred_fallthru
      _
    // Predicated region
    $region6: #{ginnet_forward.1} parent=1 // pred_check
      _
    $region7: #{ginnet_forward.1} parent=1 // pred_check_branch
      %34 = sbr.rel (0) target = $region9
    $region8: #{ginnet_forward.1} parent=1 // pred_region
      _
    $region9: #{ginnet_forward.1} parent=1 // pred_fallthru
      _
    // Predicated region
    $region10: #{ginnet_forward.1} parent=1 // pred_check
      _
    $region11: #{ginnet_forward.1} parent=1 // pred_check_branch
      %36 = sbr.rel (0) target = $region13
    $region12: #{ginnet_forward.1} parent=1 // pred_region
      %s38 = ssub.s32 4096, 4096
      %39 = vsyncadd [#allocation3], %s38
      %s40 = sshll.u32 [#allocation2], 4
      %s41 = int_to_ptr.vmem [resolvable:$true] %s40
      %46 = dma.hbm_to_vmem [thread:$0]  %s2, 4096, %s41, [#allocation3], 128, 128, 8
    $region13: #{ginnet_forward.1} parent=1 // pred_fallthru
      _
    // Predicated region
    $region14: #{ginnet_forward.1} parent=1 // pred_check
      _
    $region15: #{ginnet_forward.1} parent=1 // pred_check_branch
      %48 = sbr.rel (0) target = $region17
    $region16: #{ginnet_forward.1} parent=1 // pred_region
      _
    $region17: #{ginnet_forward.1} parent=1 // pred_fallthru
      _
    // Predicated region
    $region18: #{ginnet_forward.1} parent=1 // pred_check
      _
    $region19: #{ginnet_forward.1} parent=1 // pred_check_branch
      %50 = sbr.rel (0) target = $region21
    $region20: #{ginnet_forward.1} parent=1 // pred_region
      _
    $region21: #{ginnet_forward.1} parent=1 // pred_fallthru
      _
    // Predicated region
    $region22: #{ginnet_forward.1} parent=1 // pred_check
      _
    $region23: #{ginnet_forward.1} parent=1 // pred_check_branch
      %52 = sbr.rel (0) target = $region25
    $region24: #{ginnet_forward.1} parent=1 // pred_region
      _
    $region25: #{ginnet_forward.1} parent=1 // pred_fallthru
      _
    // Predicated region
    $region26: #{ginnet_forward.1} parent=1 // pred_check
      _
    $region27: #{ginnet_forward.1} parent=1 // pred_check_branch
      %54 = sbr.rel (0) target = $region29
    $region28: #{ginnet_forward.1} parent=1 // pred_region
      _
    $region29: #{ginnet_forward.1} parent=1 // pred_fallthru
      _
    // Predicated region
    $region30: #{ginnet_forward.1} parent=1 // pred_check
      _
    $region31: #{ginnet_forward.1} parent=1 // pred_check_branch
      %56 = sbr.rel (0) target = $region33
    $region32: #{ginnet_forward.1} parent=1 // pred_region
      %s58 = ssub.s32 1024, 1024
      %59 = vsyncadd [#allocation6], %s58
      %s60 = sshll.u32 [#allocation5], 4
      %s61 = int_to_ptr.vmem [resolvable:$true] %s60
      %66 = dma.hbm_to_vmem [thread:$0]  %s7, 1024, %s61, [#allocation6], 64, 64, 4
    $region33: #{ginnet_forward.1} parent=1 // pred_fallthru
      _
    // Predicated region
    $region34: #{ginnet_forward.1} parent=1 // pred_check
      _
    $region35: #{ginnet_forward.1} parent=1 // pred_check_branch
      %68 = sbr.rel (0) target = $region37
    $region36: #{ginnet_forward.1} parent=1 // pred_region
      _
    $region37: #{ginnet_forward.1} parent=1 // pred_fallthru
      _
    // Predicated region
    $region38: #{ginnet_forward.1} parent=1 // pred_check
      _
    $region39: #{ginnet_forward.1} parent=1 // pred_check_branch
      %70 = sbr.rel (0) target = $region41
    $region40: #{ginnet_forward.1} parent=1 // pred_region
      %s72 = ssub.s32 1024, 1024
      %73 = vsyncadd [#allocation6], %s72
      %s74 = sshll.u32 [#allocation7], 4
      %s75 = int_to_ptr.vmem [resolvable:$true] %s74
      %80 = dma.hbm_to_vmem [thread:$0]  %s9, 1024, %s75, [#allocation6], 64, 64, 4
    $region41: #{ginnet_forward.1} parent=1 // pred_fallthru
      _
    // Predicated region
    $region42: #{ginnet_forward.1} parent=1 // pred_check
      _
    $region43: #{ginnet_forward.1} parent=1 // pred_check_branch
      %82 = sbr.rel (0) target = $region45
    $region44: #{ginnet_forward.1} parent=1 // pred_region
      _
    $region45: #{ginnet_forward.1} parent=1 // pred_fallthru
      _
    // Predicated region
    $region46: #{ginnet_forward.1} parent=1 // pred_check
      _
    $region47: #{ginnet_forward.1} parent=1 // pred_check_branch
      %84 = sbr.rel (0) target = $region49
    $region48: #{ginnet_forward.1} parent=1 // pred_region
      %s86 = ssub.s32 256, 256
      %87 = vsyncadd [#allocation9], %s86
      %s88 = sshll.u32 [#allocation8], 4
      %s89 = int_to_ptr.vmem [resolvable:$true] %s88
      %94 = dma.hbm_to_vmem [thread:$0]  %s11, 256, %s89, [#allocation9], 128, 128, 8
    $region49: #{ginnet_forward.1} parent=1 // pred_fallthru
      _
    // Predicated region
    $region50: #{ginnet_forward.1} parent=1 // pred_check
      _
    $region51: #{ginnet_forward.1} parent=1 // pred_check_branch
      %96 = sbr.rel (0) target = $region53
    $region52: #{ginnet_forward.1} parent=1 // pred_region
      _
    $region53: #{ginnet_forward.1} parent=1 // pred_fallthru
      _
    // Predicated region
    $region54: #{ginnet_forward.1} parent=1 // pred_check
      _
    $region55: #{ginnet_forward.1} parent=1 // pred_check_branch
      %98 = sbr.rel (0) target = $region57
    $region56: #{ginnet_forward.1} parent=1 // pred_region
      %s100 = ssub.s32 1024, 1024
      %101 = vsyncadd [#allocation9], %s100
      %s102 = sshll.u32 [#allocation10], 4
      %s103 = int_to_ptr.vmem [resolvable:$true] %s102
      %108 = dma.hbm_to_vmem [thread:$0]  %s13, 1024, %s103, [#allocation9], 64, 64, 4
    $region57: #{ginnet_forward.1} parent=1 // pred_fallthru
      _
    // Predicated region
    $region58: #{ginnet_forward.1} parent=1 // pred_check
      _
    $region59: #{ginnet_forward.1} parent=1 // pred_check_branch
      %110 = sbr.rel (0) target = $region61
    $region60: #{ginnet_forward.1} parent=1 // pred_region
      _
    $region61: #{ginnet_forward.1} parent=1 // pred_fallthru
      _
    // Predicated region
    $region62: #{ginnet_forward.1} parent=1 // pred_check
      _
    $region63: #{ginnet_forward.1} parent=1 // pred_check_branch
      %112 = sbr.rel (0) target = $region65
    $region64: #{ginnet_forward.1} parent=1 // pred_region
      %s114 = ssub.s32 1024, 1024
      %115 = vsyncadd [#allocation12], %s114
      %s116 = sshll.u32 [#allocation11], 4
      %s117 = int_to_ptr.vmem [resolvable:$true] %s116
      %122 = dma.hbm_to_vmem [thread:$0]  %s15, 1024, %s117, [#allocation12], 64, 64, 4
    $region65: #{ginnet_forward.1} parent=1 // pred_fallthru
      _
    // Predicated region
    $region66: #{ginnet_forward.1} parent=1 // pred_check
      _
    $region67: #{ginnet_forward.1} parent=1 // pred_check_branch
      %124 = sbr.rel (0) target = $region69
    $region68: #{ginnet_forward.1} parent=1 // pred_region
      %s126 = ssub.s32 16, 16
      %127 = vsyncadd [#allocation12], %s126
      %s129 = sshll.u32 [#allocation13], 4
      %s130 = int_to_ptr.vmem [resolvable:$true] %s129
      %132 = dma.hbm_to_vmem [thread:$0]  %s16, 16, %s130, [#allocation12]
    $region69: #{ginnet_forward.1} parent=1 // pred_fallthru
      _
    // Predicated region
    $region70: #{ginnet_forward.1} parent=1 // pred_check
      _
    $region71: #{ginnet_forward.1} parent=1 // pred_check_branch
      %134 = sbr.rel (0) target = $region73
    $region72: #{ginnet_forward.1} parent=1 // pred_region
      %135 = dma.done [#allocation3], 4096
    $region73: #{ginnet_forward.1} parent=1 // pred_fallthru
      _
    // Predicated region
    $region74: #{ginnet_forward.1} parent=1 // pred_check
      _
    $region75: #{ginnet_forward.1} parent=1 // pred_check_branch
      %137 = sbr.rel (0) target = $region77
    $region76: #{ginnet_forward.1} parent=1 // pred_region
      %138 = dma.done [#allocation6], 1024
    $region77: #{ginnet_forward.1} parent=1 // pred_fallthru
      _
    // Predicated region
    $region78: #{ginnet_forward.1} parent=1 // pred_check
      _
    $region79: #{ginnet_forward.1} parent=1 // pred_check_branch
      %140 = sbr.rel (0) target = $region81
    $region80: #{ginnet_forward.1} parent=1 // pred_region
      %141 = dma.done [#allocation6], 1024
    $region81: #{ginnet_forward.1} parent=1 // pred_fallthru
      _
    // Predicated region
    $region82: #{ginnet_forward.1} parent=1 // pred_check
      _
    $region83: #{ginnet_forward.1} parent=1 // pred_check_branch
      %143 = sbr.rel (0) target = $region85
    $region84: #{ginnet_forward.1} parent=1 // pred_region
      %144 = dma.done [#allocation9], 256
    $region85: #{ginnet_forward.1} parent=1 // pred_fallthru
      _
    // Predicated region
    $region86: #{ginnet_forward.1} parent=1 // pred_check
      _
    $region87: #{ginnet_forward.1} parent=1 // pred_check_branch
      %146 = sbr.rel (0) target = $region89
    $region88: #{ginnet_forward.1} parent=1 // pred_region
      %147 = dma.done [#allocation9], 1024
    $region89: #{ginnet_forward.1} parent=1 // pred_fallthru
      _
    // Predicated region
    $region90: #{ginnet_forward.1} parent=1 // pred_check
      _
    $region91: #{ginnet_forward.1} parent=1 // pred_check_branch
      %149 = sbr.rel (0) target = $region93
    $region92: #{ginnet_forward.1} parent=1 // pred_region
      %150 = dma.done [#allocation12], 1024
    $region93: #{ginnet_forward.1} parent=1 // pred_fallthru
      _
    // Predicated region
    $region94: #{ginnet_forward.1} parent=1 // pred_check
      _
    $region95: #{ginnet_forward.1} parent=1 // pred_check_branch
      %152 = sbr.rel (0) target = $region97
    $region96: #{ginnet_forward.1} parent=1 // pred_region
      %153 = dma.done [#allocation12], 16
    $region97: #{ginnet_forward.1} parent=1 // pred_fallthru
      _
    %v155 = vld [vmem:[%s0] sm:$0xff]
    %v156 = vld [vmem:[%s0 + $0x8] sm:$0xff]
    %v157 = vld [vmem:[%s0 + $0x10] sm:$0xff]
    %v158 = vld [vmem:[%s0 + $0x18] sm:$0xff]
    %v159 = vld [vmem:[%s0 + $0x20] sm:$0xff]
    %v160 = vld [vmem:[%s0 + $0x28] sm:$0xff]
    %v161 = vld [vmem:[%s0 + $0x30] sm:$0xff]
    %v162 = vld [vmem:[%s0 + $0x38] sm:$0xff]
    %v163 = vld [vmem:[%s0 + $0x40] sm:$0xff]
    %v164 = vld [vmem:[%s0 + $0x48] sm:$0xff]
    %v165 = vld [vmem:[%s0 + $0x50] sm:$0xff]
    %v166 = vld [vmem:[%s0 + $0x58] sm:$0xff]
    %v167 = vld [vmem:[%s0 + $0x60] sm:$0xff]
    %v168 = vld [vmem:[%s0 + $0x68] sm:$0xff]
    %v169 = vld [vmem:[%s0 + $0x70] sm:$0xff]
    %v170 = vld [vmem:[%s0 + $0x78] sm:$0xff]
    %v171 = vld [vmem:[%s0 + $0x80] sm:$0xff]
    %v172 = vld [vmem:[%s0 + $0x88] sm:$0xff]
    %v173 = vld [vmem:[%s0 + $0x90] sm:$0xff]
    %v174 = vld [vmem:[%s0 + $0x98] sm:$0xff]
    %v175 = vld [vmem:[%s0 + $0xa0] sm:$0xff]
    %v176 = vld [vmem:[%s0 + $0xa8] sm:$0xff]
    %v177 = vld [vmem:[%s0 + $0xb0] sm:$0xff]
    %v178 = vld [vmem:[%s0 + $0xb8] sm:$0xff]
    %v179 = vld [vmem:[%s0 + $0xc0] sm:$0xff]
    %v180 = vld [vmem:[%s0 + $0xc8] sm:$0xff]
    %v181 = vld [vmem:[%s0 + $0xd0] sm:$0xff]
    %v182 = vld [vmem:[%s0 + $0xd8] sm:$0xff]
    %v183 = vld [vmem:[%s0 + $0xe0] sm:$0xff]
    %v184 = vld [vmem:[%s0 + $0xe8] sm:$0xff]
    %v185 = vld [vmem:[%s0 + $0xf0] sm:$0xff]
    %v186 = vld [vmem:[%s0 + $0xf8] sm:$0xff]
    %v187 = vpack.c.bf16 %v156, %v155
    %v188 = vpack.c.bf16 %v158, %v157
    %v189 = vpack.c.bf16 %v160, %v159
    %v190 = vpack.c.bf16 %v162, %v161
    %v191 = vpack.c.bf16 %v164, %v163
    %v192 = vpack.c.bf16 %v166, %v165
    %v193 = vpack.c.bf16 %v168, %v167
    %v194 = vpack.c.bf16 %v170, %v169
    %v195 = vpack.c.bf16 %v172, %v171
    %v196 = vpack.c.bf16 %v174, %v173
    %v197 = vpack.c.bf16 %v176, %v175
    %v198 = vpack.c.bf16 %v178, %v177
    %v199 = vpack.c.bf16 %v180, %v179
    %v200 = vpack.c.bf16 %v182, %v181
    %v201 = vpack.c.bf16 %v184, %v183
    %v202 = vpack.c.bf16 %v186, %v185
    %v203 = vld [vmem:[%s1] sm:$0xff]
    %v204 = vld [vmem:[%s1 + $0x8] sm:$0xff]
    %v205 = vld [vmem:[%s1 + $0x10] sm:$0xff]
    %v206 = vld [vmem:[%s1 + $0x18] sm:$0xff]
    %v207 = vld [vmem:[%s1 + $0x20] sm:$0xff]
    %v208 = vld [vmem:[%s1 + $0x28] sm:$0xff]
    %v209 = vld [vmem:[%s1 + $0x30] sm:$0xff]
    %v210 = vld [vmem:[%s1 + $0x38] sm:$0xff]
    %v211 = vld [vmem:[%s1 + $0x40] sm:$0xff]
    %v212 = vld [vmem:[%s1 + $0x48] sm:$0xff]
    %v213 = vld [vmem:[%s1 + $0x50] sm:$0xff]
    %v214 = vld [vmem:[%s1 + $0x58] sm:$0xff]
    %v215 = vld [vmem:[%s1 + $0x60] sm:$0xff]
    %v216 = vld [vmem:[%s1 + $0x68] sm:$0xff]
    %v217 = vld [vmem:[%s1 + $0x70] sm:$0xff]
    %v218 = vld [vmem:[%s1 + $0x78] sm:$0xff]
    %v219 = vld [vmem:[%s1 + $0x80] sm:$0xff]
    %v220 = vld [vmem:[%s1 + $0x88] sm:$0xff]
    %v221 = vld [vmem:[%s1 + $0x90] sm:$0xff]
    %v222 = vld [vmem:[%s1 + $0x98] sm:$0xff]
    %v223 = vld [vmem:[%s1 + $0xa0] sm:$0xff]
    %v224 = vld [vmem:[%s1 + $0xa8] sm:$0xff]
    %v225 = vld [vmem:[%s1 + $0xb0] sm:$0xff]
    %v226 = vld [vmem:[%s1 + $0xb8] sm:$0xff]
    %v227 = vld [vmem:[%s1 + $0xc0] sm:$0xff]
    %v228 = vld [vmem:[%s1 + $0xc8] sm:$0xff]
    %v229 = vld [vmem:[%s1 + $0xd0] sm:$0xff]
    %v230 = vld [vmem:[%s1 + $0xd8] sm:$0xff]
    %v231 = vld [vmem:[%s1 + $0xe0] sm:$0xff]
    %v232 = vld [vmem:[%s1 + $0xe8] sm:$0xff]
    %v233 = vld [vmem:[%s1 + $0xf0] sm:$0xff]
    %v234 = vld [vmem:[%s1 + $0xf8] sm:$0xff]
    %v267 = vunpack.c.l.b16 %v203
    %v268 = vunpack.c.h.b16 %v203
    %v269 = vunpack.c.l.b16 %v204
    %v270 = vunpack.c.h.b16 %v204
    %v271 = vunpack.c.l.b16 %v205
    %v272 = vunpack.c.h.b16 %v205
    %v273 = vunpack.c.l.b16 %v206
    %v274 = vunpack.c.h.b16 %v206
    %v275 = vunpack.c.l.b16 %v207
    %v276 = vunpack.c.h.b16 %v207
    %v277 = vunpack.c.l.b16 %v208
    %v278 = vunpack.c.h.b16 %v208
    %v279 = vunpack.c.l.b16 %v209
    %v280 = vunpack.c.h.b16 %v209
    %v281 = vunpack.c.l.b16 %v210
    %v282 = vunpack.c.h.b16 %v210
    %v283 = vunpack.c.l.b16 %v211
    %v284 = vunpack.c.h.b16 %v211
    %v285 = vunpack.c.l.b16 %v212
    %v286 = vunpack.c.h.b16 %v212
    %v287 = vunpack.c.l.b16 %v213
    %v288 = vunpack.c.h.b16 %v213
    %v289 = vunpack.c.l.b16 %v214
    %v290 = vunpack.c.h.b16 %v214
    %v291 = vunpack.c.l.b16 %v215
    %v292 = vunpack.c.h.b16 %v215
    %v293 = vunpack.c.l.b16 %v216
    %v294 = vunpack.c.h.b16 %v216
    %v295 = vunpack.c.l.b16 %v217
    %v296 = vunpack.c.h.b16 %v217
    %v297 = vunpack.c.l.b16 %v218
    %v298 = vunpack.c.h.b16 %v218
    %v299 = vunpack.c.l.b16 %v219
    %v300 = vunpack.c.h.b16 %v219
    %v301 = vunpack.c.l.b16 %v220
    %v302 = vunpack.c.h.b16 %v220
    %v303 = vunpack.c.l.b16 %v221
    %v304 = vunpack.c.h.b16 %v221
    %v305 = vunpack.c.l.b16 %v222
    %v306 = vunpack.c.h.b16 %v222
    %v307 = vunpack.c.l.b16 %v223
    %v308 = vunpack.c.h.b16 %v223
    %v309 = vunpack.c.l.b16 %v224
    %v310 = vunpack.c.h.b16 %v224
    %v311 = vunpack.c.l.b16 %v225
    %v312 = vunpack.c.h.b16 %v225
    %v313 = vunpack.c.l.b16 %v226
    %v314 = vunpack.c.h.b16 %v226
    %v315 = vunpack.c.l.b16 %v227
    %v316 = vunpack.c.h.b16 %v227
    %v317 = vunpack.c.l.b16 %v228
    %v318 = vunpack.c.h.b16 %v228
    %v319 = vunpack.c.l.b16 %v229
    %v320 = vunpack.c.h.b16 %v229
    %v321 = vunpack.c.l.b16 %v230
    %v322 = vunpack.c.h.b16 %v230
    %v323 = vunpack.c.l.b16 %v231
    %v324 = vunpack.c.h.b16 %v231
    %v325 = vunpack.c.l.b16 %v232
    %v326 = vunpack.c.h.b16 %v232
    %v327 = vunpack.c.l.b16 %v233
    %v328 = vunpack.c.h.b16 %v233
    %v329 = vunpack.c.l.b16 %v234
    %v330 = vunpack.c.h.b16 %v234
    %v331 = vpack.c.b16 %v269, %v267
    %v332 = vpack.c.b16 %v270, %v268
    %v333 = vpack.c.b16 %v273, %v271
    %v334 = vpack.c.b16 %v274, %v272
    %v335 = vpack.c.b16 %v277, %v275
    %v336 = vpack.c.b16 %v278, %v276
    %v337 = vpack.c.b16 %v281, %v279
    %v338 = vpack.c.b16 %v282, %v280
    %v339 = vpack.c.b16 %v285, %v283
    %v340 = vpack.c.b16 %v286, %v284
    %v341 = vpack.c.b16 %v289, %v287
    %v342 = vpack.c.b16 %v290, %v288
    %v343 = vpack.c.b16 %v293, %v291
    %v344 = vpack.c.b16 %v294, %v292
    %v345 = vpack.c.b16 %v297, %v295
    %v346 = vpack.c.b16 %v298, %v296
    %v347 = vpack.c.b16 %v301, %v299
    %v348 = vpack.c.b16 %v302, %v300
    %v349 = vpack.c.b16 %v305, %v303
    %v350 = vpack.c.b16 %v306, %v304
    %v351 = vpack.c.b16 %v309, %v307
    %v352 = vpack.c.b16 %v310, %v308
    %v353 = vpack.c.b16 %v313, %v311
    %v354 = vpack.c.b16 %v314, %v312
    %v355 = vpack.c.b16 %v317, %v315
    %v356 = vpack.c.b16 %v318, %v316
    %v357 = vpack.c.b16 %v321, %v319
    %v358 = vpack.c.b16 %v322, %v320
    %v359 = vpack.c.b16 %v325, %v323
    %v360 = vpack.c.b16 %v326, %v324
    %v361 = vpack.c.b16 %v329, %v327
    %v362 = vpack.c.b16 %v330, %v328
    %395 = vmatprep.subr.bf16.mxu0 0
    %396 = vmatpush1.bf16.msra.mxu0 %v187
    %397 = vmatprep.subr.bf16.mxu0 0
    %398 = vmatpush1.bf16.msra.mxu0 %v188
    %399 = vmatprep.subr.bf16.mxu0 0
    %400 = vmatpush1.bf16.msra.mxu0 %v189
    %401 = vmatprep.subr.bf16.mxu0 0
    %402 = vmatpush1.bf16.msra.mxu0 %v190
    %403 = vmatprep.subr.bf16.mxu0 0
    %404 = vmatpush1.bf16.msra.mxu0 %v191
    %405 = vmatprep.subr.bf16.mxu0 0
    %406 = vmatpush1.bf16.msra.mxu0 %v192
    %407 = vmatprep.subr.bf16.mxu0 0
    %408 = vmatpush1.bf16.msra.mxu0 %v193
    %409 = vmatprep.subr.bf16.mxu0 0
    %410 = vmatpush1.bf16.msra.mxu0 %v194
    %411 = vmatprep.subr.bf16.mxu0 0
    %412 = vmatpush1.bf16.msra.mxu0 %v195
    %413 = vmatprep.subr.bf16.mxu0 0
    %414 = vmatpush1.bf16.msra.mxu0 %v196
    %415 = vmatprep.subr.bf16.mxu0 0
    %416 = vmatpush1.bf16.msra.mxu0 %v197
    %417 = vmatprep.subr.bf16.mxu0 0
    %418 = vmatpush1.bf16.msra.mxu0 %v198
    %419 = vmatprep.subr.bf16.mxu0 0
    %420 = vmatpush1.bf16.msra.mxu0 %v199
    %421 = vmatprep.subr.bf16.mxu0 0
    %422 = vmatpush1.bf16.msra.mxu0 %v200
    %423 = vmatprep.subr.bf16.mxu0 0
    %424 = vmatpush1.bf16.msra.mxu0 %v201
    %425 = vmatprep.subr.bf16.mxu0 0
    %426 = vmatpush1.bf16.msra.mxu0 %v202
    %427 = vmatprep.mubr.bf16.mxu0 %v332
    %428 = vmatmul.mubr.bf16.gmra.mrb[0].mxu0 %v331
    %v429 = vpop.f32.mrb[0].mxu0
    %v430 = vadd.f32 0.0, %v429
    %v431 = vpop.f32.mrb[0].mxu0
    %v432 = vpop.f32.mrb[0].mxu0
    %v433 = vadd.f32 0.0, %v432
    %v434 = vpop.f32.mrb[0].mxu0
    %435 = vmatprep.mubr.bf16.mxu0 %v334
    %436 = vmatmul.mubr.bf16.gmra.mrb[0].mxu0 %v333
    %v437 = vpop.f32.mrb[0].mxu0
    %v438 = vadd.f32 0.0, %v437
    %v439 = vpop.f32.mrb[0].mxu0
    %v440 = vpop.f32.mrb[0].mxu0
    %v441 = vadd.f32 0.0, %v440
    %v442 = vpop.f32.mrb[0].mxu0
    %443 = vmatprep.mubr.bf16.mxu0 %v336
    %444 = vmatmul.mubr.bf16.gmra.mrb[0].mxu0 %v335
    %v445 = vpop.f32.mrb[0].mxu0
    %v446 = vadd.f32 0.0, %v445
    %v447 = vpop.f32.mrb[0].mxu0
    %v448 = vpop.f32.mrb[0].mxu0
    %v449 = vadd.f32 0.0, %v448
    %v450 = vpop.f32.mrb[0].mxu0
    %451 = vmatprep.mubr.bf16.mxu0 %v338
    %452 = vmatmul.mubr.bf16.gmra.mrb[0].mxu0 %v337
    %v453 = vpop.f32.mrb[0].mxu0
    %v454 = vadd.f32 0.0, %v453
    %v455 = vpop.f32.mrb[0].mxu0
    %v456 = vpop.f32.mrb[0].mxu0
    %v457 = vadd.f32 0.0, %v456
    %v458 = vpop.f32.mrb[0].mxu0
    %459 = vmatprep.mubr.bf16.mxu0 %v340
    %460 = vmatmul.mubr.bf16.gmra.mrb[0].mxu0 %v339
    %v461 = vpop.f32.mrb[0].mxu0
    %v462 = vadd.f32 0.0, %v461
    %v463 = vpop.f32.mrb[0].mxu0
    %v464 = vpop.f32.mrb[0].mxu0
    %v465 = vadd.f32 0.0, %v464
    %v466 = vpop.f32.mrb[0].mxu0
    %467 = vmatprep.mubr.bf16.mxu0 %v342
    %468 = vmatmul.mubr.bf16.gmra.mrb[0].mxu0 %v341
    %v469 = vpop.f32.mrb[0].mxu0
    %v470 = vadd.f32 0.0, %v469
    %v471 = vpop.f32.mrb[0].mxu0
    %v472 = vpop.f32.mrb[0].mxu0
    %v473 = vadd.f32 0.0, %v472
    %v474 = vpop.f32.mrb[0].mxu0
    %475 = vmatprep.mubr.bf16.mxu0 %v344
    %476 = vmatmul.mubr.bf16.gmra.mrb[0].mxu0 %v343
    %v477 = vpop.f32.mrb[0].mxu0
    %v478 = vadd.f32 0.0, %v477
    %v479 = vpop.f32.mrb[0].mxu0
    %v480 = vpop.f32.mrb[0].mxu0
    %v481 = vadd.f32 0.0, %v480
    %v482 = vpop.f32.mrb[0].mxu0
    %483 = vmatprep.mubr.bf16.mxu0 %v346
    %484 = vmatmul.mubr.bf16.gmra.mrb[0].mxu0 %v345
    %v485 = vpop.f32.mrb[0].mxu0
    %v486 = vadd.f32 0.0, %v485
    %v487 = vpop.f32.mrb[0].mxu0
    %v488 = vpop.f32.mrb[0].mxu0
    %v489 = vadd.f32 0.0, %v488
    %v490 = vpop.f32.mrb[0].mxu0
    %491 = vmatprep.mubr.bf16.mxu0 %v348
    %492 = vmatmul.mubr.bf16.gmra.mrb[0].mxu0 %v347
    %v493 = vpop.f32.mrb[0].mxu0
    %v494 = vadd.f32 0.0, %v493
    %v495 = vpop.f32.mrb[0].mxu0
    %v496 = vpop.f32.mrb[0].mxu0
    %v497 = vadd.f32 0.0, %v496
    %v498 = vpop.f32.mrb[0].mxu0
    %499 = vmatprep.mubr.bf16.mxu0 %v350
    %500 = vmatmul.mubr.bf16.gmra.mrb[0].mxu0 %v349
    %v501 = vpop.f32.mrb[0].mxu0
    %v502 = vadd.f32 0.0, %v501
    %v503 = vpop.f32.mrb[0].mxu0
    %v504 = vpop.f32.mrb[0].mxu0
    %v505 = vadd.f32 0.0, %v504
    %v506 = vpop.f32.mrb[0].mxu0
    %507 = vmatprep.mubr.bf16.mxu0 %v352
    %508 = vmatmul.mubr.bf16.gmra.mrb[0].mxu0 %v351
    %v509 = vpop.f32.mrb[0].mxu0
    %v510 = vadd.f32 0.0, %v509
    %v511 = vpop.f32.mrb[0].mxu0
    %v512 = vpop.f32.mrb[0].mxu0
    %v513 = vadd.f32 0.0, %v512
    %v514 = vpop.f32.mrb[0].mxu0
    %515 = vmatprep.mubr.bf16.mxu0 %v354
    %516 = vmatmul.mubr.bf16.gmra.mrb[0].mxu0 %v353
    %v517 = vpop.f32.mrb[0].mxu0
    %v518 = vadd.f32 0.0, %v517
    %v519 = vpop.f32.mrb[0].mxu0
    %v520 = vpop.f32.mrb[0].mxu0
    %v521 = vadd.f32 0.0, %v520
    %v522 = vpop.f32.mrb[0].mxu0
    %523 = vmatprep.mubr.bf16.mxu0 %v356
    %524 = vmatmul.mubr.bf16.gmra.mrb[0].mxu0 %v355
    %v525 = vpop.f32.mrb[0].mxu0
    %v526 = vadd.f32 0.0, %v525
    %v527 = vpop.f32.mrb[0].mxu0
    %v528 = vpop.f32.mrb[0].mxu0
    %v529 = vadd.f32 0.0, %v528
    %v530 = vpop.f32.mrb[0].mxu0
    %531 = vmatprep.mubr.bf16.mxu0 %v358
    %532 = vmatmul.mubr.bf16.gmra.mrb[0].mxu0 %v357
    %v533 = vpop.f32.mrb[0].mxu0
    %v534 = vadd.f32 0.0, %v533
    %v535 = vpop.f32.mrb[0].mxu0
    %v536 = vpop.f32.mrb[0].mxu0
    %v537 = vadd.f32 0.0, %v536
    %v538 = vpop.f32.mrb[0].mxu0
    %539 = vmatprep.mubr.bf16.mxu0 %v360
    %540 = vmatmul.mubr.bf16.gmra.mrb[0].mxu0 %v359
    %v541 = vpop.f32.mrb[0].mxu0
    %v542 = vadd.f32 0.0, %v541
    %v543 = vpop.f32.mrb[0].mxu0
    %v544 = vpop.f32.mrb[0].mxu0
    %v545 = vadd.f32 0.0, %v544
    %v546 = vpop.f32.mrb[0].mxu0
    %547 = vmatprep.mubr.bf16.mxu0 %v362
    %548 = vmatmul.mubr.bf16.gmra.mrb[0].mxu0 %v361
    %v549 = vpop.f32.mrb[0].mxu0
    %v550 = vadd.f32 0.0, %v549
    %v551 = vpop.f32.mrb[0].mxu0
    %v552 = vpop.f32.mrb[0].mxu0
    %v553 = vadd.f32 0.0, %v552
    %v554 = vpop.f32.mrb[0].mxu0
    %555 = vdwg.mxu0
    %v556 = vpack.c.bf16 %v433, %v430
    %v557 = vpack.c.bf16 %v441, %v438
    %v558 = vpack.c.bf16 %v449, %v446
    %v559 = vpack.c.bf16 %v457, %v454
    %v560 = vpack.c.bf16 %v465, %v462
    %v561 = vpack.c.bf16 %v473, %v470
    %v562 = vpack.c.bf16 %v481, %v478
    %v563 = vpack.c.bf16 %v489, %v486
    %v564 = vpack.c.bf16 %v497, %v494
    %v565 = vpack.c.bf16 %v505, %v502
    %v566 = vpack.c.bf16 %v513, %v510
    %v567 = vpack.c.bf16 %v521, %v518
    %v568 = vpack.c.bf16 %v529, %v526
    %v569 = vpack.c.bf16 %v537, %v534
    %v570 = vpack.c.bf16 %v545, %v542
    %v571 = vpack.c.bf16 %v553, %v550
    %v572 = vld [vmem:[%s3] sm:$0xf]
    %v573 = vld [vmem:[%s3 + $0x4] sm:$0xf]
    %v574 = vld [vmem:[%s4] sm:$0x1]
    %v576 = vlaneseq
    %v577 = vshrl.u32 %v576, 7
    %v578 = vsub.s32 0, %v577
    %v579 = vrot.slane %v574, %v578
    %v583 = vunpack.c.l.b16 %v572
    %v584 = vunpack.c.l.b16 %v573
    %v585 = vpack.c.b16 %v584, %v583
    %vm587 = vcmask 130048
    %v589 = vsel %vm587, %v556, 0
    %v592 = vsel %vm587, %v557, 0
    %v595 = vsel %vm587, %v558, 0
    %v598 = vsel %vm587, %v559, 0
    %v601 = vsel %vm587, %v560, 0
    %v604 = vsel %vm587, %v561, 0
    %v607 = vsel %vm587, %v562, 0
    %v610 = vsel %vm587, %v563, 0
    %v613 = vsel %vm587, %v564, 0
    %v616 = vsel %vm587, %v565, 0
    %v619 = vsel %vm587, %v566, 0
    %v622 = vsel %vm587, %v567, 0
    %v625 = vsel %vm587, %v568, 0
    %v628 = vsel %vm587, %v569, 0
    %v631 = vsel %vm587, %v570, 0
    %v634 = vsel %vm587, %v571, 0
    %636 = vmatprep.subr.bf16.mxu0 0
    %637 = vmatpush1.bf16.msra.mxu0 %v585
    %638 = vmatprep.subr.bf16.mxu0 0
    %639 = vmatpush1.bf16.msra.mxu0 0
    %640 = vmatprep.subr.bf16.mxu0 0
    %641 = vmatpush1.bf16.msra.mxu0 0
    %642 = vmatprep.subr.bf16.mxu0 0
    %643 = vmatpush1.bf16.msra.mxu0 0
    %644 = vmatprep.subr.bf16.mxu0 0
    %645 = vmatpush1.bf16.msra.mxu0 0
    %646 = vmatprep.subr.bf16.mxu0 0
    %647 = vmatpush1.bf16.msra.mxu0 0
    %648 = vmatprep.subr.bf16.mxu0 0
    %649 = vmatpush1.bf16.msra.mxu0 0
    %650 = vmatprep.subr.bf16.mxu0 0
    %651 = vmatpush1.bf16.msra.mxu0 0
    %652 = vmatprep.subr.bf16.mxu0 0
    %653 = vmatpush1.bf16.msra.mxu0 0
    %654 = vmatprep.subr.bf16.mxu0 0
    %655 = vmatpush1.bf16.msra.mxu0 0
    %656 = vmatprep.subr.bf16.mxu0 0
    %657 = vmatpush1.bf16.msra.mxu0 0
    %658 = vmatprep.subr.bf16.mxu0 0
    %659 = vmatpush1.bf16.msra.mxu0 0
    %660 = vmatprep.subr.bf16.mxu0 0
    %661 = vmatpush1.bf16.msra.mxu0 0
    %662 = vmatprep.subr.bf16.mxu0 0
    %663 = vmatpush1.bf16.msra.mxu0 0
    %664 = vmatprep.subr.bf16.mxu0 0
    %665 = vmatpush1.bf16.msra.mxu0 0
    %666 = vmatprep.subr.bf16.mxu0 0
    %667 = vmatpush1.bf16.msra.mxu0 0
    %668 = vmatprep.mubr.bf16.mxu0 0
    %669 = vmatmul.mubr.bf16.gmra.mrb[0].mxu0 %v589
    %v670 = vpop.f32.mrb[0].mxu0
    %v671 = vadd.f32 %v579, %v670
    %v672 = vpop.f32.mrb[0].mxu0
    %v673 = vpop.f32.mrb[0].mxu0
    %v674 = vadd.f32 %v579, %v673
    %v675 = vpop.f32.mrb[0].mxu0
    %676 = vmatprep.mubr.bf16.mxu0 0
    %677 = vmatmul.mubr.bf16.gmra.mrb[0].mxu0 %v592
    %v678 = vpop.f32.mrb[0].mxu0
    %v679 = vadd.f32 %v579, %v678
    %v680 = vpop.f32.mrb[0].mxu0
    %v681 = vpop.f32.mrb[0].mxu0
    %v682 = vadd.f32 %v579, %v681
    %v683 = vpop.f32.mrb[0].mxu0
    %684 = vmatprep.mubr.bf16.mxu0 0
    %685 = vmatmul.mubr.bf16.gmra.mrb[0].mxu0 %v595
    %v686 = vpop.f32.mrb[0].mxu0
    %v687 = vadd.f32 %v579, %v686
    %v688 = vpop.f32.mrb[0].mxu0
    %v689 = vpop.f32.mrb[0].mxu0
    %v690 = vadd.f32 %v579, %v689
    %v691 = vpop.f32.mrb[0].mxu0
    %692 = vmatprep.mubr.bf16.mxu0 0
    %693 = vmatmul.mubr.bf16.gmra.mrb[0].mxu0 %v598
    %v694 = vpop.f32.mrb[0].mxu0
    %v695 = vadd.f32 %v579, %v694
    %v696 = vpop.f32.mrb[0].mxu0
    %v697 = vpop.f32.mrb[0].mxu0
    %v698 = vadd.f32 %v579, %v697
    %v699 = vpop.f32.mrb[0].mxu0
    %700 = vmatprep.mubr.bf16.mxu0 0
    %701 = vmatmul.mubr.bf16.gmra.mrb[0].mxu0 %v601
    %v702 = vpop.f32.mrb[0].mxu0
    %v703 = vadd.f32 %v579, %v702
    %v704 = vpop.f32.mrb[0].mxu0
    %v705 = vpop.f32.mrb[0].mxu0
    %v706 = vadd.f32 %v579, %v705
    %v707 = vpop.f32.mrb[0].mxu0
    %708 = vmatprep.mubr.bf16.mxu0 0
    %709 = vmatmul.mubr.bf16.gmra.mrb[0].mxu0 %v604
    %v710 = vpop.f32.mrb[0].mxu0
    %v711 = vadd.f32 %v579, %v710
    %v712 = vpop.f32.mrb[0].mxu0
    %v713 = vpop.f32.mrb[0].mxu0
    %v714 = vadd.f32 %v579, %v713
    %v715 = vpop.f32.mrb[0].mxu0
    %716 = vmatprep.mubr.bf16.mxu0 0
    %717 = vmatmul.mubr.bf16.gmra.mrb[0].mxu0 %v607
    %v718 = vpop.f32.mrb[0].mxu0
    %v719 = vadd.f32 %v579, %v718
    %v720 = vpop.f32.mrb[0].mxu0
    %v721 = vpop.f32.mrb[0].mxu0
    %v722 = vadd.f32 %v579, %v721
    %v723 = vpop.f32.mrb[0].mxu0
    %724 = vmatprep.mubr.bf16.mxu0 0
    %725 = vmatmul.mubr.bf16.gmra.mrb[0].mxu0 %v610
    %v726 = vpop.f32.mrb[0].mxu0
    %v727 = vadd.f32 %v579, %v726
    %v728 = vpop.f32.mrb[0].mxu0
    %v729 = vpop.f32.mrb[0].mxu0
    %v730 = vadd.f32 %v579, %v729
    %v731 = vpop.f32.mrb[0].mxu0
    %732 = vmatprep.mubr.bf16.mxu0 0
    %733 = vmatmul.mubr.bf16.gmra.mrb[0].mxu0 %v613
    %v734 = vpop.f32.mrb[0].mxu0
    %v735 = vadd.f32 %v579, %v734
    %v736 = vpop.f32.mrb[0].mxu0
    %v737 = vpop.f32.mrb[0].mxu0
    %v738 = vadd.f32 %v579, %v737
    %v739 = vpop.f32.mrb[0].mxu0
    %740 = vmatprep.mubr.bf16.mxu0 0
    %741 = vmatmul.mubr.bf16.gmra.mrb[0].mxu0 %v616
    %v742 = vpop.f32.mrb[0].mxu0
    %v743 = vadd.f32 %v579, %v742
    %v744 = vpop.f32.mrb[0].mxu0
    %v745 = vpop.f32.mrb[0].mxu0
    %v746 = vadd.f32 %v579, %v745
    %v747 = vpop.f32.mrb[0].mxu0
    %748 = vmatprep.mubr.bf16.mxu0 0
    %749 = vmatmul.mubr.bf16.gmra.mrb[0].mxu0 %v619
    %v750 = vpop.f32.mrb[0].mxu0
    %v751 = vadd.f32 %v579, %v750
    %v752 = vpop.f32.mrb[0].mxu0
    %v753 = vpop.f32.mrb[0].mxu0
    %v754 = vadd.f32 %v579, %v753
    %v755 = vpop.f32.mrb[0].mxu0
    %756 = vmatprep.mubr.bf16.mxu0 0
    %757 = vmatmul.mubr.bf16.gmra.mrb[0].mxu0 %v622
    %v758 = vpop.f32.mrb[0].mxu0
    %v759 = vadd.f32 %v579, %v758
    %v760 = vpop.f32.mrb[0].mxu0
    %v761 = vpop.f32.mrb[0].mxu0
    %v762 = vadd.f32 %v579, %v761
    %v763 = vpop.f32.mrb[0].mxu0
    %764 = vmatprep.mubr.bf16.mxu0 0
    %765 = vmatmul.mubr.bf16.gmra.mrb[0].mxu0 %v625
    %v766 = vpop.f32.mrb[0].mxu0
    %v767 = vadd.f32 %v579, %v766
    %v768 = vpop.f32.mrb[0].mxu0
    %v769 = vpop.f32.mrb[0].mxu0
    %v770 = vadd.f32 %v579, %v769
    %v771 = vpop.f32.mrb[0].mxu0
    %772 = vmatprep.mubr.bf16.mxu0 0
    %773 = vmatmul.mubr.bf16.gmra.mrb[0].mxu0 %v628
    %v774 = vpop.f32.mrb[0].mxu0
    %v775 = vadd.f32 %v579, %v774
    %v776 = vpop.f32.mrb[0].mxu0
    %v777 = vpop.f32.mrb[0].mxu0
    %v778 = vadd.f32 %v579, %v777
    %v779 = vpop.f32.mrb[0].mxu0
    %780 = vmatprep.mubr.bf16.mxu0 0
    %781 = vmatmul.mubr.bf16.gmra.mrb[0].mxu0 %v631
    %v782 = vpop.f32.mrb[0].mxu0
    %v783 = vadd.f32 %v579, %v782
    %v784 = vpop.f32.mrb[0].mxu0
    %v785 = vpop.f32.mrb[0].mxu0
    %v786 = vadd.f32 %v579, %v785
    %v787 = vpop.f32.mrb[0].mxu0
    %788 = vmatprep.mubr.bf16.mxu0 0
    %789 = vmatmul.mubr.bf16.gmra.mrb[0].mxu0 %v634
    %v790 = vpop.f32.mrb[0].mxu0
    %v791 = vadd.f32 %v579, %v790
    %v792 = vpop.f32.mrb[0].mxu0
    %v793 = vpop.f32.mrb[0].mxu0
    %v794 = vadd.f32 %v579, %v793
    %v795 = vpop.f32.mrb[0].mxu0
    %796 = vdwg.mxu0
    %v797 = vmax.f32 %v671, 0.0
    %v798 = vmax.f32 %v674, 0.0
    %v799 = vmax.f32 %v679, 0.0
    %v800 = vmax.f32 %v682, 0.0
    %v801 = vmax.f32 %v687, 0.0
    %v802 = vmax.f32 %v690, 0.0
    %v803 = vmax.f32 %v695, 0.0
    %v804 = vmax.f32 %v698, 0.0
    %v805 = vmax.f32 %v703, 0.0
    %v806 = vmax.f32 %v706, 0.0
    %v807 = vmax.f32 %v711, 0.0
    %v808 = vmax.f32 %v714, 0.0
    %v809 = vmax.f32 %v719, 0.0
    %v810 = vmax.f32 %v722, 0.0
    %v811 = vmax.f32 %v727, 0.0
    %v812 = vmax.f32 %v730, 0.0
    %v813 = vmax.f32 %v735, 0.0
    %v814 = vmax.f32 %v738, 0.0
    %v815 = vmax.f32 %v743, 0.0
    %v816 = vmax.f32 %v746, 0.0
    %v817 = vmax.f32 %v751, 0.0
    %v818 = vmax.f32 %v754, 0.0
    %v819 = vmax.f32 %v759, 0.0
    %v820 = vmax.f32 %v762, 0.0
    %v821 = vmax.f32 %v767, 0.0
    %v822 = vmax.f32 %v770, 0.0
    %v823 = vmax.f32 %v775, 0.0
    %v824 = vmax.f32 %v778, 0.0
    %v825 = vmax.f32 %v783, 0.0
    %v826 = vmax.f32 %v786, 0.0
    %v827 = vmax.f32 %v791, 0.0
    %v828 = vmax.f32 %v794, 0.0
    %v829 = vpack.c.bf16 %v798, %v797
    %v830 = vpack.c.bf16 %v800, %v799
    %v831 = vpack.c.bf16 %v802, %v801
    %v832 = vpack.c.bf16 %v804, %v803
    %v833 = vpack.c.bf16 %v806, %v805
    %v834 = vpack.c.bf16 %v808, %v807
    %v835 = vpack.c.bf16 %v810, %v809
    %v836 = vpack.c.bf16 %v812, %v811
    %v837 = vpack.c.bf16 %v814, %v813
    %v838 = vpack.c.bf16 %v816, %v815
    %v839 = vpack.c.bf16 %v818, %v817
    %v840 = vpack.c.bf16 %v820, %v819
    %v841 = vpack.c.bf16 %v822, %v821
    %v842 = vpack.c.bf16 %v824, %v823
    %v843 = vpack.c.bf16 %v826, %v825
    %v844 = vpack.c.bf16 %v828, %v827
    %v845 = vld [vmem:[%s5] sm:$0xf]
    %v846 = vld [vmem:[%s5 + $0x4] sm:$0xf]
    %v847 = vld [vmem:[%s5 + $0x8] sm:$0xf]
    %v848 = vld [vmem:[%s5 + $0xc] sm:$0xf]
    %v849 = vld [vmem:[%s5 + $0x10] sm:$0xf]
    %v850 = vld [vmem:[%s5 + $0x14] sm:$0xf]
    %v851 = vld [vmem:[%s5 + $0x18] sm:$0xf]
    %v852 = vld [vmem:[%s5 + $0x1c] sm:$0xf]
    %v853 = vld [vmem:[%s5 + $0x20] sm:$0xf]
    %v854 = vld [vmem:[%s5 + $0x24] sm:$0xf]
    %v855 = vld [vmem:[%s5 + $0x28] sm:$0xf]
    %v856 = vld [vmem:[%s5 + $0x2c] sm:$0xf]
    %v857 = vld [vmem:[%s5 + $0x30] sm:$0xf]
    %v858 = vld [vmem:[%s5 + $0x34] sm:$0xf]
    %v859 = vld [vmem:[%s5 + $0x38] sm:$0xf]
    %v860 = vld [vmem:[%s5 + $0x3c] sm:$0xf]
    %v861 = vld [vmem:[%s6] sm:$0x1]
    %v863 = vlaneseq
    %v864 = vshrl.u32 %v863, 7
    %v865 = vsub.s32 0, %v864
    %v866 = vrot.slane %v861, %v865
    %v884 = vunpack.c.l.b16 %v845
    %v885 = vunpack.c.l.b16 %v846
    %v886 = vunpack.c.l.b16 %v847
    %v887 = vunpack.c.l.b16 %v848
    %v888 = vunpack.c.l.b16 %v849
    %v889 = vunpack.c.l.b16 %v850
    %v890 = vunpack.c.l.b16 %v851
    %v891 = vunpack.c.l.b16 %v852
    %v892 = vunpack.c.l.b16 %v853
    %v893 = vunpack.c.l.b16 %v854
    %v894 = vunpack.c.l.b16 %v855
    %v895 = vunpack.c.l.b16 %v856
    %v896 = vunpack.c.l.b16 %v857
    %v897 = vunpack.c.l.b16 %v858
    %v898 = vunpack.c.l.b16 %v859
    %v899 = vunpack.c.l.b16 %v860
    %v900 = vpack.c.b16 %v885, %v884
    %v901 = vpack.c.b16 %v887, %v886
    %v902 = vpack.c.b16 %v889, %v888
    %v903 = vpack.c.b16 %v891, %v890
    %v904 = vpack.c.b16 %v893, %v892
    %v905 = vpack.c.b16 %v895, %v894
    %v906 = vpack.c.b16 %v897, %v896
    %v907 = vpack.c.b16 %v899, %v898
    %916 = vmatprep.subr.bf16.mxu0 0
    %917 = vmatpush1.bf16.msra.mxu0 %v900
    %918 = vmatprep.subr.bf16.mxu0 0
    %919 = vmatpush1.bf16.msra.mxu0 %v901
    %920 = vmatprep.subr.bf16.mxu0 0
    %921 = vmatpush1.bf16.msra.mxu0 %v902
    %922 = vmatprep.subr.bf16.mxu0 0
    %923 = vmatpush1.bf16.msra.mxu0 %v903
    %924 = vmatprep.subr.bf16.mxu0 0
    %925 = vmatpush1.bf16.msra.mxu0 %v904
    %926 = vmatprep.subr.bf16.mxu0 0
    %927 = vmatpush1.bf16.msra.mxu0 %v905
    %928 = vmatprep.subr.bf16.mxu0 0
    %929 = vmatpush1.bf16.msra.mxu0 %v906
    %930 = vmatprep.subr.bf16.mxu0 0
    %931 = vmatpush1.bf16.msra.mxu0 %v907
    %932 = vmatprep.subr.bf16.mxu0 0
    %933 = vmatpush1.bf16.msra.mxu0 0
    %934 = vmatprep.subr.bf16.mxu0 0
    %935 = vmatpush1.bf16.msra.mxu0 0
    %936 = vmatprep.subr.bf16.mxu0 0
    %937 = vmatpush1.bf16.msra.mxu0 0
    %938 = vmatprep.subr.bf16.mxu0 0
    %939 = vmatpush1.bf16.msra.mxu0 0
    %940 = vmatprep.subr.bf16.mxu0 0
    %941 = vmatpush1.bf16.msra.mxu0 0
    %942 = vmatprep.subr.bf16.mxu0 0
    %943 = vmatpush1.bf16.msra.mxu0 0
    %944 = vmatprep.subr.bf16.mxu0 0
    %945 = vmatpush1.bf16.msra.mxu0 0
    %946 = vmatprep.subr.bf16.mxu0 0
    %947 = vmatpush1.bf16.msra.mxu0 0
    %948 = vmatprep.mubr.bf16.mxu0 0
    %949 = vmatmul.mubr.bf16.gmra.mrb[0].mxu0 %v829
    %v950 = vpop.f32.mrb[0].mxu0
    %v951 = vadd.f32 %v866, %v950
    %v952 = vpop.f32.mrb[0].mxu0
    %v953 = vpop.f32.mrb[0].mxu0
    %v954 = vadd.f32 %v866, %v953
    %v955 = vpop.f32.mrb[0].mxu0
    %956 = vmatprep.mubr.bf16.mxu0 0
    %957 = vmatmul.mubr.bf16.gmra.mrb[0].mxu0 %v830
    %v958 = vpop.f32.mrb[0].mxu0
    %v959 = vadd.f32 %v866, %v958
    %v960 = vpop.f32.mrb[0].mxu0
    %v961 = vpop.f32.mrb[0].mxu0
    %v962 = vadd.f32 %v866, %v961
    %v963 = vpop.f32.mrb[0].mxu0
    %964 = vmatprep.mubr.bf16.mxu0 0
    %965 = vmatmul.mubr.bf16.gmra.mrb[0].mxu0 %v831
    %v966 = vpop.f32.mrb[0].mxu0
    %v967 = vadd.f32 %v866, %v966
    %v968 = vpop.f32.mrb[0].mxu0
    %v969 = vpop.f32.mrb[0].mxu0
    %v970 = vadd.f32 %v866, %v969
    %v971 = vpop.f32.mrb[0].mxu0
    %972 = vmatprep.mubr.bf16.mxu0 0
    %973 = vmatmul.mubr.bf16.gmra.mrb[0].mxu0 %v832
    %v974 = vpop.f32.mrb[0].mxu0
    %v975 = vadd.f32 %v866, %v974
    %v976 = vpop.f32.mrb[0].mxu0
    %v977 = vpop.f32.mrb[0].mxu0
    %v978 = vadd.f32 %v866, %v977
    %v979 = vpop.f32.mrb[0].mxu0
    %980 = vmatprep.mubr.bf16.mxu0 0
    %981 = vmatmul.mubr.bf16.gmra.mrb[0].mxu0 %v833
    %v982 = vpop.f32.mrb[0].mxu0
    %v983 = vadd.f32 %v866, %v982
    %v984 = vpop.f32.mrb[0].mxu0
    %v985 = vpop.f32.mrb[0].mxu0
    %v986 = vadd.f32 %v866, %v985
    %v987 = vpop.f32.mrb[0].mxu0
    %988 = vmatprep.mubr.bf16.mxu0 0
    %989 = vmatmul.mubr.bf16.gmra.mrb[0].mxu0 %v834
    %v990 = vpop.f32.mrb[0].mxu0
    %v991 = vadd.f32 %v866, %v990
    %v992 = vpop.f32.mrb[0].mxu0
    %v993 = vpop.f32.mrb[0].mxu0
    %v994 = vadd.f32 %v866, %v993
    %v995 = vpop.f32.mrb[0].mxu0
    %996 = vmatprep.mubr.bf16.mxu0 0
    %997 = vmatmul.mubr.bf16.gmra.mrb[0].mxu0 %v835
    %v998 = vpop.f32.mrb[0].mxu0
    %v999 = vadd.f32 %v866, %v998
    %v1000 = vpop.f32.mrb[0].mxu0
    %v1001 = vpop.f32.mrb[0].mxu0
    %v1002 = vadd.f32 %v866, %v1001
    %v1003 = vpop.f32.mrb[0].mxu0
    %1004 = vmatprep.mubr.bf16.mxu0 0
    %1005 = vmatmul.mubr.bf16.gmra.mrb[0].mxu0 %v836
    %v1006 = vpop.f32.mrb[0].mxu0
    %v1007 = vadd.f32 %v866, %v1006
    %v1008 = vpop.f32.mrb[0].mxu0
    %v1009 = vpop.f32.mrb[0].mxu0
    %v1010 = vadd.f32 %v866, %v1009
    %v1011 = vpop.f32.mrb[0].mxu0
    %1012 = vmatprep.mubr.bf16.mxu0 0
    %1013 = vmatmul.mubr.bf16.gmra.mrb[0].mxu0 %v837
    %v1014 = vpop.f32.mrb[0].mxu0
    %v1015 = vadd.f32 %v866, %v1014
    %v1016 = vpop.f32.mrb[0].mxu0
    %v1017 = vpop.f32.mrb[0].mxu0
    %v1018 = vadd.f32 %v866, %v1017
    %v1019 = vpop.f32.mrb[0].mxu0
    %1020 = vmatprep.mubr.bf16.mxu0 0
    %1021 = vmatmul.mubr.bf16.gmra.mrb[0].mxu0 %v838
    %v1022 = vpop.f32.mrb[0].mxu0
    %v1023 = vadd.f32 %v866, %v1022
    %v1024 = vpop.f32.mrb[0].mxu0
    %v1025 = vpop.f32.mrb[0].mxu0
    %v1026 = vadd.f32 %v866, %v1025
    %v1027 = vpop.f32.mrb[0].mxu0
    %1028 = vmatprep.mubr.bf16.mxu0 0
    %1029 = vmatmul.mubr.bf16.gmra.mrb[0].mxu0 %v839
    %v1030 = vpop.f32.mrb[0].mxu0
    %v1031 = vadd.f32 %v866, %v1030
    %v1032 = vpop.f32.mrb[0].mxu0
    %v1033 = vpop.f32.mrb[0].mxu0
    %v1034 = vadd.f32 %v866, %v1033
    %v1035 = vpop.f32.mrb[0].mxu0
    %1036 = vmatprep.mubr.bf16.mxu0 0
    %1037 = vmatmul.mubr.bf16.gmra.mrb[0].mxu0 %v840
    %v1038 = vpop.f32.mrb[0].mxu0
    %v1039 = vadd.f32 %v866, %v1038
    %v1040 = vpop.f32.mrb[0].mxu0
    %v1041 = vpop.f32.mrb[0].mxu0
    %v1042 = vadd.f32 %v866, %v1041
    %v1043 = vpop.f32.mrb[0].mxu0
    %1044 = vmatprep.mubr.bf16.mxu0 0
    %1045 = vmatmul.mubr.bf16.gmra.mrb[0].mxu0 %v841
    %v1046 = vpop.f32.mrb[0].mxu0
    %v1047 = vadd.f32 %v866, %v1046
    %v1048 = vpop.f32.mrb[0].mxu0
    %v1049 = vpop.f32.mrb[0].mxu0
    %v1050 = vadd.f32 %v866, %v1049
    %v1051 = vpop.f32.mrb[0].mxu0
    %1052 = vmatprep.mubr.bf16.mxu0 0
    %1053 = vmatmul.mubr.bf16.gmra.mrb[0].mxu0 %v842
    %v1054 = vpop.f32.mrb[0].mxu0
    %v1055 = vadd.f32 %v866, %v1054
    %v1056 = vpop.f32.mrb[0].mxu0
    %v1057 = vpop.f32.mrb[0].mxu0
    %v1058 = vadd.f32 %v866, %v1057
    %v1059 = vpop.f32.mrb[0].mxu0
    %1060 = vmatprep.mubr.bf16.mxu0 0
    %1061 = vmatmul.mubr.bf16.gmra.mrb[0].mxu0 %v843
    %v1062 = vpop.f32.mrb[0].mxu0
    %v1063 = vadd.f32 %v866, %v1062
    %v1064 = vpop.f32.mrb[0].mxu0
    %v1065 = vpop.f32.mrb[0].mxu0
    %v1066 = vadd.f32 %v866, %v1065
    %v1067 = vpop.f32.mrb[0].mxu0
    %1068 = vmatprep.mubr.bf16.mxu0 0
    %1069 = vmatmul.mubr.bf16.gmra.mrb[0].mxu0 %v844
    %v1070 = vpop.f32.mrb[0].mxu0
    %v1071 = vadd.f32 %v866, %v1070
    %v1072 = vpop.f32.mrb[0].mxu0
    %v1073 = vpop.f32.mrb[0].mxu0
    %v1074 = vadd.f32 %v866, %v1073
    %v1075 = vpop.f32.mrb[0].mxu0
    %1076 = vdwg.mxu0
    %v1077 = vmul.f32 %v951, %v951
    %v1078 = vmul.f32 %v954, %v954
    %v1079 = vmul.f32 %v959, %v959
    %v1080 = vmul.f32 %v962, %v962
    %v1081 = vmul.f32 %v967, %v967
    %v1082 = vmul.f32 %v970, %v970
    %v1083 = vmul.f32 %v975, %v975
    %v1084 = vmul.f32 %v978, %v978
    %v1085 = vmul.f32 %v983, %v983
    %v1086 = vmul.f32 %v986, %v986
    %v1087 = vmul.f32 %v991, %v991
    %v1088 = vmul.f32 %v994, %v994
    %v1089 = vmul.f32 %v999, %v999
    %v1090 = vmul.f32 %v1002, %v1002
    %v1091 = vmul.f32 %v1007, %v1007
    %v1092 = vmul.f32 %v1010, %v1010
    %v1093 = vmul.f32 %v1015, %v1015
    %v1094 = vmul.f32 %v1018, %v1018
    %v1095 = vmul.f32 %v1023, %v1023
    %v1096 = vmul.f32 %v1026, %v1026
    %v1097 = vmul.f32 %v1031, %v1031
    %v1098 = vmul.f32 %v1034, %v1034
    %v1099 = vmul.f32 %v1039, %v1039
    %v1100 = vmul.f32 %v1042, %v1042
    %v1101 = vmul.f32 %v1047, %v1047
    %v1102 = vmul.f32 %v1050, %v1050
    %v1103 = vmul.f32 %v1055, %v1055
    %v1104 = vmul.f32 %v1058, %v1058
    %v1105 = vmul.f32 %v1063, %v1063
    %v1106 = vmul.f32 %v1066, %v1066
    %v1107 = vmul.f32 %v1071, %v1071
    %v1108 = vmul.f32 %v1074, %v1074
    %1109 = vadd.xlane.f32.xlu0 %v1077
    %v1110 = vpop.xlane.xlu0 %1109
    %1111 = vadd.xlane.f32.xlu0 %v1078
    %v1112 = vpop.xlane.xlu0 %1111
    %1113 = vadd.xlane.f32.xlu0 %v1079
    %v1114 = vpop.xlane.xlu0 %1113
    %1115 = vadd.xlane.f32.xlu0 %v1080
    %v1116 = vpop.xlane.xlu0 %1115
    %1117 = vadd.xlane.f32.xlu0 %v1081
    %v1118 = vpop.xlane.xlu0 %1117
    %1119 = vadd.xlane.f32.xlu0 %v1082
    %v1120 = vpop.xlane.xlu0 %1119
    %1121 = vadd.xlane.f32.xlu0 %v1083
    %v1122 = vpop.xlane.xlu0 %1121
    %1123 = vadd.xlane.f32.xlu0 %v1084
    %v1124 = vpop.xlane.xlu0 %1123
    %1125 = vadd.xlane.f32.xlu0 %v1085
    %v1126 = vpop.xlane.xlu0 %1125
    %1127 = vadd.xlane.f32.xlu0 %v1086
    %v1128 = vpop.xlane.xlu0 %1127
    %1129 = vadd.xlane.f32.xlu0 %v1087
    %v1130 = vpop.xlane.xlu0 %1129
    %1131 = vadd.xlane.f32.xlu0 %v1088
    %v1132 = vpop.xlane.xlu0 %1131
    %1133 = vadd.xlane.f32.xlu0 %v1089
    %v1134 = vpop.xlane.xlu0 %1133
    %1135 = vadd.xlane.f32.xlu0 %v1090
    %v1136 = vpop.xlane.xlu0 %1135
    %1137 = vadd.xlane.f32.xlu0 %v1091
    %v1138 = vpop.xlane.xlu0 %1137
    %1139 = vadd.xlane.f32.xlu0 %v1092
    %v1140 = vpop.xlane.xlu0 %1139
    %1141 = vadd.xlane.f32.xlu0 %v1093
    %v1142 = vpop.xlane.xlu0 %1141
    %1143 = vadd.xlane.f32.xlu0 %v1094
    %v1144 = vpop.xlane.xlu0 %1143
    %1145 = vadd.xlane.f32.xlu0 %v1095
    %v1146 = vpop.xlane.xlu0 %1145
    %1147 = vadd.xlane.f32.xlu0 %v1096
    %v1148 = vpop.xlane.xlu0 %1147
    %1149 = vadd.xlane.f32.xlu0 %v1097
    %v1150 = vpop.xlane.xlu0 %1149
    %1151 = vadd.xlane.f32.xlu0 %v1098
    %v1152 = vpop.xlane.xlu0 %1151
    %1153 = vadd.xlane.f32.xlu0 %v1099
    %v1154 = vpop.xlane.xlu0 %1153
    %1155 = vadd.xlane.f32.xlu0 %v1100
    %v1156 = vpop.xlane.xlu0 %1155
    %1157 = vadd.xlane.f32.xlu0 %v1101
    %v1158 = vpop.xlane.xlu0 %1157
    %1159 = vadd.xlane.f32.xlu0 %v1102
    %v1160 = vpop.xlane.xlu0 %1159
    %1161 = vadd.xlane.f32.xlu0 %v1103
    %v1162 = vpop.xlane.xlu0 %1161
    %1163 = vadd.xlane.f32.xlu0 %v1104
    %v1164 = vpop.xlane.xlu0 %1163
    %1165 = vadd.xlane.f32.xlu0 %v1105
    %v1166 = vpop.xlane.xlu0 %1165
    %1167 = vadd.xlane.f32.xlu0 %v1106
    %v1168 = vpop.xlane.xlu0 %1167
    %1169 = vadd.xlane.f32.xlu0 %v1107
    %v1170 = vpop.xlane.xlu0 %1169
    %1171 = vadd.xlane.f32.xlu0 %v1108
    %v1172 = vpop.xlane.xlu0 %1171
    %v1173 = vmax.f32 %v1110, 1e-24
    %v1174 = vmax.f32 %v1112, 1e-24
    %v1175 = vmax.f32 %v1114, 1e-24
    %v1176 = vmax.f32 %v1116, 1e-24
    %v1177 = vmax.f32 %v1118, 1e-24
    %v1178 = vmax.f32 %v1120, 1e-24
    %v1179 = vmax.f32 %v1122, 1e-24
    %v1180 = vmax.f32 %v1124, 1e-24
    %v1181 = vmax.f32 %v1126, 1e-24
    %v1182 = vmax.f32 %v1128, 1e-24
    %v1183 = vmax.f32 %v1130, 1e-24
    %v1184 = vmax.f32 %v1132, 1e-24
    %v1185 = vmax.f32 %v1134, 1e-24
    %v1186 = vmax.f32 %v1136, 1e-24
    %v1187 = vmax.f32 %v1138, 1e-24
    %v1188 = vmax.f32 %v1140, 1e-24
    %v1189 = vmax.f32 %v1142, 1e-24
    %v1190 = vmax.f32 %v1144, 1e-24
    %v1191 = vmax.f32 %v1146, 1e-24
    %v1192 = vmax.f32 %v1148, 1e-24
    %v1193 = vmax.f32 %v1150, 1e-24
    %v1194 = vmax.f32 %v1152, 1e-24
    %v1195 = vmax.f32 %v1154, 1e-24
    %v1196 = vmax.f32 %v1156, 1e-24
    %v1197 = vmax.f32 %v1158, 1e-24
    %v1198 = vmax.f32 %v1160, 1e-24
    %v1199 = vmax.f32 %v1162, 1e-24
    %v1200 = vmax.f32 %v1164, 1e-24
    %v1201 = vmax.f32 %v1166, 1e-24
    %v1202 = vmax.f32 %v1168, 1e-24
    %v1203 = vmax.f32 %v1170, 1e-24
    %v1204 = vmax.f32 %v1172, 1e-24
    %v1205 = vrsqrt.pop %v1173
    %v1206 = vrsqrt.pop %v1174
    %v1207 = vrsqrt.pop %v1175
    %v1208 = vrsqrt.pop %v1176
    %v1209 = vrsqrt.pop %v1177
    %v1210 = vrsqrt.pop %v1178
    %v1211 = vrsqrt.pop %v1179
    %v1212 = vrsqrt.pop %v1180
    %v1213 = vrsqrt.pop %v1181
    %v1214 = vrsqrt.pop %v1182
    %v1215 = vrsqrt.pop %v1183
    %v1216 = vrsqrt.pop %v1184
    %v1217 = vrsqrt.pop %v1185
    %v1218 = vrsqrt.pop %v1186
    %v1219 = vrsqrt.pop %v1187
    %v1220 = vrsqrt.pop %v1188
    %v1221 = vrsqrt.pop %v1189
    %v1222 = vrsqrt.pop %v1190
    %v1223 = vrsqrt.pop %v1191
    %v1224 = vrsqrt.pop %v1192
    %v1225 = vrsqrt.pop %v1193
    %v1226 = vrsqrt.pop %v1194
    %v1227 = vrsqrt.pop %v1195
    %v1228 = vrsqrt.pop %v1196
    %v1229 = vrsqrt.pop %v1197
    %v1230 = vrsqrt.pop %v1198
    %v1231 = vrsqrt.pop %v1199
    %v1232 = vrsqrt.pop %v1200
    %v1233 = vrsqrt.pop %v1201
    %v1234 = vrsqrt.pop %v1202
    %v1235 = vrsqrt.pop %v1203
    %v1236 = vrsqrt.pop %v1204
    %v1237 = vmul.f32 %v951, %v1205
    %v1238 = vmul.f32 %v954, %v1206
    %v1239 = vmul.f32 %v959, %v1207
    %v1240 = vmul.f32 %v962, %v1208
    %v1241 = vmul.f32 %v967, %v1209
    %v1242 = vmul.f32 %v970, %v1210
    %v1243 = vmul.f32 %v975, %v1211
    %v1244 = vmul.f32 %v978, %v1212
    %v1245 = vmul.f32 %v983, %v1213
    %v1246 = vmul.f32 %v986, %v1214
    %v1247 = vmul.f32 %v991, %v1215
    %v1248 = vmul.f32 %v994, %v1216
    %v1249 = vmul.f32 %v999, %v1217
    %v1250 = vmul.f32 %v1002, %v1218
    %v1251 = vmul.f32 %v1007, %v1219
    %v1252 = vmul.f32 %v1010, %v1220
    %v1253 = vmul.f32 %v1015, %v1221
    %v1254 = vmul.f32 %v1018, %v1222
    %v1255 = vmul.f32 %v1023, %v1223
    %v1256 = vmul.f32 %v1026, %v1224
    %v1257 = vmul.f32 %v1031, %v1225
    %v1258 = vmul.f32 %v1034, %v1226
    %v1259 = vmul.f32 %v1039, %v1227
    %v1260 = vmul.f32 %v1042, %v1228
    %v1261 = vmul.f32 %v1047, %v1229
    %v1262 = vmul.f32 %v1050, %v1230
    %v1263 = vmul.f32 %v1055, %v1231
    %v1264 = vmul.f32 %v1058, %v1232
    %v1265 = vmul.f32 %v1063, %v1233
    %v1266 = vmul.f32 %v1066, %v1234
    %v1267 = vmul.f32 %v1071, %v1235
    %v1268 = vmul.f32 %v1074, %v1236
    %v1269 = vmax.f32 %v1237, 0.0
    %v1270 = vmax.f32 %v1238, 0.0
    %v1271 = vmax.f32 %v1239, 0.0
    %v1272 = vmax.f32 %v1240, 0.0
    %v1273 = vmax.f32 %v1241, 0.0
    %v1274 = vmax.f32 %v1242, 0.0
    %v1275 = vmax.f32 %v1243, 0.0
    %v1276 = vmax.f32 %v1244, 0.0
    %v1277 = vmax.f32 %v1245, 0.0
    %v1278 = vmax.f32 %v1246, 0.0
    %v1279 = vmax.f32 %v1247, 0.0
    %v1280 = vmax.f32 %v1248, 0.0
    %v1281 = vmax.f32 %v1249, 0.0
    %v1282 = vmax.f32 %v1250, 0.0
    %v1283 = vmax.f32 %v1251, 0.0
    %v1284 = vmax.f32 %v1252, 0.0
    %v1285 = vmax.f32 %v1253, 0.0
    %v1286 = vmax.f32 %v1254, 0.0
    %v1287 = vmax.f32 %v1255, 0.0
    %v1288 = vmax.f32 %v1256, 0.0
    %v1289 = vmax.f32 %v1257, 0.0
    %v1290 = vmax.f32 %v1258, 0.0
    %v1291 = vmax.f32 %v1259, 0.0
    %v1292 = vmax.f32 %v1260, 0.0
    %v1293 = vmax.f32 %v1261, 0.0
    %v1294 = vmax.f32 %v1262, 0.0
    %v1295 = vmax.f32 %v1263, 0.0
    %v1296 = vmax.f32 %v1264, 0.0
    %v1297 = vmax.f32 %v1265, 0.0
    %v1298 = vmax.f32 %v1266, 0.0
    %v1299 = vmax.f32 %v1267, 0.0
    %v1300 = vmax.f32 %v1268, 0.0
    %v1301 = vpack.c.bf16 %v1270, %v1269
    %v1302 = vpack.c.bf16 %v1272, %v1271
    %v1303 = vpack.c.bf16 %v1274, %v1273
    %v1304 = vpack.c.bf16 %v1276, %v1275
    %v1305 = vpack.c.bf16 %v1278, %v1277
    %v1306 = vpack.c.bf16 %v1280, %v1279
    %v1307 = vpack.c.bf16 %v1282, %v1281
    %v1308 = vpack.c.bf16 %v1284, %v1283
    %v1309 = vpack.c.bf16 %v1286, %v1285
    %v1310 = vpack.c.bf16 %v1288, %v1287
    %v1311 = vpack.c.bf16 %v1290, %v1289
    %v1312 = vpack.c.bf16 %v1292, %v1291
    %v1313 = vpack.c.bf16 %v1294, %v1293
    %v1314 = vpack.c.bf16 %v1296, %v1295
    %v1315 = vpack.c.bf16 %v1298, %v1297
    %v1316 = vpack.c.bf16 %v1300, %v1299
    %v1317 = vld [vmem:[#allocation2] sm:$0xff]
    %v1318 = vld [vmem:[#allocation2 + $0x8] sm:$0xff]
    %v1319 = vld [vmem:[#allocation2 + $0x10] sm:$0xff]
    %v1320 = vld [vmem:[#allocation2 + $0x18] sm:$0xff]
    %v1321 = vld [vmem:[#allocation2 + $0x20] sm:$0xff]
    %v1322 = vld [vmem:[#allocation2 + $0x28] sm:$0xff]
    %v1323 = vld [vmem:[#allocation2 + $0x30] sm:$0xff]
    %v1324 = vld [vmem:[#allocation2 + $0x38] sm:$0xff]
    %v1325 = vld [vmem:[#allocation2 + $0x40] sm:$0xff]
    %v1326 = vld [vmem:[#allocation2 + $0x48] sm:$0xff]
    %v1327 = vld [vmem:[#allocation2 + $0x50] sm:$0xff]
    %v1328 = vld [vmem:[#allocation2 + $0x58] sm:$0xff]
    %v1329 = vld [vmem:[#allocation2 + $0x60] sm:$0xff]
    %v1330 = vld [vmem:[#allocation2 + $0x68] sm:$0xff]
    %v1331 = vld [vmem:[#allocation2 + $0x70] sm:$0xff]
    %v1332 = vld [vmem:[#allocation2 + $0x78] sm:$0xff]
    %v1333 = vld [vmem:[#allocation2 + $0x80] sm:$0xff]
    %v1334 = vld [vmem:[#allocation2 + $0x88] sm:$0xff]
    %v1335 = vld [vmem:[#allocation2 + $0x90] sm:$0xff]
    %v1336 = vld [vmem:[#allocation2 + $0x98] sm:$0xff]
    %v1337 = vld [vmem:[#allocation2 + $0xa0] sm:$0xff]
    %v1338 = vld [vmem:[#allocation2 + $0xa8] sm:$0xff]
    %v1339 = vld [vmem:[#allocation2 + $0xb0] sm:$0xff]
    %v1340 = vld [vmem:[#allocation2 + $0xb8] sm:$0xff]
    %v1341 = vld [vmem:[#allocation2 + $0xc0] sm:$0xff]
    %v1342 = vld [vmem:[#allocation2 + $0xc8] sm:$0xff]
    %v1343 = vld [vmem:[#allocation2 + $0xd0] sm:$0xff]
    %v1344 = vld [vmem:[#allocation2 + $0xd8] sm:$0xff]
    %v1345 = vld [vmem:[#allocation2 + $0xe0] sm:$0xff]
    %v1346 = vld [vmem:[#allocation2 + $0xe8] sm:$0xff]
    %v1347 = vld [vmem:[#allocation2 + $0xf0] sm:$0xff]
    %v1348 = vld [vmem:[#allocation2 + $0xf8] sm:$0xff]
    %v1381 = vunpack.c.l.b16 %v1317
    %v1382 = vunpack.c.h.b16 %v1317
    %v1383 = vunpack.c.l.b16 %v1318
    %v1384 = vunpack.c.h.b16 %v1318
    %v1385 = vunpack.c.l.b16 %v1319
    %v1386 = vunpack.c.h.b16 %v1319
    %v1387 = vunpack.c.l.b16 %v1320
    %v1388 = vunpack.c.h.b16 %v1320
    %v1389 = vunpack.c.l.b16 %v1321
    %v1390 = vunpack.c.h.b16 %v1321
    %v1391 = vunpack.c.l.b16 %v1322
    %v1392 = vunpack.c.h.b16 %v1322
    %v1393 = vunpack.c.l.b16 %v1323
    %v1394 = vunpack.c.h.b16 %v1323
    %v1395 = vunpack.c.l.b16 %v1324
    %v1396 = vunpack.c.h.b16 %v1324
    %v1397 = vunpack.c.l.b16 %v1325
    %v1398 = vunpack.c.h.b16 %v1325
    %v1399 = vunpack.c.l.b16 %v1326
    %v1400 = vunpack.c.h.b16 %v1326
    %v1401 = vunpack.c.l.b16 %v1327
    %v1402 = vunpack.c.h.b16 %v1327
    %v1403 = vunpack.c.l.b16 %v1328
    %v1404 = vunpack.c.h.b16 %v1328
    %v1405 = vunpack.c.l.b16 %v1329
    %v1406 = vunpack.c.h.b16 %v1329
    %v1407 = vunpack.c.l.b16 %v1330
    %v1408 = vunpack.c.h.b16 %v1330
    %v1409 = vunpack.c.l.b16 %v1331
    %v1410 = vunpack.c.h.b16 %v1331
    %v1411 = vunpack.c.l.b16 %v1332
    %v1412 = vunpack.c.h.b16 %v1332
    %v1413 = vunpack.c.l.b16 %v1333
    %v1414 = vunpack.c.h.b16 %v1333
    %v1415 = vunpack.c.l.b16 %v1334
    %v1416 = vunpack.c.h.b16 %v1334
    %v1417 = vunpack.c.l.b16 %v1335
    %v1418 = vunpack.c.h.b16 %v1335
    %v1419 = vunpack.c.l.b16 %v1336
    %v1420 = vunpack.c.h.b16 %v1336
    %v1421 = vunpack.c.l.b16 %v1337
    %v1422 = vunpack.c.h.b16 %v1337
    %v1423 = vunpack.c.l.b16 %v1338
    %v1424 = vunpack.c.h.b16 %v1338
    %v1425 = vunpack.c.l.b16 %v1339
    %v1426 = vunpack.c.h.b16 %v1339
    %v1427 = vunpack.c.l.b16 %v1340
    %v1428 = vunpack.c.h.b16 %v1340
    %v1429 = vunpack.c.l.b16 %v1341
    %v1430 = vunpack.c.h.b16 %v1341
    %v1431 = vunpack.c.l.b16 %v1342
    %v1432 = vunpack.c.h.b16 %v1342
    %v1433 = vunpack.c.l.b16 %v1343
    %v1434 = vunpack.c.h.b16 %v1343
    %v1435 = vunpack.c.l.b16 %v1344
    %v1436 = vunpack.c.h.b16 %v1344
    %v1437 = vunpack.c.l.b16 %v1345
    %v1438 = vunpack.c.h.b16 %v1345
    %v1439 = vunpack.c.l.b16 %v1346
    %v1440 = vunpack.c.h.b16 %v1346
    %v1441 = vunpack.c.l.b16 %v1347
    %v1442 = vunpack.c.h.b16 %v1347
    %v1443 = vunpack.c.l.b16 %v1348
    %v1444 = vunpack.c.h.b16 %v1348
    %v1445 = vpack.c.b16 %v1383, %v1381
    %v1446 = vpack.c.b16 %v1384, %v1382
    %v1447 = vpack.c.b16 %v1387, %v1385
    %v1448 = vpack.c.b16 %v1388, %v1386
    %v1449 = vpack.c.b16 %v1391, %v1389
    %v1450 = vpack.c.b16 %v1392, %v1390
    %v1451 = vpack.c.b16 %v1395, %v1393
    %v1452 = vpack.c.b16 %v1396, %v1394
    %v1453 = vpack.c.b16 %v1399, %v1397
    %v1454 = vpack.c.b16 %v1400, %v1398
    %v1455 = vpack.c.b16 %v1403, %v1401
    %v1456 = vpack.c.b16 %v1404, %v1402
    %v1457 = vpack.c.b16 %v1407, %v1405
    %v1458 = vpack.c.b16 %v1408, %v1406
    %v1459 = vpack.c.b16 %v1411, %v1409
    %v1460 = vpack.c.b16 %v1412, %v1410
    %v1461 = vpack.c.b16 %v1415, %v1413
    %v1462 = vpack.c.b16 %v1416, %v1414
    %v1463 = vpack.c.b16 %v1419, %v1417
    %v1464 = vpack.c.b16 %v1420, %v1418
    %v1465 = vpack.c.b16 %v1423, %v1421
    %v1466 = vpack.c.b16 %v1424, %v1422
    %v1467 = vpack.c.b16 %v1427, %v1425
    %v1468 = vpack.c.b16 %v1428, %v1426
    %v1469 = vpack.c.b16 %v1431, %v1429
    %v1470 = vpack.c.b16 %v1432, %v1430
    %v1471 = vpack.c.b16 %v1435, %v1433
    %v1472 = vpack.c.b16 %v1436, %v1434
    %v1473 = vpack.c.b16 %v1439, %v1437
    %v1474 = vpack.c.b16 %v1440, %v1438
    %v1475 = vpack.c.b16 %v1443, %v1441
    %v1476 = vpack.c.b16 %v1444, %v1442
    %1509 = vmatprep.subr.bf16.mxu0 0
    %1510 = vmatpush1.bf16.msra.mxu0 %v1301
    %1511 = vmatprep.subr.bf16.mxu0 0
    %1512 = vmatpush1.bf16.msra.mxu0 %v1302
    %1513 = vmatprep.subr.bf16.mxu0 0
    %1514 = vmatpush1.bf16.msra.mxu0 %v1303
    %1515 = vmatprep.subr.bf16.mxu0 0
    %1516 = vmatpush1.bf16.msra.mxu0 %v1304
    %1517 = vmatprep.subr.bf16.mxu0 0
    %1518 = vmatpush1.bf16.msra.mxu0 %v1305
    %1519 = vmatprep.subr.bf16.mxu0 0
    %1520 = vmatpush1.bf16.msra.mxu0 %v1306
    %1521 = vmatprep.subr.bf16.mxu0 0
    %1522 = vmatpush1.bf16.msra.mxu0 %v1307
    %1523 = vmatprep.subr.bf16.mxu0 0
    %1524 = vmatpush1.bf16.msra.mxu0 %v1308
    %1525 = vmatprep.subr.bf16.mxu0 0
    %1526 = vmatpush1.bf16.msra.mxu0 %v1309
    %1527 = vmatprep.subr.bf16.mxu0 0
    %1528 = vmatpush1.bf16.msra.mxu0 %v1310
    %1529 = vmatprep.subr.bf16.mxu0 0
    %1530 = vmatpush1.bf16.msra.mxu0 %v1311
    %1531 = vmatprep.subr.bf16.mxu0 0
    %1532 = vmatpush1.bf16.msra.mxu0 %v1312
    %1533 = vmatprep.subr.bf16.mxu0 0
    %1534 = vmatpush1.bf16.msra.mxu0 %v1313
    %1535 = vmatprep.subr.bf16.mxu0 0
    %1536 = vmatpush1.bf16.msra.mxu0 %v1314
    %1537 = vmatprep.subr.bf16.mxu0 0
    %1538 = vmatpush1.bf16.msra.mxu0 %v1315
    %1539 = vmatprep.subr.bf16.mxu0 0
    %1540 = vmatpush1.bf16.msra.mxu0 %v1316
    %1541 = vmatprep.mubr.bf16.mxu0 %v1446
    %1542 = vmatmul.mubr.bf16.gmra.mrb[0].mxu0 %v1445
    %v1543 = vpop.f32.mrb[0].mxu0
    %v1544 = vadd.f32 0.0, %v1543
    %v1545 = vpop.f32.mrb[0].mxu0
    %v1546 = vpop.f32.mrb[0].mxu0
    %v1547 = vadd.f32 0.0, %v1546
    %v1548 = vpop.f32.mrb[0].mxu0
    %1549 = vmatprep.mubr.bf16.mxu0 %v1448
    %1550 = vmatmul.mubr.bf16.gmra.mrb[0].mxu0 %v1447
    %v1551 = vpop.f32.mrb[0].mxu0
    %v1552 = vadd.f32 0.0, %v1551
    %v1553 = vpop.f32.mrb[0].mxu0
    %v1554 = vpop.f32.mrb[0].mxu0
    %v1555 = vadd.f32 0.0, %v1554
    %v1556 = vpop.f32.mrb[0].mxu0
    %1557 = vmatprep.mubr.bf16.mxu0 %v1450
    %1558 = vmatmul.mubr.bf16.gmra.mrb[0].mxu0 %v1449
    %v1559 = vpop.f32.mrb[0].mxu0
    %v1560 = vadd.f32 0.0, %v1559
    %v1561 = vpop.f32.mrb[0].mxu0
    %v1562 = vpop.f32.mrb[0].mxu0
    %v1563 = vadd.f32 0.0, %v1562
    %v1564 = vpop.f32.mrb[0].mxu0
    %1565 = vmatprep.mubr.bf16.mxu0 %v1452
    %1566 = vmatmul.mubr.bf16.gmra.mrb[0].mxu0 %v1451
    %v1567 = vpop.f32.mrb[0].mxu0
    %v1568 = vadd.f32 0.0, %v1567
    %v1569 = vpop.f32.mrb[0].mxu0
    %v1570 = vpop.f32.mrb[0].mxu0
    %v1571 = vadd.f32 0.0, %v1570
    %v1572 = vpop.f32.mrb[0].mxu0
    %1573 = vmatprep.mubr.bf16.mxu0 %v1454
    %1574 = vmatmul.mubr.bf16.gmra.mrb[0].mxu0 %v1453
    %v1575 = vpop.f32.mrb[0].mxu0
    %v1576 = vadd.f32 0.0, %v1575
    %v1577 = vpop.f32.mrb[0].mxu0
    %v1578 = vpop.f32.mrb[0].mxu0
    %v1579 = vadd.f32 0.0, %v1578
    %v1580 = vpop.f32.mrb[0].mxu0
    %1581 = vmatprep.mubr.bf16.mxu0 %v1456
    %1582 = vmatmul.mubr.bf16.gmra.mrb[0].mxu0 %v1455
    %v1583 = vpop.f32.mrb[0].mxu0
    %v1584 = vadd.f32 0.0, %v1583
    %v1585 = vpop.f32.mrb[0].mxu0
    %v1586 = vpop.f32.mrb[0].mxu0
    %v1587 = vadd.f32 0.0, %v1586
    %v1588 = vpop.f32.mrb[0].mxu0
    %1589 = vmatprep.mubr.bf16.mxu0 %v1458
    %1590 = vmatmul.mubr.bf16.gmra.mrb[0].mxu0 %v1457
    %v1591 = vpop.f32.mrb[0].mxu0
    %v1592 = vadd.f32 0.0, %v1591
    %v1593 = vpop.f32.mrb[0].mxu0
    %v1594 = vpop.f32.mrb[0].mxu0
    %v1595 = vadd.f32 0.0, %v1594
    %v1596 = vpop.f32.mrb[0].mxu0
    %1597 = vmatprep.mubr.bf16.mxu0 %v1460
    %1598 = vmatmul.mubr.bf16.gmra.mrb[0].mxu0 %v1459
    %v1599 = vpop.f32.mrb[0].mxu0
    %v1600 = vadd.f32 0.0, %v1599
    %v1601 = vpop.f32.mrb[0].mxu0
    %v1602 = vpop.f32.mrb[0].mxu0
    %v1603 = vadd.f32 0.0, %v1602
    %v1604 = vpop.f32.mrb[0].mxu0
    %1605 = vmatprep.mubr.bf16.mxu0 %v1462
    %1606 = vmatmul.mubr.bf16.gmra.mrb[0].mxu0 %v1461
    %v1607 = vpop.f32.mrb[0].mxu0
    %v1608 = vadd.f32 0.0, %v1607
    %v1609 = vpop.f32.mrb[0].mxu0
    %v1610 = vpop.f32.mrb[0].mxu0
    %v1611 = vadd.f32 0.0, %v1610
    %v1612 = vpop.f32.mrb[0].mxu0
    %1613 = vmatprep.mubr.bf16.mxu0 %v1464
    %1614 = vmatmul.mubr.bf16.gmra.mrb[0].mxu0 %v1463
    %v1615 = vpop.f32.mrb[0].mxu0
    %v1616 = vadd.f32 0.0, %v1615
    %v1617 = vpop.f32.mrb[0].mxu0
    %v1618 = vpop.f32.mrb[0].mxu0
    %v1619 = vadd.f32 0.0, %v1618
    %v1620 = vpop.f32.mrb[0].mxu0
    %1621 = vmatprep.mubr.bf16.mxu0 %v1466
    %1622 = vmatmul.mubr.bf16.gmra.mrb[0].mxu0 %v1465
    %v1623 = vpop.f32.mrb[0].mxu0
    %v1624 = vadd.f32 0.0, %v1623
    %v1625 = vpop.f32.mrb[0].mxu0
    %v1626 = vpop.f32.mrb[0].mxu0
    %v1627 = vadd.f32 0.0, %v1626
    %v1628 = vpop.f32.mrb[0].mxu0
    %1629 = vmatprep.mubr.bf16.mxu0 %v1468
    %1630 = vmatmul.mubr.bf16.gmra.mrb[0].mxu0 %v1467
    %v1631 = vpop.f32.mrb[0].mxu0
    %v1632 = vadd.f32 0.0, %v1631
    %v1633 = vpop.f32.mrb[0].mxu0
    %v1634 = vpop.f32.mrb[0].mxu0
    %v1635 = vadd.f32 0.0, %v1634
    %v1636 = vpop.f32.mrb[0].mxu0
    %1637 = vmatprep.mubr.bf16.mxu0 %v1470
    %1638 = vmatmul.mubr.bf16.gmra.mrb[0].mxu0 %v1469
    %v1639 = vpop.f32.mrb[0].mxu0
    %v1640 = vadd.f32 0.0, %v1639
    %v1641 = vpop.f32.mrb[0].mxu0
    %v1642 = vpop.f32.mrb[0].mxu0
    %v1643 = vadd.f32 0.0, %v1642
    %v1644 = vpop.f32.mrb[0].mxu0
    %1645 = vmatprep.mubr.bf16.mxu0 %v1472
    %1646 = vmatmul.mubr.bf16.gmra.mrb[0].mxu0 %v1471
    %v1647 = vpop.f32.mrb[0].mxu0
    %v1648 = vadd.f32 0.0, %v1647
    %v1649 = vpop.f32.mrb[0].mxu0
    %v1650 = vpop.f32.mrb[0].mxu0
    %v1651 = vadd.f32 0.0, %v1650
    %v1652 = vpop.f32.mrb[0].mxu0
    %1653 = vmatprep.mubr.bf16.mxu0 %v1474
    %1654 = vmatmul.mubr.bf16.gmra.mrb[0].mxu0 %v1473
    %v1655 = vpop.f32.mrb[0].mxu0
    %v1656 = vadd.f32 0.0, %v1655
    %v1657 = vpop.f32.mrb[0].mxu0
    %v1658 = vpop.f32.mrb[0].mxu0
    %v1659 = vadd.f32 0.0, %v1658
    %v1660 = vpop.f32.mrb[0].mxu0
    %1661 = vmatprep.mubr.bf16.mxu0 %v1476
    %1662 = vmatmul.mubr.bf16.gmra.mrb[0].mxu0 %v1475
    %v1663 = vpop.f32.mrb[0].mxu0
    %v1664 = vadd.f32 0.0, %v1663
    %v1665 = vpop.f32.mrb[0].mxu0
    %v1666 = vpop.f32.mrb[0].mxu0
    %v1667 = vadd.f32 0.0, %v1666
    %v1668 = vpop.f32.mrb[0].mxu0
    %1669 = vdwg.mxu0
    %v1670 = vpack.c.bf16 %v1547, %v1544
    %v1671 = vpack.c.bf16 %v1555, %v1552
    %v1672 = vpack.c.bf16 %v1563, %v1560
    %v1673 = vpack.c.bf16 %v1571, %v1568
    %v1674 = vpack.c.bf16 %v1579, %v1576
    %v1675 = vpack.c.bf16 %v1587, %v1584
    %v1676 = vpack.c.bf16 %v1595, %v1592
    %v1677 = vpack.c.bf16 %v1603, %v1600
    %v1678 = vpack.c.bf16 %v1611, %v1608
    %v1679 = vpack.c.bf16 %v1619, %v1616
    %v1680 = vpack.c.bf16 %v1627, %v1624
    %v1681 = vpack.c.bf16 %v1635, %v1632
    %v1682 = vpack.c.bf16 %v1643, %v1640
    %v1683 = vpack.c.bf16 %v1651, %v1648
    %v1684 = vpack.c.bf16 %v1659, %v1656
    %v1685 = vpack.c.bf16 %v1667, %v1664
    %v1686 = vld [vmem:[#allocation5] sm:$0xf]
    %v1687 = vld [vmem:[#allocation5 + $0x4] sm:$0xf]
    %v1688 = vld [vmem:[#allocation5 + $0x8] sm:$0xf]
    %v1689 = vld [vmem:[#allocation5 + $0xc] sm:$0xf]
    %v1690 = vld [vmem:[#allocation5 + $0x10] sm:$0xf]
    %v1691 = vld [vmem:[#allocation5 + $0x14] sm:$0xf]
    %v1692 = vld [vmem:[#allocation5 + $0x18] sm:$0xf]
    %v1693 = vld [vmem:[#allocation5 + $0x1c] sm:$0xf]
    %v1694 = vld [vmem:[#allocation5 + $0x20] sm:$0xf]
    %v1695 = vld [vmem:[#allocation5 + $0x24] sm:$0xf]
    %v1696 = vld [vmem:[#allocation5 + $0x28] sm:$0xf]
    %v1697 = vld [vmem:[#allocation5 + $0x2c] sm:$0xf]
    %v1698 = vld [vmem:[#allocation5 + $0x30] sm:$0xf]
    %v1699 = vld [vmem:[#allocation5 + $0x34] sm:$0xf]
    %v1700 = vld [vmem:[#allocation5 + $0x38] sm:$0xf]
    %v1701 = vld [vmem:[#allocation5 + $0x3c] sm:$0xf]
    %v1702 = vld [vmem:[%s8] sm:$0x1]
    %v1704 = vlaneseq
    %v1705 = vshrl.u32 %v1704, 7
    %v1706 = vsub.s32 0, %v1705
    %v1707 = vrot.slane %v1702, %v1706
    %v1725 = vunpack.c.l.b16 %v1686
    %v1726 = vunpack.c.l.b16 %v1687
    %v1727 = vunpack.c.l.b16 %v1688
    %v1728 = vunpack.c.l.b16 %v1689
    %v1729 = vunpack.c.l.b16 %v1690
    %v1730 = vunpack.c.l.b16 %v1691
    %v1731 = vunpack.c.l.b16 %v1692
    %v1732 = vunpack.c.l.b16 %v1693
    %v1733 = vunpack.c.l.b16 %v1694
    %v1734 = vunpack.c.l.b16 %v1695
    %v1735 = vunpack.c.l.b16 %v1696
    %v1736 = vunpack.c.l.b16 %v1697
    %v1737 = vunpack.c.l.b16 %v1698
    %v1738 = vunpack.c.l.b16 %v1699
    %v1739 = vunpack.c.l.b16 %v1700
    %v1740 = vunpack.c.l.b16 %v1701
    %v1741 = vpack.c.b16 %v1726, %v1725
    %v1742 = vpack.c.b16 %v1728, %v1727
    %v1743 = vpack.c.b16 %v1730, %v1729
    %v1744 = vpack.c.b16 %v1732, %v1731
    %v1745 = vpack.c.b16 %v1734, %v1733
    %v1746 = vpack.c.b16 %v1736, %v1735
    %v1747 = vpack.c.b16 %v1738, %v1737
    %v1748 = vpack.c.b16 %v1740, %v1739
    %1757 = vmatprep.subr.bf16.mxu0 0
    %1758 = vmatpush1.bf16.msra.mxu0 %v1741
    %1759 = vmatprep.subr.bf16.mxu0 0
    %1760 = vmatpush1.bf16.msra.mxu0 %v1742
    %1761 = vmatprep.subr.bf16.mxu0 0
    %1762 = vmatpush1.bf16.msra.mxu0 %v1743
    %1763 = vmatprep.subr.bf16.mxu0 0
    %1764 = vmatpush1.bf16.msra.mxu0 %v1744
    %1765 = vmatprep.subr.bf16.mxu0 0
    %1766 = vmatpush1.bf16.msra.mxu0 %v1745
    %1767 = vmatprep.subr.bf16.mxu0 0
    %1768 = vmatpush1.bf16.msra.mxu0 %v1746
    %1769 = vmatprep.subr.bf16.mxu0 0
    %1770 = vmatpush1.bf16.msra.mxu0 %v1747
    %1771 = vmatprep.subr.bf16.mxu0 0
    %1772 = vmatpush1.bf16.msra.mxu0 %v1748
    %1773 = vmatprep.subr.bf16.mxu0 0
    %1774 = vmatpush1.bf16.msra.mxu0 0
    %1775 = vmatprep.subr.bf16.mxu0 0
    %1776 = vmatpush1.bf16.msra.mxu0 0
    %1777 = vmatprep.subr.bf16.mxu0 0
    %1778 = vmatpush1.bf16.msra.mxu0 0
    %1779 = vmatprep.subr.bf16.mxu0 0
    %1780 = vmatpush1.bf16.msra.mxu0 0
    %1781 = vmatprep.subr.bf16.mxu0 0
    %1782 = vmatpush1.bf16.msra.mxu0 0
    %1783 = vmatprep.subr.bf16.mxu0 0
    %1784 = vmatpush1.bf16.msra.mxu0 0
    %1785 = vmatprep.subr.bf16.mxu0 0
    %1786 = vmatpush1.bf16.msra.mxu0 0
    %1787 = vmatprep.subr.bf16.mxu0 0
    %1788 = vmatpush1.bf16.msra.mxu0 0
    %1789 = vmatprep.mubr.bf16.mxu0 0
    %1790 = vmatmul.mubr.bf16.gmra.mrb[0].mxu0 %v1670
    %v1791 = vpop.f32.mrb[0].mxu0
    %v1792 = vadd.f32 %v1707, %v1791
    %v1793 = vpop.f32.mrb[0].mxu0
    %v1794 = vpop.f32.mrb[0].mxu0
    %v1795 = vadd.f32 %v1707, %v1794
    %v1796 = vpop.f32.mrb[0].mxu0
    %1797 = vmatprep.mubr.bf16.mxu0 0
    %1798 = vmatmul.mubr.bf16.gmra.mrb[0].mxu0 %v1671
    %v1799 = vpop.f32.mrb[0].mxu0
    %v1800 = vadd.f32 %v1707, %v1799
    %v1801 = vpop.f32.mrb[0].mxu0
    %v1802 = vpop.f32.mrb[0].mxu0
    %v1803 = vadd.f32 %v1707, %v1802
    %v1804 = vpop.f32.mrb[0].mxu0
    %1805 = vmatprep.mubr.bf16.mxu0 0
    %1806 = vmatmul.mubr.bf16.gmra.mrb[0].mxu0 %v1672
    %v1807 = vpop.f32.mrb[0].mxu0
    %v1808 = vadd.f32 %v1707, %v1807
    %v1809 = vpop.f32.mrb[0].mxu0
    %v1810 = vpop.f32.mrb[0].mxu0
    %v1811 = vadd.f32 %v1707, %v1810
    %v1812 = vpop.f32.mrb[0].mxu0
    %1813 = vmatprep.mubr.bf16.mxu0 0
    %1814 = vmatmul.mubr.bf16.gmra.mrb[0].mxu0 %v1673
    %v1815 = vpop.f32.mrb[0].mxu0
    %v1816 = vadd.f32 %v1707, %v1815
    %v1817 = vpop.f32.mrb[0].mxu0
    %v1818 = vpop.f32.mrb[0].mxu0
    %v1819 = vadd.f32 %v1707, %v1818
    %v1820 = vpop.f32.mrb[0].mxu0
    %1821 = vmatprep.mubr.bf16.mxu0 0
    %1822 = vmatmul.mubr.bf16.gmra.mrb[0].mxu0 %v1674
    %v1823 = vpop.f32.mrb[0].mxu0
    %v1824 = vadd.f32 %v1707, %v1823
    %v1825 = vpop.f32.mrb[0].mxu0
    %v1826 = vpop.f32.mrb[0].mxu0
    %v1827 = vadd.f32 %v1707, %v1826
    %v1828 = vpop.f32.mrb[0].mxu0
    %1829 = vmatprep.mubr.bf16.mxu0 0
    %1830 = vmatmul.mubr.bf16.gmra.mrb[0].mxu0 %v1675
    %v1831 = vpop.f32.mrb[0].mxu0
    %v1832 = vadd.f32 %v1707, %v1831
    %v1833 = vpop.f32.mrb[0].mxu0
    %v1834 = vpop.f32.mrb[0].mxu0
    %v1835 = vadd.f32 %v1707, %v1834
    %v1836 = vpop.f32.mrb[0].mxu0
    %1837 = vmatprep.mubr.bf16.mxu0 0
    %1838 = vmatmul.mubr.bf16.gmra.mrb[0].mxu0 %v1676
    %v1839 = vpop.f32.mrb[0].mxu0
    %v1840 = vadd.f32 %v1707, %v1839
    %v1841 = vpop.f32.mrb[0].mxu0
    %v1842 = vpop.f32.mrb[0].mxu0
    %v1843 = vadd.f32 %v1707, %v1842
    %v1844 = vpop.f32.mrb[0].mxu0
    %1845 = vmatprep.mubr.bf16.mxu0 0
    %1846 = vmatmul.mubr.bf16.gmra.mrb[0].mxu0 %v1677
    %v1847 = vpop.f32.mrb[0].mxu0
    %v1848 = vadd.f32 %v1707, %v1847
    %v1849 = vpop.f32.mrb[0].mxu0
    %v1850 = vpop.f32.mrb[0].mxu0
    %v1851 = vadd.f32 %v1707, %v1850
    %v1852 = vpop.f32.mrb[0].mxu0
    %1853 = vmatprep.mubr.bf16.mxu0 0
    %1854 = vmatmul.mubr.bf16.gmra.mrb[0].mxu0 %v1678
    %v1855 = vpop.f32.mrb[0].mxu0
    %v1856 = vadd.f32 %v1707, %v1855
    %v1857 = vpop.f32.mrb[0].mxu0
    %v1858 = vpop.f32.mrb[0].mxu0
    %v1859 = vadd.f32 %v1707, %v1858
    %v1860 = vpop.f32.mrb[0].mxu0
    %1861 = vmatprep.mubr.bf16.mxu0 0
    %1862 = vmatmul.mubr.bf16.gmra.mrb[0].mxu0 %v1679
    %v1863 = vpop.f32.mrb[0].mxu0
    %v1864 = vadd.f32 %v1707, %v1863
    %v1865 = vpop.f32.mrb[0].mxu0
    %v1866 = vpop.f32.mrb[0].mxu0
    %v1867 = vadd.f32 %v1707, %v1866
    %v1868 = vpop.f32.mrb[0].mxu0
    %1869 = vmatprep.mubr.bf16.mxu0 0
    %1870 = vmatmul.mubr.bf16.gmra.mrb[0].mxu0 %v1680
    %v1871 = vpop.f32.mrb[0].mxu0
    %v1872 = vadd.f32 %v1707, %v1871
    %v1873 = vpop.f32.mrb[0].mxu0
    %v1874 = vpop.f32.mrb[0].mxu0
    %v1875 = vadd.f32 %v1707, %v1874
    %v1876 = vpop.f32.mrb[0].mxu0
    %1877 = vmatprep.mubr.bf16.mxu0 0
    %1878 = vmatmul.mubr.bf16.gmra.mrb[0].mxu0 %v1681
    %v1879 = vpop.f32.mrb[0].mxu0
    %v1880 = vadd.f32 %v1707, %v1879
    %v1881 = vpop.f32.mrb[0].mxu0
    %v1882 = vpop.f32.mrb[0].mxu0
    %v1883 = vadd.f32 %v1707, %v1882
    %v1884 = vpop.f32.mrb[0].mxu0
    %1885 = vmatprep.mubr.bf16.mxu0 0
    %1886 = vmatmul.mubr.bf16.gmra.mrb[0].mxu0 %v1682
    %v1887 = vpop.f32.mrb[0].mxu0
    %v1888 = vadd.f32 %v1707, %v1887
    %v1889 = vpop.f32.mrb[0].mxu0
    %v1890 = vpop.f32.mrb[0].mxu0
    %v1891 = vadd.f32 %v1707, %v1890
    %v1892 = vpop.f32.mrb[0].mxu0
    %1893 = vmatprep.mubr.bf16.mxu0 0
    %1894 = vmatmul.mubr.bf16.gmra.mrb[0].mxu0 %v1683
    %v1895 = vpop.f32.mrb[0].mxu0
    %v1896 = vadd.f32 %v1707, %v1895
    %v1897 = vpop.f32.mrb[0].mxu0
    %v1898 = vpop.f32.mrb[0].mxu0
    %v1899 = vadd.f32 %v1707, %v1898
    %v1900 = vpop.f32.mrb[0].mxu0
    %1901 = vmatprep.mubr.bf16.mxu0 0
    %1902 = vmatmul.mubr.bf16.gmra.mrb[0].mxu0 %v1684
    %v1903 = vpop.f32.mrb[0].mxu0
    %v1904 = vadd.f32 %v1707, %v1903
    %v1905 = vpop.f32.mrb[0].mxu0
    %v1906 = vpop.f32.mrb[0].mxu0
    %v1907 = vadd.f32 %v1707, %v1906
    %v1908 = vpop.f32.mrb[0].mxu0
    %1909 = vmatprep.mubr.bf16.mxu0 0
    %1910 = vmatmul.mubr.bf16.gmra.mrb[0].mxu0 %v1685
    %v1911 = vpop.f32.mrb[0].mxu0
    %v1912 = vadd.f32 %v1707, %v1911
    %v1913 = vpop.f32.mrb[0].mxu0
    %v1914 = vpop.f32.mrb[0].mxu0
    %v1915 = vadd.f32 %v1707, %v1914
    %v1916 = vpop.f32.mrb[0].mxu0
    %1917 = vdwg.mxu0
    %v1918 = vmax.f32 %v1792, 0.0
    %v1919 = vmax.f32 %v1795, 0.0
    %v1920 = vmax.f32 %v1800, 0.0
    %v1921 = vmax.f32 %v1803, 0.0
    %v1922 = vmax.f32 %v1808, 0.0
    %v1923 = vmax.f32 %v1811, 0.0
    %v1924 = vmax.f32 %v1816, 0.0
    %v1925 = vmax.f32 %v1819, 0.0
    %v1926 = vmax.f32 %v1824, 0.0
    %v1927 = vmax.f32 %v1827, 0.0
    %v1928 = vmax.f32 %v1832, 0.0
    %v1929 = vmax.f32 %v1835, 0.0
    %v1930 = vmax.f32 %v1840, 0.0
    %v1931 = vmax.f32 %v1843, 0.0
    %v1932 = vmax.f32 %v1848, 0.0
    %v1933 = vmax.f32 %v1851, 0.0
    %v1934 = vmax.f32 %v1856, 0.0
    %v1935 = vmax.f32 %v1859, 0.0
    %v1936 = vmax.f32 %v1864, 0.0
    %v1937 = vmax.f32 %v1867, 0.0
    %v1938 = vmax.f32 %v1872, 0.0
    %v1939 = vmax.f32 %v1875, 0.0
    %v1940 = vmax.f32 %v1880, 0.0
    %v1941 = vmax.f32 %v1883, 0.0
    %v1942 = vmax.f32 %v1888, 0.0
    %v1943 = vmax.f32 %v1891, 0.0
    %v1944 = vmax.f32 %v1896, 0.0
    %v1945 = vmax.f32 %v1899, 0.0
    %v1946 = vmax.f32 %v1904, 0.0
    %v1947 = vmax.f32 %v1907, 0.0
    %v1948 = vmax.f32 %v1912, 0.0
    %v1949 = vmax.f32 %v1915, 0.0
    %v1950 = vpack.c.bf16 %v1919, %v1918
    %v1951 = vpack.c.bf16 %v1921, %v1920
    %v1952 = vpack.c.bf16 %v1923, %v1922
    %v1953 = vpack.c.bf16 %v1925, %v1924
    %v1954 = vpack.c.bf16 %v1927, %v1926
    %v1955 = vpack.c.bf16 %v1929, %v1928
    %v1956 = vpack.c.bf16 %v1931, %v1930
    %v1957 = vpack.c.bf16 %v1933, %v1932
    %v1958 = vpack.c.bf16 %v1935, %v1934
    %v1959 = vpack.c.bf16 %v1937, %v1936
    %v1960 = vpack.c.bf16 %v1939, %v1938
    %v1961 = vpack.c.bf16 %v1941, %v1940
    %v1962 = vpack.c.bf16 %v1943, %v1942
    %v1963 = vpack.c.bf16 %v1945, %v1944
    %v1964 = vpack.c.bf16 %v1947, %v1946
    %v1965 = vpack.c.bf16 %v1949, %v1948
    %v1966 = vld [vmem:[#allocation7] sm:$0xf]
    %v1967 = vld [vmem:[#allocation7 + $0x4] sm:$0xf]
    %v1968 = vld [vmem:[#allocation7 + $0x8] sm:$0xf]
    %v1969 = vld [vmem:[#allocation7 + $0xc] sm:$0xf]
    %v1970 = vld [vmem:[#allocation7 + $0x10] sm:$0xf]
    %v1971 = vld [vmem:[#allocation7 + $0x14] sm:$0xf]
    %v1972 = vld [vmem:[#allocation7 + $0x18] sm:$0xf]
    %v1973 = vld [vmem:[#allocation7 + $0x1c] sm:$0xf]
    %v1974 = vld [vmem:[#allocation7 + $0x20] sm:$0xf]
    %v1975 = vld [vmem:[#allocation7 + $0x24] sm:$0xf]
    %v1976 = vld [vmem:[#allocation7 + $0x28] sm:$0xf]
    %v1977 = vld [vmem:[#allocation7 + $0x2c] sm:$0xf]
    %v1978 = vld [vmem:[#allocation7 + $0x30] sm:$0xf]
    %v1979 = vld [vmem:[#allocation7 + $0x34] sm:$0xf]
    %v1980 = vld [vmem:[#allocation7 + $0x38] sm:$0xf]
    %v1981 = vld [vmem:[#allocation7 + $0x3c] sm:$0xf]
    %v1982 = vld [vmem:[%s10] sm:$0x1]
    %v1984 = vlaneseq
    %v1985 = vshrl.u32 %v1984, 7
    %v1986 = vsub.s32 0, %v1985
    %v1987 = vrot.slane %v1982, %v1986
    %v2005 = vunpack.c.l.b16 %v1966
    %v2006 = vunpack.c.l.b16 %v1967
    %v2007 = vunpack.c.l.b16 %v1968
    %v2008 = vunpack.c.l.b16 %v1969
    %v2009 = vunpack.c.l.b16 %v1970
    %v2010 = vunpack.c.l.b16 %v1971
    %v2011 = vunpack.c.l.b16 %v1972
    %v2012 = vunpack.c.l.b16 %v1973
    %v2013 = vunpack.c.l.b16 %v1974
    %v2014 = vunpack.c.l.b16 %v1975
    %v2015 = vunpack.c.l.b16 %v1976
    %v2016 = vunpack.c.l.b16 %v1977
    %v2017 = vunpack.c.l.b16 %v1978
    %v2018 = vunpack.c.l.b16 %v1979
    %v2019 = vunpack.c.l.b16 %v1980
    %v2020 = vunpack.c.l.b16 %v1981
    %v2021 = vpack.c.b16 %v2006, %v2005
    %v2022 = vpack.c.b16 %v2008, %v2007
    %v2023 = vpack.c.b16 %v2010, %v2009
    %v2024 = vpack.c.b16 %v2012, %v2011
    %v2025 = vpack.c.b16 %v2014, %v2013
    %v2026 = vpack.c.b16 %v2016, %v2015
    %v2027 = vpack.c.b16 %v2018, %v2017
    %v2028 = vpack.c.b16 %v2020, %v2019
    %2037 = vmatprep.subr.bf16.mxu0 0
    %2038 = vmatpush1.bf16.msra.mxu0 %v2021
    %2039 = vmatprep.subr.bf16.mxu0 0
    %2040 = vmatpush1.bf16.msra.mxu0 %v2022
    %2041 = vmatprep.subr.bf16.mxu0 0
    %2042 = vmatpush1.bf16.msra.mxu0 %v2023
    %2043 = vmatprep.subr.bf16.mxu0 0
    %2044 = vmatpush1.bf16.msra.mxu0 %v2024
    %2045 = vmatprep.subr.bf16.mxu0 0
    %2046 = vmatpush1.bf16.msra.mxu0 %v2025
    %2047 = vmatprep.subr.bf16.mxu0 0
    %2048 = vmatpush1.bf16.msra.mxu0 %v2026
    %2049 = vmatprep.subr.bf16.mxu0 0
    %2050 = vmatpush1.bf16.msra.mxu0 %v2027
    %2051 = vmatprep.subr.bf16.mxu0 0
    %2052 = vmatpush1.bf16.msra.mxu0 %v2028
    %2053 = vmatprep.subr.bf16.mxu0 0
    %2054 = vmatpush1.bf16.msra.mxu0 0
    %2055 = vmatprep.subr.bf16.mxu0 0
    %2056 = vmatpush1.bf16.msra.mxu0 0
    %2057 = vmatprep.subr.bf16.mxu0 0
    %2058 = vmatpush1.bf16.msra.mxu0 0
    %2059 = vmatprep.subr.bf16.mxu0 0
    %2060 = vmatpush1.bf16.msra.mxu0 0
    %2061 = vmatprep.subr.bf16.mxu0 0
    %2062 = vmatpush1.bf16.msra.mxu0 0
    %2063 = vmatprep.subr.bf16.mxu0 0
    %2064 = vmatpush1.bf16.msra.mxu0 0
    %2065 = vmatprep.subr.bf16.mxu0 0
    %2066 = vmatpush1.bf16.msra.mxu0 0
    %2067 = vmatprep.subr.bf16.mxu0 0
    %2068 = vmatpush1.bf16.msra.mxu0 0
    %2069 = vmatprep.mubr.bf16.mxu0 0
    %2070 = vmatmul.mubr.bf16.gmra.mrb[0].mxu0 %v1950
    %v2071 = vpop.f32.mrb[0].mxu0
    %v2072 = vadd.f32 %v1987, %v2071
    %v2073 = vpop.f32.mrb[0].mxu0
    %v2074 = vpop.f32.mrb[0].mxu0
    %v2075 = vadd.f32 %v1987, %v2074
    %v2076 = vpop.f32.mrb[0].mxu0
    %2077 = vmatprep.mubr.bf16.mxu0 0
    %2078 = vmatmul.mubr.bf16.gmra.mrb[0].mxu0 %v1951
    %v2079 = vpop.f32.mrb[0].mxu0
    %v2080 = vadd.f32 %v1987, %v2079
    %v2081 = vpop.f32.mrb[0].mxu0
    %v2082 = vpop.f32.mrb[0].mxu0
    %v2083 = vadd.f32 %v1987, %v2082
    %v2084 = vpop.f32.mrb[0].mxu0
    %2085 = vmatprep.mubr.bf16.mxu0 0
    %2086 = vmatmul.mubr.bf16.gmra.mrb[0].mxu0 %v1952
    %v2087 = vpop.f32.mrb[0].mxu0
    %v2088 = vadd.f32 %v1987, %v2087
    %v2089 = vpop.f32.mrb[0].mxu0
    %v2090 = vpop.f32.mrb[0].mxu0
    %v2091 = vadd.f32 %v1987, %v2090
    %v2092 = vpop.f32.mrb[0].mxu0
    %2093 = vmatprep.mubr.bf16.mxu0 0
    %2094 = vmatmul.mubr.bf16.gmra.mrb[0].mxu0 %v1953
    %v2095 = vpop.f32.mrb[0].mxu0
    %v2096 = vadd.f32 %v1987, %v2095
    %v2097 = vpop.f32.mrb[0].mxu0
    %v2098 = vpop.f32.mrb[0].mxu0
    %v2099 = vadd.f32 %v1987, %v2098
    %v2100 = vpop.f32.mrb[0].mxu0
    %2101 = vmatprep.mubr.bf16.mxu0 0
    %2102 = vmatmul.mubr.bf16.gmra.mrb[0].mxu0 %v1954
    %v2103 = vpop.f32.mrb[0].mxu0
    %v2104 = vadd.f32 %v1987, %v2103
    %v2105 = vpop.f32.mrb[0].mxu0
    %v2106 = vpop.f32.mrb[0].mxu0
    %v2107 = vadd.f32 %v1987, %v2106
    %v2108 = vpop.f32.mrb[0].mxu0
    %2109 = vmatprep.mubr.bf16.mxu0 0
    %2110 = vmatmul.mubr.bf16.gmra.mrb[0].mxu0 %v1955
    %v2111 = vpop.f32.mrb[0].mxu0
    %v2112 = vadd.f32 %v1987, %v2111
    %v2113 = vpop.f32.mrb[0].mxu0
    %v2114 = vpop.f32.mrb[0].mxu0
    %v2115 = vadd.f32 %v1987, %v2114
    %v2116 = vpop.f32.mrb[0].mxu0
    %2117 = vmatprep.mubr.bf16.mxu0 0
    %2118 = vmatmul.mubr.bf16.gmra.mrb[0].mxu0 %v1956
    %v2119 = vpop.f32.mrb[0].mxu0
    %v2120 = vadd.f32 %v1987, %v2119
    %v2121 = vpop.f32.mrb[0].mxu0
    %v2122 = vpop.f32.mrb[0].mxu0
    %v2123 = vadd.f32 %v1987, %v2122
    %v2124 = vpop.f32.mrb[0].mxu0
    %2125 = vmatprep.mubr.bf16.mxu0 0
    %2126 = vmatmul.mubr.bf16.gmra.mrb[0].mxu0 %v1957
    %v2127 = vpop.f32.mrb[0].mxu0
    %v2128 = vadd.f32 %v1987, %v2127
    %v2129 = vpop.f32.mrb[0].mxu0
    %v2130 = vpop.f32.mrb[0].mxu0
    %v2131 = vadd.f32 %v1987, %v2130
    %v2132 = vpop.f32.mrb[0].mxu0
    %2133 = vmatprep.mubr.bf16.mxu0 0
    %2134 = vmatmul.mubr.bf16.gmra.mrb[0].mxu0 %v1958
    %v2135 = vpop.f32.mrb[0].mxu0
    %v2136 = vadd.f32 %v1987, %v2135
    %v2137 = vpop.f32.mrb[0].mxu0
    %v2138 = vpop.f32.mrb[0].mxu0
    %v2139 = vadd.f32 %v1987, %v2138
    %v2140 = vpop.f32.mrb[0].mxu0
    %2141 = vmatprep.mubr.bf16.mxu0 0
    %2142 = vmatmul.mubr.bf16.gmra.mrb[0].mxu0 %v1959
    %v2143 = vpop.f32.mrb[0].mxu0
    %v2144 = vadd.f32 %v1987, %v2143
    %v2145 = vpop.f32.mrb[0].mxu0
    %v2146 = vpop.f32.mrb[0].mxu0
    %v2147 = vadd.f32 %v1987, %v2146
    %v2148 = vpop.f32.mrb[0].mxu0
    %2149 = vmatprep.mubr.bf16.mxu0 0
    %2150 = vmatmul.mubr.bf16.gmra.mrb[0].mxu0 %v1960
    %v2151 = vpop.f32.mrb[0].mxu0
    %v2152 = vadd.f32 %v1987, %v2151
    %v2153 = vpop.f32.mrb[0].mxu0
    %v2154 = vpop.f32.mrb[0].mxu0
    %v2155 = vadd.f32 %v1987, %v2154
    %v2156 = vpop.f32.mrb[0].mxu0
    %2157 = vmatprep.mubr.bf16.mxu0 0
    %2158 = vmatmul.mubr.bf16.gmra.mrb[0].mxu0 %v1961
    %v2159 = vpop.f32.mrb[0].mxu0
    %v2160 = vadd.f32 %v1987, %v2159
    %v2161 = vpop.f32.mrb[0].mxu0
    %v2162 = vpop.f32.mrb[0].mxu0
    %v2163 = vadd.f32 %v1987, %v2162
    %v2164 = vpop.f32.mrb[0].mxu0
    %2165 = vmatprep.mubr.bf16.mxu0 0
    %2166 = vmatmul.mubr.bf16.gmra.mrb[0].mxu0 %v1962
    %v2167 = vpop.f32.mrb[0].mxu0
    %v2168 = vadd.f32 %v1987, %v2167
    %v2169 = vpop.f32.mrb[0].mxu0
    %v2170 = vpop.f32.mrb[0].mxu0
    %v2171 = vadd.f32 %v1987, %v2170
    %v2172 = vpop.f32.mrb[0].mxu0
    %2173 = vmatprep.mubr.bf16.mxu0 0
    %2174 = vmatmul.mubr.bf16.gmra.mrb[0].mxu0 %v1963
    %v2175 = vpop.f32.mrb[0].mxu0
    %v2176 = vadd.f32 %v1987, %v2175
    %v2177 = vpop.f32.mrb[0].mxu0
    %v2178 = vpop.f32.mrb[0].mxu0
    %v2179 = vadd.f32 %v1987, %v2178
    %v2180 = vpop.f32.mrb[0].mxu0
    %2181 = vmatprep.mubr.bf16.mxu0 0
    %2182 = vmatmul.mubr.bf16.gmra.mrb[0].mxu0 %v1964
    %v2183 = vpop.f32.mrb[0].mxu0
    %v2184 = vadd.f32 %v1987, %v2183
    %v2185 = vpop.f32.mrb[0].mxu0
    %v2186 = vpop.f32.mrb[0].mxu0
    %v2187 = vadd.f32 %v1987, %v2186
    %v2188 = vpop.f32.mrb[0].mxu0
    %2189 = vmatprep.mubr.bf16.mxu0 0
    %2190 = vmatmul.mubr.bf16.gmra.mrb[0].mxu0 %v1965
    %v2191 = vpop.f32.mrb[0].mxu0
    %v2192 = vadd.f32 %v1987, %v2191
    %v2193 = vpop.f32.mrb[0].mxu0
    %v2194 = vpop.f32.mrb[0].mxu0
    %v2195 = vadd.f32 %v1987, %v2194
    %v2196 = vpop.f32.mrb[0].mxu0
    %2197 = vdwg.mxu0
    %v2198 = vmul.f32 %v2072, %v2072
    %v2199 = vmul.f32 %v2075, %v2075
    %v2200 = vmul.f32 %v2080, %v2080
    %v2201 = vmul.f32 %v2083, %v2083
    %v2202 = vmul.f32 %v2088, %v2088
    %v2203 = vmul.f32 %v2091, %v2091
    %v2204 = vmul.f32 %v2096, %v2096
    %v2205 = vmul.f32 %v2099, %v2099
    %v2206 = vmul.f32 %v2104, %v2104
    %v2207 = vmul.f32 %v2107, %v2107
    %v2208 = vmul.f32 %v2112, %v2112
    %v2209 = vmul.f32 %v2115, %v2115
    %v2210 = vmul.f32 %v2120, %v2120
    %v2211 = vmul.f32 %v2123, %v2123
    %v2212 = vmul.f32 %v2128, %v2128
    %v2213 = vmul.f32 %v2131, %v2131
    %v2214 = vmul.f32 %v2136, %v2136
    %v2215 = vmul.f32 %v2139, %v2139
    %v2216 = vmul.f32 %v2144, %v2144
    %v2217 = vmul.f32 %v2147, %v2147
    %v2218 = vmul.f32 %v2152, %v2152
    %v2219 = vmul.f32 %v2155, %v2155
    %v2220 = vmul.f32 %v2160, %v2160
    %v2221 = vmul.f32 %v2163, %v2163
    %v2222 = vmul.f32 %v2168, %v2168
    %v2223 = vmul.f32 %v2171, %v2171
    %v2224 = vmul.f32 %v2176, %v2176
    %v2225 = vmul.f32 %v2179, %v2179
    %v2226 = vmul.f32 %v2184, %v2184
    %v2227 = vmul.f32 %v2187, %v2187
    %v2228 = vmul.f32 %v2192, %v2192
    %v2229 = vmul.f32 %v2195, %v2195
    %2230 = vadd.xlane.f32.xlu0 %v2198
    %v2231 = vpop.xlane.xlu0 %2230
    %2232 = vadd.xlane.f32.xlu0 %v2199
    %v2233 = vpop.xlane.xlu0 %2232
    %2234 = vadd.xlane.f32.xlu0 %v2200
    %v2235 = vpop.xlane.xlu0 %2234
    %2236 = vadd.xlane.f32.xlu0 %v2201
    %v2237 = vpop.xlane.xlu0 %2236
    %2238 = vadd.xlane.f32.xlu0 %v2202
    %v2239 = vpop.xlane.xlu0 %2238
    %2240 = vadd.xlane.f32.xlu0 %v2203
    %v2241 = vpop.xlane.xlu0 %2240
    %2242 = vadd.xlane.f32.xlu0 %v2204
    %v2243 = vpop.xlane.xlu0 %2242
    %2244 = vadd.xlane.f32.xlu0 %v2205
    %v2245 = vpop.xlane.xlu0 %2244
    %2246 = vadd.xlane.f32.xlu0 %v2206
    %v2247 = vpop.xlane.xlu0 %2246
    %2248 = vadd.xlane.f32.xlu0 %v2207
    %v2249 = vpop.xlane.xlu0 %2248
    %2250 = vadd.xlane.f32.xlu0 %v2208
    %v2251 = vpop.xlane.xlu0 %2250
    %2252 = vadd.xlane.f32.xlu0 %v2209
    %v2253 = vpop.xlane.xlu0 %2252
    %2254 = vadd.xlane.f32.xlu0 %v2210
    %v2255 = vpop.xlane.xlu0 %2254
    %2256 = vadd.xlane.f32.xlu0 %v2211
    %v2257 = vpop.xlane.xlu0 %2256
    %2258 = vadd.xlane.f32.xlu0 %v2212
    %v2259 = vpop.xlane.xlu0 %2258
    %2260 = vadd.xlane.f32.xlu0 %v2213
    %v2261 = vpop.xlane.xlu0 %2260
    %2262 = vadd.xlane.f32.xlu0 %v2214
    %v2263 = vpop.xlane.xlu0 %2262
    %2264 = vadd.xlane.f32.xlu0 %v2215
    %v2265 = vpop.xlane.xlu0 %2264
    %2266 = vadd.xlane.f32.xlu0 %v2216
    %v2267 = vpop.xlane.xlu0 %2266
    %2268 = vadd.xlane.f32.xlu0 %v2217
    %v2269 = vpop.xlane.xlu0 %2268
    %2270 = vadd.xlane.f32.xlu0 %v2218
    %v2271 = vpop.xlane.xlu0 %2270
    %2272 = vadd.xlane.f32.xlu0 %v2219
    %v2273 = vpop.xlane.xlu0 %2272
    %2274 = vadd.xlane.f32.xlu0 %v2220
    %v2275 = vpop.xlane.xlu0 %2274
    %2276 = vadd.xlane.f32.xlu0 %v2221
    %v2277 = vpop.xlane.xlu0 %2276
    %2278 = vadd.xlane.f32.xlu0 %v2222
    %v2279 = vpop.xlane.xlu0 %2278
    %2280 = vadd.xlane.f32.xlu0 %v2223
    %v2281 = vpop.xlane.xlu0 %2280
    %2282 = vadd.xlane.f32.xlu0 %v2224
    %v2283 = vpop.xlane.xlu0 %2282
    %2284 = vadd.xlane.f32.xlu0 %v2225
    %v2285 = vpop.xlane.xlu0 %2284
    %2286 = vadd.xlane.f32.xlu0 %v2226
    %v2287 = vpop.xlane.xlu0 %2286
    %2288 = vadd.xlane.f32.xlu0 %v2227
    %v2289 = vpop.xlane.xlu0 %2288
    %2290 = vadd.xlane.f32.xlu0 %v2228
    %v2291 = vpop.xlane.xlu0 %2290
    %2292 = vadd.xlane.f32.xlu0 %v2229
    %v2293 = vpop.xlane.xlu0 %2292
    %v2294 = vmax.f32 %v2231, 1e-24
    %v2295 = vmax.f32 %v2233, 1e-24
    %v2296 = vmax.f32 %v2235, 1e-24
    %v2297 = vmax.f32 %v2237, 1e-24
    %v2298 = vmax.f32 %v2239, 1e-24
    %v2299 = vmax.f32 %v2241, 1e-24
    %v2300 = vmax.f32 %v2243, 1e-24
    %v2301 = vmax.f32 %v2245, 1e-24
    %v2302 = vmax.f32 %v2247, 1e-24
    %v2303 = vmax.f32 %v2249, 1e-24
    %v2304 = vmax.f32 %v2251, 1e-24
    %v2305 = vmax.f32 %v2253, 1e-24
    %v2306 = vmax.f32 %v2255, 1e-24
    %v2307 = vmax.f32 %v2257, 1e-24
    %v2308 = vmax.f32 %v2259, 1e-24
    %v2309 = vmax.f32 %v2261, 1e-24
    %v2310 = vmax.f32 %v2263, 1e-24
    %v2311 = vmax.f32 %v2265, 1e-24
    %v2312 = vmax.f32 %v2267, 1e-24
    %v2313 = vmax.f32 %v2269, 1e-24
    %v2314 = vmax.f32 %v2271, 1e-24
    %v2315 = vmax.f32 %v2273, 1e-24
    %v2316 = vmax.f32 %v2275, 1e-24
    %v2317 = vmax.f32 %v2277, 1e-24
    %v2318 = vmax.f32 %v2279, 1e-24
    %v2319 = vmax.f32 %v2281, 1e-24
    %v2320 = vmax.f32 %v2283, 1e-24
    %v2321 = vmax.f32 %v2285, 1e-24
    %v2322 = vmax.f32 %v2287, 1e-24
    %v2323 = vmax.f32 %v2289, 1e-24
    %v2324 = vmax.f32 %v2291, 1e-24
    %v2325 = vmax.f32 %v2293, 1e-24
    %v2326 = vrsqrt.pop %v2294
    %v2327 = vrsqrt.pop %v2295
    %v2328 = vrsqrt.pop %v2296
    %v2329 = vrsqrt.pop %v2297
    %v2330 = vrsqrt.pop %v2298
    %v2331 = vrsqrt.pop %v2299
    %v2332 = vrsqrt.pop %v2300
    %v2333 = vrsqrt.pop %v2301
    %v2334 = vrsqrt.pop %v2302
    %v2335 = vrsqrt.pop %v2303
    %v2336 = vrsqrt.pop %v2304
    %v2337 = vrsqrt.pop %v2305
    %v2338 = vrsqrt.pop %v2306
    %v2339 = vrsqrt.pop %v2307
    %v2340 = vrsqrt.pop %v2308
    %v2341 = vrsqrt.pop %v2309
    %v2342 = vrsqrt.pop %v2310
    %v2343 = vrsqrt.pop %v2311
    %v2344 = vrsqrt.pop %v2312
    %v2345 = vrsqrt.pop %v2313
    %v2346 = vrsqrt.pop %v2314
    %v2347 = vrsqrt.pop %v2315
    %v2348 = vrsqrt.pop %v2316
    %v2349 = vrsqrt.pop %v2317
    %v2350 = vrsqrt.pop %v2318
    %v2351 = vrsqrt.pop %v2319
    %v2352 = vrsqrt.pop %v2320
    %v2353 = vrsqrt.pop %v2321
    %v2354 = vrsqrt.pop %v2322
    %v2355 = vrsqrt.pop %v2323
    %v2356 = vrsqrt.pop %v2324
    %v2357 = vrsqrt.pop %v2325
    %v2358 = vmul.f32 %v2072, %v2326
    %v2359 = vmul.f32 %v2075, %v2327
    %v2360 = vmul.f32 %v2080, %v2328
    %v2361 = vmul.f32 %v2083, %v2329
    %v2362 = vmul.f32 %v2088, %v2330
    %v2363 = vmul.f32 %v2091, %v2331
    %v2364 = vmul.f32 %v2096, %v2332
    %v2365 = vmul.f32 %v2099, %v2333
    %v2366 = vmul.f32 %v2104, %v2334
    %v2367 = vmul.f32 %v2107, %v2335
    %v2368 = vmul.f32 %v2112, %v2336
    %v2369 = vmul.f32 %v2115, %v2337
    %v2370 = vmul.f32 %v2120, %v2338
    %v2371 = vmul.f32 %v2123, %v2339
    %v2372 = vmul.f32 %v2128, %v2340
    %v2373 = vmul.f32 %v2131, %v2341
    %v2374 = vmul.f32 %v2136, %v2342
    %v2375 = vmul.f32 %v2139, %v2343
    %v2376 = vmul.f32 %v2144, %v2344
    %v2377 = vmul.f32 %v2147, %v2345
    %v2378 = vmul.f32 %v2152, %v2346
    %v2379 = vmul.f32 %v2155, %v2347
    %v2380 = vmul.f32 %v2160, %v2348
    %v2381 = vmul.f32 %v2163, %v2349
    %v2382 = vmul.f32 %v2168, %v2350
    %v2383 = vmul.f32 %v2171, %v2351
    %v2384 = vmul.f32 %v2176, %v2352
    %v2385 = vmul.f32 %v2179, %v2353
    %v2386 = vmul.f32 %v2184, %v2354
    %v2387 = vmul.f32 %v2187, %v2355
    %v2388 = vmul.f32 %v2192, %v2356
    %v2389 = vmul.f32 %v2195, %v2357
    %v2390 = vmax.f32 %v2358, 0.0
    %v2391 = vmax.f32 %v2359, 0.0
    %v2392 = vmax.f32 %v2360, 0.0
    %v2393 = vmax.f32 %v2361, 0.0
    %v2394 = vmax.f32 %v2362, 0.0
    %v2395 = vmax.f32 %v2363, 0.0
    %v2396 = vmax.f32 %v2364, 0.0
    %v2397 = vmax.f32 %v2365, 0.0
    %v2398 = vmax.f32 %v2366, 0.0
    %v2399 = vmax.f32 %v2367, 0.0
    %v2400 = vmax.f32 %v2368, 0.0
    %v2401 = vmax.f32 %v2369, 0.0
    %v2402 = vmax.f32 %v2370, 0.0
    %v2403 = vmax.f32 %v2371, 0.0
    %v2404 = vmax.f32 %v2372, 0.0
    %v2405 = vmax.f32 %v2373, 0.0
    %v2406 = vmax.f32 %v2374, 0.0
    %v2407 = vmax.f32 %v2375, 0.0
    %v2408 = vmax.f32 %v2376, 0.0
    %v2409 = vmax.f32 %v2377, 0.0
    %v2410 = vmax.f32 %v2378, 0.0
    %v2411 = vmax.f32 %v2379, 0.0
    %v2412 = vmax.f32 %v2380, 0.0
    %v2413 = vmax.f32 %v2381, 0.0
    %v2414 = vmax.f32 %v2382, 0.0
    %v2415 = vmax.f32 %v2383, 0.0
    %v2416 = vmax.f32 %v2384, 0.0
    %v2417 = vmax.f32 %v2385, 0.0
    %v2418 = vmax.f32 %v2386, 0.0
    %v2419 = vmax.f32 %v2387, 0.0
    %v2420 = vmax.f32 %v2388, 0.0
    %v2421 = vmax.f32 %v2389, 0.0
    %v2422 = vpack.c.bf16 %v2391, %v2390
    %v2423 = vpack.c.bf16 %v2393, %v2392
    %v2424 = vpack.c.bf16 %v2395, %v2394
    %v2425 = vpack.c.bf16 %v2397, %v2396
    %v2426 = vpack.c.bf16 %v2399, %v2398
    %v2427 = vpack.c.bf16 %v2401, %v2400
    %v2428 = vpack.c.bf16 %v2403, %v2402
    %v2429 = vpack.c.bf16 %v2405, %v2404
    %v2430 = vpack.c.bf16 %v2407, %v2406
    %v2431 = vpack.c.bf16 %v2409, %v2408
    %v2432 = vpack.c.bf16 %v2411, %v2410
    %v2433 = vpack.c.bf16 %v2413, %v2412
    %v2434 = vpack.c.bf16 %v2415, %v2414
    %v2435 = vpack.c.bf16 %v2417, %v2416
    %v2436 = vpack.c.bf16 %v2419, %v2418
    %v2437 = vpack.c.bf16 %v2421, %v2420
    %2438 = vst [vmem:[#allocation14] sm:$0xff] %v2390
    %2439 = vst [vmem:[#allocation14 + $0x8] sm:$0xff] %v2391
    %2440 = vst [vmem:[#allocation14 + $0x10] sm:$0xff] %v2392
    %2441 = vst [vmem:[#allocation14 + $0x18] sm:$0xff] %v2393
    %2442 = vst [vmem:[#allocation14 + $0x20] sm:$0xff] %v2394
    %2443 = vst [vmem:[#allocation14 + $0x28] sm:$0xff] %v2395
    %2444 = vst [vmem:[#allocation14 + $0x30] sm:$0xff] %v2396
    %2445 = vst [vmem:[#allocation14 + $0x38] sm:$0xff] %v2397
    %2446 = vst [vmem:[#allocation14 + $0x40] sm:$0xff] %v2398
    %2447 = vst [vmem:[#allocation14 + $0x48] sm:$0xff] %v2399
    %2448 = vst [vmem:[#allocation14 + $0x50] sm:$0xff] %v2400
    %2449 = vst [vmem:[#allocation14 + $0x58] sm:$0xff] %v2401
    %2450 = vst [vmem:[#allocation14 + $0x60] sm:$0xff] %v2402
    %2451 = vst [vmem:[#allocation14 + $0x68] sm:$0xff] %v2403
    %2452 = vst [vmem:[#allocation14 + $0x70] sm:$0xff] %v2404
    %2453 = vst [vmem:[#allocation14 + $0x78] sm:$0xff] %v2405
    %2454 = vst [vmem:[#allocation14 + $0x80] sm:$0xff] %v2406
    %2455 = vst [vmem:[#allocation14 + $0x88] sm:$0xff] %v2407
    %2456 = vst [vmem:[#allocation14 + $0x90] sm:$0xff] %v2408
    %2457 = vst [vmem:[#allocation14 + $0x98] sm:$0xff] %v2409
    %2458 = vst [vmem:[#allocation14 + $0xa0] sm:$0xff] %v2410
    %2459 = vst [vmem:[#allocation14 + $0xa8] sm:$0xff] %v2411
    %2460 = vst [vmem:[#allocation14 + $0xb0] sm:$0xff] %v2412
    %2461 = vst [vmem:[#allocation14 + $0xb8] sm:$0xff] %v2413
    %2462 = vst [vmem:[#allocation14 + $0xc0] sm:$0xff] %v2414
    %2463 = vst [vmem:[#allocation14 + $0xc8] sm:$0xff] %v2415
    %2464 = vst [vmem:[#allocation14 + $0xd0] sm:$0xff] %v2416
    %2465 = vst [vmem:[#allocation14 + $0xd8] sm:$0xff] %v2417
    %2466 = vst [vmem:[#allocation14 + $0xe0] sm:$0xff] %v2418
    %2467 = vst [vmem:[#allocation14 + $0xe8] sm:$0xff] %v2419
    %2468 = vst [vmem:[#allocation14 + $0xf0] sm:$0xff] %v2420
    %2469 = vst [vmem:[#allocation14 + $0xf8] sm:$0xff] %v2421
    %v2470 = vld [vmem:[#allocation8] sm:$0xff]
    %v2471 = vld [vmem:[#allocation8 + $0x8] sm:$0xff]
    %v2474 = vunpack.c.l.b16 %v2470
    %v2475 = vunpack.c.h.b16 %v2470
    %v2476 = vunpack.c.l.b16 %v2471
    %v2477 = vunpack.c.h.b16 %v2471
    %v2478 = vpack.c.b16 %v2476, %v2474
    %v2479 = vpack.c.b16 %v2477, %v2475
    %2482 = vmatprep.subr.bf16.mxu0 0
    %2483 = vmatpush1.bf16.msra.mxu0 %v2422
    %2484 = vmatprep.subr.bf16.mxu0 0
    %2485 = vmatpush1.bf16.msra.mxu0 %v2423
    %2486 = vmatprep.subr.bf16.mxu0 0
    %2487 = vmatpush1.bf16.msra.mxu0 %v2424
    %2488 = vmatprep.subr.bf16.mxu0 0
    %2489 = vmatpush1.bf16.msra.mxu0 %v2425
    %2490 = vmatprep.subr.bf16.mxu0 0
    %2491 = vmatpush1.bf16.msra.mxu0 %v2426
    %2492 = vmatprep.subr.bf16.mxu0 0
    %2493 = vmatpush1.bf16.msra.mxu0 %v2427
    %2494 = vmatprep.subr.bf16.mxu0 0
    %2495 = vmatpush1.bf16.msra.mxu0 %v2428
    %2496 = vmatprep.subr.bf16.mxu0 0
    %2497 = vmatpush1.bf16.msra.mxu0 %v2429
    %2498 = vmatprep.subr.bf16.mxu0 0
    %2499 = vmatpush1.bf16.msra.mxu0 %v2430
    %2500 = vmatprep.subr.bf16.mxu0 0
    %2501 = vmatpush1.bf16.msra.mxu0 %v2431
    %2502 = vmatprep.subr.bf16.mxu0 0
    %2503 = vmatpush1.bf16.msra.mxu0 %v2432
    %2504 = vmatprep.subr.bf16.mxu0 0
    %2505 = vmatpush1.bf16.msra.mxu0 %v2433
    %2506 = vmatprep.subr.bf16.mxu0 0
    %2507 = vmatpush1.bf16.msra.mxu0 %v2434
    %2508 = vmatprep.subr.bf16.mxu0 0
    %2509 = vmatpush1.bf16.msra.mxu0 %v2435
    %2510 = vmatprep.subr.bf16.mxu0 0
    %2511 = vmatpush1.bf16.msra.mxu0 %v2436
    %2512 = vmatprep.subr.bf16.mxu0 0
    %2513 = vmatpush1.bf16.msra.mxu0 %v2437
    %2514 = vmatprep.mubr.bf16.mxu0 %v2479
    %2515 = vmatmul.mubr.bf16.gmra.mrb[0].mxu0 %v2478
    %v2516 = vpop.f32.mrb[0].mxu0
    %v2517 = vadd.f32 0.0, %v2516
    %v2518 = vpop.f32.mrb[0].mxu0
    %v2519 = vpop.f32.mrb[0].mxu0
    %v2520 = vadd.f32 0.0, %v2519
    %v2521 = vpop.f32.mrb[0].mxu0
    %2522 = vdwg.mxu0
    %v2523 = vld [vmem:[%s12] sm:$0xff]
    %v2524 = vld [vmem:[%s12 + $0x8] sm:$0xff]
    %2526 = vset.pattern.permute.xlu0 0
    %2527 = vperm.xlu0 %2526, %v2523
    %v2528 = vpop.permute.xlu0 %2527
    %2531 = vset.pattern.permute.xlu0 0
    %2532 = vperm.xlu0 %2531, %v2524
    %v2533 = vpop.permute.xlu0 %2532
    %v2535 = vmul.f32 %v2517, %v2528
    %v2536 = vmul.f32 %v2520, %v2533
    %2537 = vst [vmem:[#allocation15] sm:$0xff] %v2535
    %2538 = vst [vmem:[#allocation15 + $0x8] sm:$0xff] %v2536
    %v2539 = vpack.c.bf16 %v2536, %v2535
    %v2540 = vld [vmem:[#allocation10] sm:$0xf]
    %v2541 = vld [vmem:[#allocation10 + $0x4] sm:$0xf]
    %v2542 = vld [vmem:[#allocation10 + $0x8] sm:$0xf]
    %v2543 = vld [vmem:[#allocation10 + $0xc] sm:$0xf]
    %v2544 = vld [vmem:[#allocation10 + $0x10] sm:$0xf]
    %v2545 = vld [vmem:[#allocation10 + $0x14] sm:$0xf]
    %v2546 = vld [vmem:[#allocation10 + $0x18] sm:$0xf]
    %v2547 = vld [vmem:[#allocation10 + $0x1c] sm:$0xf]
    %v2548 = vld [vmem:[#allocation10 + $0x20] sm:$0xf]
    %v2549 = vld [vmem:[#allocation10 + $0x24] sm:$0xf]
    %v2550 = vld [vmem:[#allocation10 + $0x28] sm:$0xf]
    %v2551 = vld [vmem:[#allocation10 + $0x2c] sm:$0xf]
    %v2552 = vld [vmem:[#allocation10 + $0x30] sm:$0xf]
    %v2553 = vld [vmem:[#allocation10 + $0x34] sm:$0xf]
    %v2554 = vld [vmem:[#allocation10 + $0x38] sm:$0xf]
    %v2555 = vld [vmem:[#allocation10 + $0x3c] sm:$0xf]
    %v2572 = vunpack.c.l.b16 %v2540
    %v2573 = vunpack.c.l.b16 %v2541
    %v2574 = vunpack.c.l.b16 %v2542
    %v2575 = vunpack.c.l.b16 %v2543
    %v2576 = vunpack.c.l.b16 %v2544
    %v2577 = vunpack.c.l.b16 %v2545
    %v2578 = vunpack.c.l.b16 %v2546
    %v2579 = vunpack.c.l.b16 %v2547
    %v2580 = vunpack.c.l.b16 %v2548
    %v2581 = vunpack.c.l.b16 %v2549
    %v2582 = vunpack.c.l.b16 %v2550
    %v2583 = vunpack.c.l.b16 %v2551
    %v2584 = vunpack.c.l.b16 %v2552
    %v2585 = vunpack.c.l.b16 %v2553
    %v2586 = vunpack.c.l.b16 %v2554
    %v2587 = vunpack.c.l.b16 %v2555
    %v2588 = vpack.c.b16 %v2573, %v2572
    %v2589 = vpack.c.b16 %v2575, %v2574
    %v2590 = vpack.c.b16 %v2577, %v2576
    %v2591 = vpack.c.b16 %v2579, %v2578
    %v2592 = vpack.c.b16 %v2581, %v2580
    %v2593 = vpack.c.b16 %v2583, %v2582
    %v2594 = vpack.c.b16 %v2585, %v2584
    %v2595 = vpack.c.b16 %v2587, %v2586
    %2604 = vmatprep.subr.bf16.mxu0 0
    %2605 = vmatpush1.bf16.msra.mxu0 %v2588
    %2606 = vmatprep.subr.bf16.mxu0 0
    %2607 = vmatpush1.bf16.msra.mxu0 %v2589
    %2608 = vmatprep.subr.bf16.mxu0 0
    %2609 = vmatpush1.bf16.msra.mxu0 %v2590
    %2610 = vmatprep.subr.bf16.mxu0 0
    %2611 = vmatpush1.bf16.msra.mxu0 %v2591
    %2612 = vmatprep.subr.bf16.mxu0 0
    %2613 = vmatpush1.bf16.msra.mxu0 %v2592
    %2614 = vmatprep.subr.bf16.mxu0 0
    %2615 = vmatpush1.bf16.msra.mxu0 %v2593
    %2616 = vmatprep.subr.bf16.mxu0 0
    %2617 = vmatpush1.bf16.msra.mxu0 %v2594
    %2618 = vmatprep.subr.bf16.mxu0 0
    %2619 = vmatpush1.bf16.msra.mxu0 %v2595
    %2620 = vmatprep.subr.bf16.mxu0 0
    %2621 = vmatpush1.bf16.msra.mxu0 0
    %2622 = vmatprep.subr.bf16.mxu0 0
    %2623 = vmatpush1.bf16.msra.mxu0 0
    %2624 = vmatprep.subr.bf16.mxu0 0
    %2625 = vmatpush1.bf16.msra.mxu0 0
    %2626 = vmatprep.subr.bf16.mxu0 0
    %2627 = vmatpush1.bf16.msra.mxu0 0
    %2628 = vmatprep.subr.bf16.mxu0 0
    %2629 = vmatpush1.bf16.msra.mxu0 0
    %2630 = vmatprep.subr.bf16.mxu0 0
    %2631 = vmatpush1.bf16.msra.mxu0 0
    %2632 = vmatprep.subr.bf16.mxu0 0
    %2633 = vmatpush1.bf16.msra.mxu0 0
    %2634 = vmatprep.subr.bf16.mxu0 0
    %2635 = vmatpush1.bf16.msra.mxu0 0
    %2636 = vmatprep.mubr.bf16.mxu0 0
    %2637 = vmatmul.mubr.bf16.gmra.mrb[0].mxu0 %v2539
    %v2638 = vpop.f32.mrb[0].mxu0
    %v2639 = vadd.f32 0.0, %v2638
    %v2640 = vpop.f32.mrb[0].mxu0
    %v2641 = vpop.f32.mrb[0].mxu0
    %v2642 = vadd.f32 0.0, %v2641
    %v2643 = vpop.f32.mrb[0].mxu0
    %2644 = vdwg.mxu0
    %v2645 = vmul.f32 %v2535, %v2535
    %v2646 = vmul.f32 %v2536, %v2536
    %2647 = vadd.xlane.f32.xlu0 %v2645
    %v2648 = vpop.xlane.xlu0 %2647
    %2649 = vadd.xlane.f32.xlu0 %v2646
    %v2650 = vpop.xlane.xlu0 %2649
    %v2651 = vmul.f32 %v2639, -2.0
    %v2652 = vmul.f32 %v2642, -2.0
    %v2653 = vadd.f32 %v2651, %v2648
    %v2654 = vadd.f32 %v2652, %v2650
    %v2655 = vld [vmem:[%s14] sm:$0x1]
    %v2657 = vlaneseq
    %v2658 = vshrl.u32 %v2657, 7
    %v2659 = vsub.s32 0, %v2658
    %v2660 = vrot.slane %v2655, %v2659
    %v2662 = vadd.f32 %v2653, %v2660
    %v2663 = vadd.f32 %v2654, %v2660
    %v2664 = vmax.f32 %v2662, 0.0
    %v2665 = vmax.f32 %v2663, 0.0
    %v2666 = vadd.f32 %v2664, 1.0
    %v2667 = vadd.f32 %v2665, 1.0
    %v2668 = vadd.f32 %v2664, 0.0001
    %v2669 = vadd.f32 %v2665, 0.0001
    %v2670 = vrcp.pop %v2668
    %v2671 = vmul.f32 %v2666, %v2670
    %v2672 = vrcp.pop %v2669
    %v2673 = vmul.f32 %v2667, %v2672
    %v2674 = vlog2.pop %v2671
    %v2675 = vmul.f32 %v2674, 0.6931472
    %v2676 = vlog2.pop %v2673
    %v2677 = vmul.f32 %v2676, 0.6931472
    %v2678 = vpack.c.bf16 %v2677, %v2675
    %v2679 = vld [vmem:[#allocation11] sm:$0xf]
    %v2680 = vld [vmem:[#allocation11 + $0x4] sm:$0xf]
    %v2681 = vld [vmem:[#allocation11 + $0x8] sm:$0xf]
    %v2682 = vld [vmem:[#allocation11 + $0xc] sm:$0xf]
    %v2683 = vld [vmem:[#allocation11 + $0x10] sm:$0xf]
    %v2684 = vld [vmem:[#allocation11 + $0x14] sm:$0xf]
    %v2685 = vld [vmem:[#allocation11 + $0x18] sm:$0xf]
    %v2686 = vld [vmem:[#allocation11 + $0x1c] sm:$0xf]
    %v2687 = vld [vmem:[#allocation11 + $0x20] sm:$0xf]
    %v2688 = vld [vmem:[#allocation11 + $0x24] sm:$0xf]
    %v2689 = vld [vmem:[#allocation11 + $0x28] sm:$0xf]
    %v2690 = vld [vmem:[#allocation11 + $0x2c] sm:$0xf]
    %v2691 = vld [vmem:[#allocation11 + $0x30] sm:$0xf]
    %v2692 = vld [vmem:[#allocation11 + $0x34] sm:$0xf]
    %v2693 = vld [vmem:[#allocation11 + $0x38] sm:$0xf]
    %v2694 = vld [vmem:[#allocation11 + $0x3c] sm:$0xf]
    %v2711 = vunpack.c.l.b16 %v2679
    %v2712 = vunpack.c.l.b16 %v2680
    %v2713 = vunpack.c.l.b16 %v2681
    %v2714 = vunpack.c.l.b16 %v2682
    %v2715 = vunpack.c.l.b16 %v2683
    %v2716 = vunpack.c.l.b16 %v2684
    %v2717 = vunpack.c.l.b16 %v2685
    %v2718 = vunpack.c.l.b16 %v2686
    %v2719 = vunpack.c.l.b16 %v2687
    %v2720 = vunpack.c.l.b16 %v2688
    %v2721 = vunpack.c.l.b16 %v2689
    %v2722 = vunpack.c.l.b16 %v2690
    %v2723 = vunpack.c.l.b16 %v2691
    %v2724 = vunpack.c.l.b16 %v2692
    %v2725 = vunpack.c.l.b16 %v2693
    %v2726 = vunpack.c.l.b16 %v2694
    %v2727 = vpack.c.b16 %v2712, %v2711
    %v2728 = vpack.c.b16 %v2714, %v2713
    %v2729 = vpack.c.b16 %v2716, %v2715
    %v2730 = vpack.c.b16 %v2718, %v2717
    %v2731 = vpack.c.b16 %v2720, %v2719
    %v2732 = vpack.c.b16 %v2722, %v2721
    %v2733 = vpack.c.b16 %v2724, %v2723
    %v2734 = vpack.c.b16 %v2726, %v2725
    %2743 = vmatprep.subr.bf16.mxu0 0
    %2744 = vmatpush1.bf16.msra.mxu0 %v2727
    %2745 = vmatprep.subr.bf16.mxu0 0
    %2746 = vmatpush1.bf16.msra.mxu0 %v2728
    %2747 = vmatprep.subr.bf16.mxu0 0
    %2748 = vmatpush1.bf16.msra.mxu0 %v2729
    %2749 = vmatprep.subr.bf16.mxu0 0
    %2750 = vmatpush1.bf16.msra.mxu0 %v2730
    %2751 = vmatprep.subr.bf16.mxu0 0
    %2752 = vmatpush1.bf16.msra.mxu0 %v2731
    %2753 = vmatprep.subr.bf16.mxu0 0
    %2754 = vmatpush1.bf16.msra.mxu0 %v2732
    %2755 = vmatprep.subr.bf16.mxu0 0
    %2756 = vmatpush1.bf16.msra.mxu0 %v2733
    %2757 = vmatprep.subr.bf16.mxu0 0
    %2758 = vmatpush1.bf16.msra.mxu0 %v2734
    %2759 = vmatprep.subr.bf16.mxu0 0
    %2760 = vmatpush1.bf16.msra.mxu0 0
    %2761 = vmatprep.subr.bf16.mxu0 0
    %2762 = vmatpush1.bf16.msra.mxu0 0
    %2763 = vmatprep.subr.bf16.mxu0 0
    %2764 = vmatpush1.bf16.msra.mxu0 0
    %2765 = vmatprep.subr.bf16.mxu0 0
    %2766 = vmatpush1.bf16.msra.mxu0 0
    %2767 = vmatprep.subr.bf16.mxu0 0
    %2768 = vmatpush1.bf16.msra.mxu0 0
    %2769 = vmatprep.subr.bf16.mxu0 0
    %2770 = vmatpush1.bf16.msra.mxu0 0
    %2771 = vmatprep.subr.bf16.mxu0 0
    %2772 = vmatpush1.bf16.msra.mxu0 0
    %2773 = vmatprep.subr.bf16.mxu0 0
    %2774 = vmatpush1.bf16.msra.mxu0 0
    %2775 = vmatprep.mubr.bf16.mxu0 0
    %2776 = vmatmul.mubr.bf16.gmra.mrb[0].mxu0 %v2678
    %v2777 = vpop.f32.mrb[0].mxu0
    %v2778 = vadd.f32 0.0, %v2777
    %v2779 = vpop.f32.mrb[0].mxu0
    %v2780 = vpop.f32.mrb[0].mxu0
    %v2781 = vadd.f32 0.0, %v2780
    %v2782 = vpop.f32.mrb[0].mxu0
    %2783 = vdwg.mxu0
    %v2784 = vld [vmem:[#allocation13] sm:$0x1]
    %v2786 = vlaneseq
    %v2787 = vshrl.u32 %v2786, 7
    %v2788 = vsub.s32 0, %v2787
    %v2789 = vrot.slane %v2784, %v2788
    %v2791 = vadd.f32 %v2778, %v2789
    %v2792 = vadd.f32 %v2781, %v2789
    %2793 = vmax.xlane.f32.xlu0 %v2791
    %v2794 = vpop.xlane.xlu0 %2793
    %2795 = vmax.xlane.f32.xlu0 %v2792
    %v2796 = vpop.xlane.xlu0 %2795
    %v2797 = vsub.f32 %v2791, %v2794
    %v2798 = vsub.f32 %v2792, %v2796
    %v2799 = vmul.f32 %v2797, 1.442695
    %v2800 = vpow.pop %v2799
    %v2801 = vmul.f32 %v2798, 1.442695
    %v2802 = vpow.pop %v2801
    %2803 = vadd.xlane.f32.xlu0 %v2800
    %v2804 = vpop.xlane.xlu0 %2803
    %2805 = vadd.xlane.f32.xlu0 %v2802
    %v2806 = vpop.xlane.xlu0 %2805
    %v2807 = vrcp.pop %v2804
    %v2808 = vmul.f32 %v2800, %v2807
    %v2809 = vrcp.pop %v2806
    %v2810 = vmul.f32 %v2802, %v2809
    %2811 = vst [vmem:[%s19] sm:$0xff] %v2778
    %2812 = vst [vmem:[%s19 + $0x8] sm:$0xff] %v2781
    %s2813 = scalar_lea.vmem %s19, 16
    %2814 = vst [vmem:[%s2813] sm:$0xff] %v2808
    %2815 = vst [vmem:[%s2813 + $0x8] sm:$0xff] %v2810
    %s2816 = scalar_lea.vmem %s19, 32
    %2817 = vst [vmem:[%s2816] sm:$0xff] %v2664
    %2818 = vst [vmem:[%s2816 + $0x8] sm:$0xff] %v2665
    // Predicated region
    $region98: #{ginnet_forward.1} parent=1 // pred_check
      _
    $region99: #{ginnet_forward.1} parent=1 // pred_check_branch
      %2820 = sbr.rel (0) target = $region101
    $region100: #{ginnet_forward.1} parent=1 // pred_region
      %s2822 = ssub.s32 4096, 4096
      %2823 = vsyncadd [#allocation4], %s2822
      %s2824 = sshll.u32 [#allocation14], 4
      %s2825 = int_to_ptr.vmem [resolvable:$true] %s2824
      %2830 = dma.vmem_to_hbm [thread:$0]  %s2825, 4096, %s17, [#allocation4], 128, 128, 8
    $region101: #{ginnet_forward.1} parent=1 // pred_fallthru
      _
    // Predicated region
    $region102: #{ginnet_forward.1} parent=1 // pred_check
      _
    $region103: #{ginnet_forward.1} parent=1 // pred_check_branch
      %2832 = sbr.rel (0) target = $region105
    $region104: #{ginnet_forward.1} parent=1 // pred_region
      %s2834 = ssub.s32 256, 256
      %2835 = vsyncadd [#allocation16], %s2834
      %s2836 = sshll.u32 [#allocation15], 4
      %s2837 = int_to_ptr.vmem [resolvable:$true] %s2836
      %2842 = dma.vmem_to_hbm [thread:$0]  %s2837, 256, %s18, [#allocation16], 128, 128, 8
    $region105: #{ginnet_forward.1} parent=1 // pred_fallthru
      _
    // Predicated region
    $region106: #{ginnet_forward.1} parent=1 // pred_check
      _
    $region107: #{ginnet_forward.1} parent=1 // pred_check_branch
      %2844 = sbr.rel (0) target = $region109
    $region108: #{ginnet_forward.1} parent=1 // pred_region
      _
    $region109: #{ginnet_forward.1} parent=1 // pred_fallthru
      _
    // Predicated region
    $region110: #{ginnet_forward.1} parent=1 // pred_check
      _
    $region111: #{ginnet_forward.1} parent=1 // pred_check_branch
      %2846 = sbr.rel (0) target = $region113
    $region112: #{ginnet_forward.1} parent=1 // pred_region
      %2847 = dma.done [#allocation4], 4096
    $region113: #{ginnet_forward.1} parent=1 // pred_fallthru
      _
    // Predicated region
    $region114: #{ginnet_forward.1} parent=1 // pred_check
      _
    $region115: #{ginnet_forward.1} parent=1 // pred_check_branch
      %2849 = sbr.rel (0) target = $region117
    $region116: #{ginnet_forward.1} parent=1 // pred_region
      %2850 = dma.done [#allocation16], 256
    $region117: #{ginnet_forward.1} parent=1 // pred_fallthru
      _
    // Predicated region
    $region118: #{ginnet_forward.1} parent=1 // pred_check
      _
    $region119: #{ginnet_forward.1} parent=1 // pred_check_branch
      %2852 = sbr.rel (0) target = $region121
    $region120: #{ginnet_forward.1} parent=1 // pred_region
      _
    $region121: #{ginnet_forward.1} parent=1 // pred_fallthru
      _
    %2853 = vsyncpa [#allocation3], 1
    %2854 = vsyncpa [#allocation6], 1
    %2855 = vsyncpa [#allocation9], 1
    %2856 = vsyncpa [#allocation12], 1
    %2857 = vsyncpa [#allocation4], 1
    %2858 = vsyncpa [#allocation16], 1

</llo_original>
